<compile_context>
chip_gen: v7x
topology: tpu7x:2x2x1
jax: 0.10.0
libtpu: 0.0.40
codegen_flags: <defaults>
</compile_context>

<pallas_src>
import jax
import jax.numpy as jnp
from jax.experimental import pallas as pl
from jax.experimental.pallas import tpu as pltpu

# (in_features, out_features) for each layer of DirectPolicyAgent_large
LAYER_DIMS = [
    (42, 300),    # L1
    (300, 500),   # L2
    (500, 1000),  # L3
    (1000, 600),  # L4
    (600, 200),   # L5
    (200, 100),   # L6
    (100, 7),     # final
]
_N_LAYERS = len(LAYER_DIMS)
_BIAS_PAD = 1024          # >= max fan_out (1000), lane-aligned
_OUT_PAD = 128            # lane-dense padded action dimension (7 -> 128)
_NEG_INF = -1e30          # logit pad so softmax(pad) == 0
_W_ELEMS = sum(fi * fo for fi, fo in LAYER_DIMS)  # 1,403,300 weight elements
_TILE_B = 256             # batch tile for the gridded large-batch path
_GRID_THRESHOLD = 512     # above this batch size, use the tiled/megacore path


def _mlp_softmax_kernel(x_ref,
                        w1, w2, w3, w4, w5, w6, wf,
                        b_ref,
                        out_ref):
    """6 x (Linear + ReLU), final Linear (128-padded), masked softmax."""
    w_refs = (w1, w2, w3, w4, w5, w6, wf)
    h = x_ref[...]  # (TB, 42) bf16

    logits = None
    for i, w_ref in enumerate(w_refs):
        fan_out = w_ref.shape[1]
        b = b_ref[i:i + 1, :fan_out]  # (1, fan_out) f32, static slice
        # bf16 x bf16 on the MXU, f32 accumulation.
        y = jnp.dot(h, w_ref[...], preferred_element_type=jnp.float32) + b
        if i < _N_LAYERS - 1:
            # Fused ReLU + bf16 repack (one pass over the activation vregs).
            h = jnp.maximum(y, 0.0).astype(jnp.bfloat16)
        else:
            logits = y  # (TB, 128) f32; columns >= 7 are ~-1e30

    # Softmax over the 7 real actions (padded columns exp to 0).  For a single
    # flattened board this matches PyTorch F.softmax(x, dim=0) on a 1-D input.
    m = jnp.max(logits, axis=-1, keepdims=True)
    e = jnp.exp(logits - m)
    denom = jnp.sum(e, axis=-1, keepdims=True)
    out_ref[...] = e / denom  # exact division -> rows sum to 1 (sampler-safe)


def init_params(seed: int = 0):
    """Deterministic synthetic f32 parameters (same shapes as the PyTorch module)."""
    key = jax.random.PRNGKey(seed)
    params = []
    for (fan_in, fan_out) in LAYER_DIMS:
        key, kw, kb = jax.random.split(key, 3)
        bound = 1.0 / jnp.sqrt(fan_in)
        # stored as (in, out) == transpose of nn.Linear's weight layout
        w = jax.random.uniform(kw, (fan_in, fan_out), jnp.float32, -bound, bound)
        b = jax.random.uniform(kb, (1, fan_out), jnp.float32, -bound, bound)
        params.append((w, b))
    return params


def prepare_params(params_f32):
    """bf16 weights (final layer 0-padded to 128 cols) + one packed f32 bias."""
    weights = []
    for i, (w, _) in enumerate(params_f32):
        w = w.astype(jnp.bfloat16)
        if i == _N_LAYERS - 1:  # pad final layer 7 -> 128 output columns
            w = jnp.pad(w, ((0, 0), (0, _OUT_PAD - w.shape[1])))
        weights.append(w)

    b_packed = jnp.zeros((_N_LAYERS, _BIAS_PAD), jnp.float32)
    for i, (_, b) in enumerate(params_f32):
        fo = b.shape[-1]
        b_packed = b_packed.at[i, :fo].set(b.reshape(-1))
        if i == _N_LAYERS - 1:
            # padded logit columns get a huge negative bias -> softmax == 0
            b_packed = b_packed.at[i, fo:_OUT_PAD].set(_NEG_INF)
    return tuple(weights), b_packed


def _cost(batch):
    weight_bytes = 2 * _W_ELEMS                    # bf16
    bias_bytes = 4 * _N_LAYERS * _BIAS_PAD         # f32
    io_bytes = 2 * batch * 42 + 4 * batch * _OUT_PAD
    return pl.CostEstimate(
        flops=2 * _W_ELEMS * batch,
        transcendentals=_OUT_PAD * batch,          # exp per padded logit
        bytes_accessed=weight_bytes + bias_bytes + io_bytes,
    )


def _pallas_forward(x_bf16, weights, bias_packed):
    """x_bf16: (B, 42) bf16 -> (B, 128) f32 padded probabilities."""
    batch = x_bf16.shape[0]
    n_inputs = 1 + len(weights) + 1  # x, 7 weights, packed bias

    if batch <= _GRID_THRESHOLD:
        # Small batch: DMA/overhead bound -> one un-gridded VMEM-resident call.
        vmem = pl.BlockSpec(memory_space=pltpu.MemorySpace.VMEM)
        return pl.pallas_call(
            _mlp_softmax_kernel,
            out_shape=jax.ShapeDtypeStruct((batch, _OUT_PAD), jnp.float32),
            in_specs=[vmem] * n_inputs,
            out_specs=vmem,
            compiler_params=pltpu.CompilerParams(vmem_limit_bytes=32 << 20),
            cost_estimate=_cost(batch),
        )(x_bf16, *weights, bias_packed)

    # Large batch: tile the batch axis; "parallel" lets v7x shard over 2 TCs.
    pad = (-batch) % _TILE_B
    xp = jnp.pad(x_bf16, ((0, pad), (0, 0))) if pad else x_bf16
    bp = xp.shape[0]
    w_specs = [pl.BlockSpec(w.shape, lambda i: (0, 0)) for w in weights]
    out = pl.pallas_call(
        _mlp_softmax_kernel,
        out_shape=jax.ShapeDtypeStruct((bp, _OUT_PAD), jnp.float32),
        grid=(bp // _TILE_B,),
        in_specs=[pl.BlockSpec((_TILE_B, 42), lambda i: (i, 0))] + w_specs +
                 [pl.BlockSpec(bias_packed.shape, lambda i: (0, 0))],
        out_specs=pl.BlockSpec((_TILE_B, _OUT_PAD), lambda i: (i, 0)),
        compiler_params=pltpu.CompilerParams(
            dimension_semantics=("parallel",),
            vmem_limit_bytes=32 << 20),
        cost_estimate=_cost(bp),
    )(xp, *weights, bias_packed)
    return out[:batch]


@jax.jit
def direct_policy_agent_large_forward(x, weights, bias_packed):
    """x: (42,) or (B, 42) -> (7,) or (B, 7) softmax probabilities."""
    squeeze = (x.ndim == 1)
    x2d = x.reshape(1, -1) if squeeze else x
    x2d = x2d.astype(jnp.bfloat16)  # single cast, no f32 round-trip
    probs = _pallas_forward(x2d, weights, bias_packed)[:, :7]
    return probs.reshape(7) if squeeze else probs


def _reference_forward(x, weights, bias_packed):
    """Pure-JAX reference with identical bf16 weights / f32 accumulation."""
    h = x.reshape(-1, 42).astype(jnp.bfloat16)
    logits = None
    for i, (_, fan_out) in enumerate(LAYER_DIMS):
        w = weights[i][:, :fan_out]
        b = bias_packed[i:i + 1, :fan_out]
        y = jnp.dot(h, w, preferred_element_type=jnp.float32) + b
        if i < _N_LAYERS - 1:
            h = jnp.maximum(y, 0.0).astype(jnp.bfloat16)
        else:
            logits = y
    return jax.nn.softmax(logits, axis=-1)


if __name__ == "__main__":
    key = jax.random.PRNGKey(0)
    params = init_params(seed=0)
    weights, bias_packed = prepare_params(params)

    # 1) Small batch (un-gridded, VMEM-resident path).
    k1, k2, k3 = jax.random.split(key, 3)
    xb = jax.random.normal(k1, (8, 42), dtype=jnp.float32)
    probs_b = jax.block_until_ready(
        direct_policy_agent_large_forward(xb, weights, bias_packed))
    ref_b = _reference_forward(xb, weights, bias_packed)
    assert probs_b.shape == (8, 7)
    assert jnp.allclose(jnp.sum(probs_b, axis=-1), 1.0, atol=1e-4)
    assert jnp.allclose(probs_b, ref_b, atol=5e-3, rtol=5e-2)

    # 2) Single flattened board — exactly what select_action feeds forward().
    x1 = jax.random.normal(k2, (42,), dtype=jnp.float32)
    probs_1 = jax.block_until_ready(
        direct_policy_agent_large_forward(x1, weights, bias_packed))
    ref_1 = _reference_forward(x1, weights, bias_packed).reshape(7)
    assert probs_1.shape == (7,)
    assert jnp.allclose(jnp.sum(probs_1), 1.0, atol=1e-4)
    assert jnp.allclose(probs_1, ref_1, atol=5e-3, rtol=5e-2)

    # 3) Larger batch exercising the batch-tiled ("parallel") grid path.
    xl = jax.random.normal(k3, (600, 42), dtype=jnp.float32)
    probs_l = jax.block_until_ready(
        direct_policy_agent_large_forward(xl, weights, bias_packed))
    ref_l = _reference_forward(xl, weights, bias_packed)
    assert probs_l.shape == (600, 7)
    assert jnp.allclose(jnp.sum(probs_l, axis=-1), 1.0, atol=1e-4)
    assert jnp.allclose(probs_l, ref_l, atol=5e-3, rtol=5e-2)

    print("KERNEL_OK")
</pallas_src>

<mosaic_0001>
module attributes {stable_mosaic.version = 11 : i64} {
  func.func @_mlp_softmax_kernel(%arg0: memref<8x42xbf16, #tpu.memory_space<vmem>>, %arg1: memref<42x300xbf16, #tpu.memory_space<vmem>>, %arg2: memref<300x500xbf16, #tpu.memory_space<vmem>>, %arg3: memref<500x1000xbf16, #tpu.memory_space<vmem>>, %arg4: memref<1000x600xbf16, #tpu.memory_space<vmem>>, %arg5: memref<600x200xbf16, #tpu.memory_space<vmem>>, %arg6: memref<200x100xbf16, #tpu.memory_space<vmem>>, %arg7: memref<100x128xbf16, #tpu.memory_space<vmem>>, %arg8: memref<7x1024xf32, #tpu.memory_space<vmem>>, %arg9: memref<8x128xf32, #tpu.memory_space<vmem>>) attributes {dimension_semantics = [], scalar_prefetch = 0 : i64, scratch_operands = 0 : i64, tpu.core_type = #tpu.core_type<tc>} {
    %c0 = arith.constant 0 : index
    %c0_0 = arith.constant 0 : index
    %0 = vector.load %arg0[%c0, %c0_0] : memref<8x42xbf16, #tpu.memory_space<vmem>>, vector<8x42xbf16>
    %c0_1 = arith.constant 0 : index
    %c0_2 = arith.constant 0 : index
    %1 = vector.load %arg8[%c0_1, %c0_2] : memref<7x1024xf32, #tpu.memory_space<vmem>>, vector<1x300xf32>
    %c0_3 = arith.constant 0 : index
    %c0_4 = arith.constant 0 : index
    %2 = vector.load %arg1[%c0_3, %c0_4] : memref<42x300xbf16, #tpu.memory_space<vmem>>, vector<42x300xbf16>
    %cst = arith.constant dense<0.000000e+00> : vector<8x300xf32>
    %3 = tpu.matmul %0, %2, %cst {dimension_numbers = #tpu.dot_dimension_numbers<[1], [0], [0], [1], [0, 0, 1, 1], [], []>} : vector<8x42xbf16>, vector<42x300xbf16>, vector<8x300xf32> -> vector<8x300xf32>
    %4 = vector.broadcast %1 : vector<1x300xf32> to vector<8x300xf32>
    %5 = arith.addf %3, %4 : vector<8x300xf32>
    %cst_5 = arith.constant 0.000000e+00 : f32
    %6 = vector.broadcast %cst_5 : f32 to vector<8x300xf32>
    %7 = arith.maximumf %5, %6 : vector<8x300xf32>
    %8 = arith.truncf %7 : vector<8x300xf32> to vector<8x300xbf16>
    %c1 = arith.constant 1 : index
    %c0_6 = arith.constant 0 : index
    %9 = vector.load %arg8[%c1, %c0_6] : memref<7x1024xf32, #tpu.memory_space<vmem>>, vector<1x500xf32>
    %c0_7 = arith.constant 0 : index
    %c0_8 = arith.constant 0 : index
    %10 = vector.load %arg2[%c0_7, %c0_8] : memref<300x500xbf16, #tpu.memory_space<vmem>>, vector<300x500xbf16>
    %cst_9 = arith.constant dense<0.000000e+00> : vector<8x500xf32>
    %11 = tpu.matmul %8, %10, %cst_9 {dimension_numbers = #tpu.dot_dimension_numbers<[1], [0], [0], [1], [0, 0, 1, 1], [], []>} : vector<8x300xbf16>, vector<300x500xbf16>, vector<8x500xf32> -> vector<8x500xf32>
    %12 = vector.broadcast %9 : vector<1x500xf32> to vector<8x500xf32>
    %13 = arith.addf %11, %12 : vector<8x500xf32>
    %cst_10 = arith.constant 0.000000e+00 : f32
    %14 = vector.broadcast %cst_10 : f32 to vector<8x500xf32>
    %15 = arith.maximumf %13, %14 : vector<8x500xf32>
    %16 = arith.truncf %15 : vector<8x500xf32> to vector<8x500xbf16>
    %c2 = arith.constant 2 : index
    %c0_11 = arith.constant 0 : index
    %17 = vector.load %arg8[%c2, %c0_11] : memref<7x1024xf32, #tpu.memory_space<vmem>>, vector<1x1000xf32>
    %c0_12 = arith.constant 0 : index
    %c0_13 = arith.constant 0 : index
    %18 = vector.load %arg3[%c0_12, %c0_13] : memref<500x1000xbf16, #tpu.memory_space<vmem>>, vector<500x1000xbf16>
    %cst_14 = arith.constant dense<0.000000e+00> : vector<8x1000xf32>
    %19 = tpu.matmul %16, %18, %cst_14 {dimension_numbers = #tpu.dot_dimension_numbers<[1], [0], [0], [1], [0, 0, 1, 1], [], []>} : vector<8x500xbf16>, vector<500x1000xbf16>, vector<8x1000xf32> -> vector<8x1000xf32>
    %20 = vector.broadcast %17 : vector<1x1000xf32> to vector<8x1000xf32>
    %21 = arith.addf %19, %20 : vector<8x1000xf32>
    %cst_15 = arith.constant 0.000000e+00 : f32
    %22 = vector.broadcast %cst_15 : f32 to vector<8x1000xf32>
    %23 = arith.maximumf %21, %22 : vector<8x1000xf32>
    %24 = arith.truncf %23 : vector<8x1000xf32> to vector<8x1000xbf16>
    %c3 = arith.constant 3 : index
    %c0_16 = arith.constant 0 : index
    %25 = vector.load %arg8[%c3, %c0_16] : memref<7x1024xf32, #tpu.memory_space<vmem>>, vector<1x600xf32>
    %c0_17 = arith.constant 0 : index
    %c0_18 = arith.constant 0 : index
    %26 = vector.load %arg4[%c0_17, %c0_18] : memref<1000x600xbf16, #tpu.memory_space<vmem>>, vector<1000x600xbf16>
    %cst_19 = arith.constant dense<0.000000e+00> : vector<8x600xf32>
    %27 = tpu.matmul %24, %26, %cst_19 {dimension_numbers = #tpu.dot_dimension_numbers<[1], [0], [0], [1], [0, 0, 1, 1], [], []>} : vector<8x1000xbf16>, vector<1000x600xbf16>, vector<8x600xf32> -> vector<8x600xf32>
    %28 = vector.broadcast %25 : vector<1x600xf32> to vector<8x600xf32>
    %29 = arith.addf %27, %28 : vector<8x600xf32>
    %cst_20 = arith.constant 0.000000e+00 : f32
    %30 = vector.broadcast %cst_20 : f32 to vector<8x600xf32>
    %31 = arith.maximumf %29, %30 : vector<8x600xf32>
    %32 = arith.truncf %31 : vector<8x600xf32> to vector<8x600xbf16>
    %c4 = arith.constant 4 : index
    %c0_21 = arith.constant 0 : index
    %33 = vector.load %arg8[%c4, %c0_21] : memref<7x1024xf32, #tpu.memory_space<vmem>>, vector<1x200xf32>
    %c0_22 = arith.constant 0 : index
    %c0_23 = arith.constant 0 : index
    %34 = vector.load %arg5[%c0_22, %c0_23] : memref<600x200xbf16, #tpu.memory_space<vmem>>, vector<600x200xbf16>
    %cst_24 = arith.constant dense<0.000000e+00> : vector<8x200xf32>
    %35 = tpu.matmul %32, %34, %cst_24 {dimension_numbers = #tpu.dot_dimension_numbers<[1], [0], [0], [1], [0, 0, 1, 1], [], []>} : vector<8x600xbf16>, vector<600x200xbf16>, vector<8x200xf32> -> vector<8x200xf32>
    %36 = vector.broadcast %33 : vector<1x200xf32> to vector<8x200xf32>
    %37 = arith.addf %35, %36 : vector<8x200xf32>
    %cst_25 = arith.constant 0.000000e+00 : f32
    %38 = vector.broadcast %cst_25 : f32 to vector<8x200xf32>
    %39 = arith.maximumf %37, %38 : vector<8x200xf32>
    %40 = arith.truncf %39 : vector<8x200xf32> to vector<8x200xbf16>
    %c5 = arith.constant 5 : index
    %c0_26 = arith.constant 0 : index
    %41 = vector.load %arg8[%c5, %c0_26] : memref<7x1024xf32, #tpu.memory_space<vmem>>, vector<1x100xf32>
    %c0_27 = arith.constant 0 : index
    %c0_28 = arith.constant 0 : index
    %42 = vector.load %arg6[%c0_27, %c0_28] : memref<200x100xbf16, #tpu.memory_space<vmem>>, vector<200x100xbf16>
    %cst_29 = arith.constant dense<0.000000e+00> : vector<8x100xf32>
    %43 = tpu.matmul %40, %42, %cst_29 {dimension_numbers = #tpu.dot_dimension_numbers<[1], [0], [0], [1], [0, 0, 1, 1], [], []>} : vector<8x200xbf16>, vector<200x100xbf16>, vector<8x100xf32> -> vector<8x100xf32>
    %44 = vector.broadcast %41 : vector<1x100xf32> to vector<8x100xf32>
    %45 = arith.addf %43, %44 : vector<8x100xf32>
    %cst_30 = arith.constant 0.000000e+00 : f32
    %46 = vector.broadcast %cst_30 : f32 to vector<8x100xf32>
    %47 = arith.maximumf %45, %46 : vector<8x100xf32>
    %48 = arith.truncf %47 : vector<8x100xf32> to vector<8x100xbf16>
    %c6 = arith.constant 6 : index
    %c0_31 = arith.constant 0 : index
    %49 = vector.load %arg8[%c6, %c0_31] : memref<7x1024xf32, #tpu.memory_space<vmem>>, vector<1x128xf32>
    %c0_32 = arith.constant 0 : index
    %c0_33 = arith.constant 0 : index
    %50 = vector.load %arg7[%c0_32, %c0_33] : memref<100x128xbf16, #tpu.memory_space<vmem>>, vector<100x128xbf16>
    %cst_34 = arith.constant dense<0.000000e+00> : vector<8x128xf32>
    %51 = tpu.matmul %48, %50, %cst_34 {dimension_numbers = #tpu.dot_dimension_numbers<[1], [0], [0], [1], [0, 0, 1, 1], [], []>} : vector<8x100xbf16>, vector<100x128xbf16>, vector<8x128xf32> -> vector<8x128xf32>
    %52 = vector.broadcast %49 : vector<1x128xf32> to vector<8x128xf32>
    %53 = arith.addf %51, %52 : vector<8x128xf32>
    %cst_35 = arith.constant dense<0xFF800000> : vector<8xf32>
    %54 = vector.multi_reduction <maximumf>, %53, %cst_35 [1] : vector<8x128xf32> to vector<8xf32>
    %55 = vector.shape_cast %54 : vector<8xf32> to vector<8x1xf32>
    %56 = vector.broadcast %55 : vector<8x1xf32> to vector<8x128xf32>
    %57 = arith.subf %53, %56 : vector<8x128xf32>
    %58 = math.exp %57 : vector<8x128xf32>
    %cst_36 = arith.constant dense<0.000000e+00> : vector<8xf32>
    %59 = vector.multi_reduction <add>, %58, %cst_36 [1] : vector<8x128xf32> to vector<8xf32>
    %60 = vector.shape_cast %59 : vector<8xf32> to vector<8x1xf32>
    %61 = vector.broadcast %60 : vector<8x1xf32> to vector<8x128xf32>
    %62 = arith.divf %58, %61 : vector<8x128xf32>
    %c0_37 = arith.constant 0 : index
    %c0_38 = arith.constant 0 : index
    %63 = vector.load %arg9[%c0_37, %c0_38] : memref<8x128xf32, #tpu.memory_space<vmem>>, vector<8x128xf32>
    tpu.vector_store %arg9[%c0_37, %c0_38], %62 {strides = array<i32>} : memref<8x128xf32, #tpu.memory_space<vmem>>, vector<8x128xf32>,
    return
  }
}

</mosaic_0001>

<llo_original>
// kernel: direct_policy_agent_large_forward.1
$region0: #{direct_policy_agent_large_forward.1}
  #allocation0 [shape = 'u32[]', space=smem, size = 0x4, offset = 0x4, fixed_abs, tag = 'smem constant byte address 0x4 - core index']
  #allocation1 [shape = 'u32[144,128]{1,0:T(1,128)}', space=vmem, size = 0x12000, scoped, tag = 'internal scratch']
  %s0 = inlined_call_operand.vmem [shape: bf16[8,42], index: 0, kind: input, shape index: {}]
  %s1 = inlined_call_operand.vmem [shape: bf16[42,300], index: 1, kind: input, shape index: {}]
  %s2 = inlined_call_operand.vmem [shape: bf16[300,500], index: 2, kind: input, shape index: {}]
  %s3 = inlined_call_operand.vmem [shape: bf16[500,1000], index: 3, kind: input, shape index: {}]
  %s4 = inlined_call_operand.vmem [shape: bf16[1000,600], index: 4, kind: input, shape index: {}]
  %s5 = inlined_call_operand.vmem [shape: bf16[600,200], index: 5, kind: input, shape index: {}]
  %s6 = inlined_call_operand.vmem [shape: bf16[200,100], index: 6, kind: input, shape index: {}]
  %s7 = inlined_call_operand.vmem [shape: bf16[100,128], index: 7, kind: input, shape index: {}]
  %s8 = inlined_call_operand.vmem [shape: f32[7,1024], index: 8, kind: input, shape index: {}]
  %s9 = inlined_call_operand.hbm [shape: f32[8,128], index: 9, kind: output, shape index: {}]
  %s10 = sld [smem:[#allocation0]]
  $region46: #{direct_policy_agent_large_forward.1} parent=0
    _
  %s12 = ssub.s32 1, %s10
  %s13 = scalar_select 0, %s12, %s10
  $region1: #{direct_policy_agent_large_forward.1} parent=0
    #allocation2 [shape = 'u8[4096]{0}', space=vmem, size = 0x1000, scoped, tag = 'output window, operand 0, single buffered']
    #allocation3 [shape = 's32[1]{0}', space=sflag, size = 0x4, scoped, tag = 'scoped memory for direct_policy_agent_large_forward.1']
    %14 = vsyncpa [#allocation3], 0
    // Predicated region
    $region2: #{direct_policy_agent_large_forward.1} parent=1 // pred_check
      _
    $region3: #{direct_policy_agent_large_forward.1} parent=1 // pred_check_branch
      %16 = sbr.rel (0) target = $region5
    $region4: #{direct_policy_agent_large_forward.1} parent=1 // pred_region
      _
    $region5: #{direct_policy_agent_large_forward.1} parent=1 // pred_fallthru
      _
    // Predicated region
    $region6: #{direct_policy_agent_large_forward.1} parent=1 // pred_check
      _
    $region7: #{direct_policy_agent_large_forward.1} parent=1 // pred_check_branch
      %18 = sbr.rel (0) target = $region9
    $region8: #{direct_policy_agent_large_forward.1} parent=1 // pred_region
      _
    $region9: #{direct_policy_agent_large_forward.1} parent=1 // pred_fallthru
      _
    // Predicated region
    $region10: #{direct_policy_agent_large_forward.1} parent=1 // pred_check
      _
    $region11: #{direct_policy_agent_large_forward.1} parent=1 // pred_check_branch
      %20 = sbr.rel (0) target = $region13
    $region12: #{direct_policy_agent_large_forward.1} parent=1 // pred_region
      _
    $region13: #{direct_policy_agent_large_forward.1} parent=1 // pred_fallthru
      _
    // Predicated region
    $region14: #{direct_policy_agent_large_forward.1} parent=1 // pred_check
      _
    $region15: #{direct_policy_agent_large_forward.1} parent=1 // pred_check_branch
      %22 = sbr.rel (0) target = $region17
    $region16: #{direct_policy_agent_large_forward.1} parent=1 // pred_region
      _
    $region17: #{direct_policy_agent_large_forward.1} parent=1 // pred_fallthru
      _
    // Predicated region
    $region18: #{direct_policy_agent_large_forward.1} parent=1 // pred_check
      _
    $region19: #{direct_policy_agent_large_forward.1} parent=1 // pred_check_branch
      %24 = sbr.rel (0) target = $region21
    $region20: #{direct_policy_agent_large_forward.1} parent=1 // pred_region
      _
    $region21: #{direct_policy_agent_large_forward.1} parent=1 // pred_fallthru
      _
    // Predicated region
    $region22: #{direct_policy_agent_large_forward.1} parent=1 // pred_check
      _
    $region23: #{direct_policy_agent_large_forward.1} parent=1 // pred_check_branch
      %26 = sbr.rel (0) target = $region25
    $region24: #{direct_policy_agent_large_forward.1} parent=1 // pred_region
      _
    $region25: #{direct_policy_agent_large_forward.1} parent=1 // pred_fallthru
      _
    // Predicated region
    $region26: #{direct_policy_agent_large_forward.1} parent=1 // pred_check
      _
    $region27: #{direct_policy_agent_large_forward.1} parent=1 // pred_check_branch
      %28 = sbr.rel (0) target = $region29
    $region28: #{direct_policy_agent_large_forward.1} parent=1 // pred_region
      _
    $region29: #{direct_policy_agent_large_forward.1} parent=1 // pred_fallthru
      _
    // Predicated region
    $region30: #{direct_policy_agent_large_forward.1} parent=1 // pred_check
      _
    $region31: #{direct_policy_agent_large_forward.1} parent=1 // pred_check_branch
      %30 = sbr.rel (0) target = $region33
    $region32: #{direct_policy_agent_large_forward.1} parent=1 // pred_region
      _
    $region33: #{direct_policy_agent_large_forward.1} parent=1 // pred_fallthru
      _
    // Predicated region
    $region34: #{direct_policy_agent_large_forward.1} parent=1 // pred_check
      _
    $region35: #{direct_policy_agent_large_forward.1} parent=1 // pred_check_branch
      %32 = sbr.rel (0) target = $region37
    $region36: #{direct_policy_agent_large_forward.1} parent=1 // pred_region
      _
    $region37: #{direct_policy_agent_large_forward.1} parent=1 // pred_fallthru
      _
    %v34 = vld [vmem:[%s0] sm:$0xf]
    %v35 = vld [vmem:[%s8] ss:$8 sm:$0x7]
    %v36 = vld [vmem:[%s1] sm:$0xff]
    %v37 = vld [vmem:[%s1 + $0x8] sm:$0xf]
    %v38 = vld [vmem:[%s1 + $0xc] sm:$0xff]
    %v39 = vld [vmem:[%s1 + $0x14] sm:$0xf]
    %v40 = vld [vmem:[%s1 + $0x18] sm:$0xff]
    %v41 = vld [vmem:[%s1 + $0x20] sm:$0xf]
    %v42 = vld [vmem:[%s1 + $0x24] sm:$0xff]
    %v43 = vld [vmem:[%s1 + $0x2c] sm:$0xf]
    %v44 = vld [vmem:[%s1 + $0x30] sm:$0xff]
    %v45 = vld [vmem:[%s1 + $0x38] sm:$0xf]
    %v46 = vld [vmem:[%s1 + $0x3c] sm:$0x11]
    %v47 = vld [vmem:[%s1 + $0x44] sm:$0x1]
    %v49 = vlaneseq
    %v50 = vshrl.u32 %v49, 7
    %v51 = vsub.s32 0, %v50
    %v52 = vrot.slane %v35, %v51
    %v53 = vlaneseq
    %v54 = vshrl.u32 %v53, 7
    %v55 = vsub.s32 1, %v54
    %v56 = vrot.slane %v35, %v55
    %v57 = vlaneseq
    %v58 = vshrl.u32 %v57, 7
    %v59 = vsub.s32 2, %v58
    %v60 = vrot.slane %v35, %v59
    %v76 = vunpack.c.l.b16 %v36
    %v77 = vunpack.c.h.b16 %v36
    %v78 = vunpack.c.l.b16 %v37
    %v79 = vunpack.c.l.b16 %v38
    %v80 = vunpack.c.h.b16 %v38
    %v81 = vunpack.c.l.b16 %v39
    %v82 = vunpack.c.l.b16 %v40
    %v83 = vunpack.c.h.b16 %v40
    %v84 = vunpack.c.l.b16 %v41
    %v85 = vunpack.c.l.b16 %v42
    %v86 = vunpack.c.h.b16 %v42
    %v87 = vunpack.c.l.b16 %v43
    %v88 = vunpack.c.l.b16 %v44
    %v89 = vunpack.c.h.b16 %v44
    %v90 = vunpack.c.l.b16 %v45
    %v91 = vunpack.c.l.b16 %v46
    %v92 = vunpack.c.h.b16 %v46
    %v93 = vunpack.c.l.b16 %v47
    %v94 = vpack.c.b16 %v79, %v76
    %v95 = vpack.c.b16 %v80, %v77
    %v96 = vpack.c.b16 %v81, %v78
    %v97 = vpack.c.b16 %v85, %v82
    %v98 = vpack.c.b16 %v86, %v83
    %v99 = vpack.c.b16 %v87, %v84
    %v100 = vpack.c.b16 %v91, %v88
    %v101 = vpack.c.b16 %v92, %v89
    %v102 = vpack.c.b16 %v93, %v90
    %vm109 = vcmask 343040
    %v111 = vsel %vm109, %v34, 0
    %vm113 = vcmask 1044480
    %v115 = vsel %vm113, %v100, 0
    %v118 = vsel %vm113, %v101, 0
    %v121 = vsel %vm113, %v102, 0
    %123 = vmatprep.subr.bf16.mxu0 %v95
    %124 = vmatpush1.bf16.msra.mxu0 %v94
    %125 = vmatprep.subr.bf16.mxu0 %v98
    %126 = vmatpush1.bf16.msra.mxu0 %v97
    %127 = vmatprep.subr.bf16.mxu0 %v118
    %128 = vmatpush1.bf16.msra.mxu0 %v115
    %129 = vmatprep.subr.bf16.mxu0 0
    %130 = vmatpush1.bf16.msra.mxu0 0
    %131 = vmatprep.subr.bf16.mxu0 0
    %132 = vmatpush1.bf16.msra.mxu0 0
    %133 = vmatprep.subr.bf16.mxu0 0
    %134 = vmatpush1.bf16.msra.mxu0 0
    %135 = vmatprep.subr.bf16.mxu0 0
    %136 = vmatpush1.bf16.msra.mxu0 0
    %137 = vmatprep.subr.bf16.mxu0 0
    %138 = vmatpush1.bf16.msra.mxu0 0
    %139 = vmatprep.subr.bf16.mxu0 0
    %140 = vmatpush1.bf16.msra.mxu0 0
    %141 = vmatprep.subr.bf16.mxu0 0
    %142 = vmatpush1.bf16.msra.mxu0 0
    %143 = vmatprep.subr.bf16.mxu0 0
    %144 = vmatpush1.bf16.msra.mxu0 0
    %145 = vmatprep.subr.bf16.mxu0 0
    %146 = vmatpush1.bf16.msra.mxu0 0
    %147 = vmatprep.subr.bf16.mxu0 0
    %148 = vmatpush1.bf16.msra.mxu0 0
    %149 = vmatprep.subr.bf16.mxu0 0
    %150 = vmatpush1.bf16.msra.mxu0 0
    %151 = vmatprep.subr.bf16.mxu0 0
    %152 = vmatpush1.bf16.msra.mxu0 0
    %153 = vmatprep.subr.bf16.mxu0 0
    %154 = vmatpush1.bf16.msra.mxu0 0
    %155 = vmatprep.mubr.bf16.mxu0 0
    %156 = vmatmul.mubr.bf16.gmra.mrb[0].mxu0 %v111
    %v157 = vpop.f32.mrb[0].mxu0
    %v158 = vadd.f32 %v52, %v157
    %v159 = vpop.f32.mrb[0].mxu0
    %v160 = vadd.f32 %v56, %v159
    %v161 = vpop.f32.mrb[0].mxu0
    %v162 = vpop.f32.mrb[0].mxu0
    %163 = vdwg.mxu0
    %164 = vmatprep.subr.bf16.mxu0 0
    %165 = vmatpush1.bf16.msra.mxu0 %v96
    %166 = vmatprep.subr.bf16.mxu0 0
    %167 = vmatpush1.bf16.msra.mxu0 %v99
    %168 = vmatprep.subr.bf16.mxu0 0
    %169 = vmatpush1.bf16.msra.mxu0 %v121
    %170 = vmatprep.subr.bf16.mxu0 0
    %171 = vmatpush1.bf16.msra.mxu0 0
    %172 = vmatprep.subr.bf16.mxu0 0
    %173 = vmatpush1.bf16.msra.mxu0 0
    %174 = vmatprep.subr.bf16.mxu0 0
    %175 = vmatpush1.bf16.msra.mxu0 0
    %176 = vmatprep.subr.bf16.mxu0 0
    %177 = vmatpush1.bf16.msra.mxu0 0
    %178 = vmatprep.subr.bf16.mxu0 0
    %179 = vmatpush1.bf16.msra.mxu0 0
    %180 = vmatprep.subr.bf16.mxu0 0
    %181 = vmatpush1.bf16.msra.mxu0 0
    %182 = vmatprep.subr.bf16.mxu0 0
    %183 = vmatpush1.bf16.msra.mxu0 0
    %184 = vmatprep.subr.bf16.mxu0 0
    %185 = vmatpush1.bf16.msra.mxu0 0
    %186 = vmatprep.subr.bf16.mxu0 0
    %187 = vmatpush1.bf16.msra.mxu0 0
    %188 = vmatprep.subr.bf16.mxu0 0
    %189 = vmatpush1.bf16.msra.mxu0 0
    %190 = vmatprep.subr.bf16.mxu0 0
    %191 = vmatpush1.bf16.msra.mxu0 0
    %192 = vmatprep.subr.bf16.mxu0 0
    %193 = vmatpush1.bf16.msra.mxu0 0
    %194 = vmatprep.subr.bf16.mxu0 0
    %195 = vmatpush1.bf16.msra.mxu0 0
    %196 = vmatprep.mubr.bf16.mxu0 0
    %197 = vmatmul.mubr.bf16.gmra.mrb[0].mxu0 %v111
    %v198 = vpop.f32.mrb[0].mxu0
    %v199 = vadd.f32 %v60, %v198
    %v200 = vpop.f32.mrb[0].mxu0
    %v201 = vpop.f32.mrb[0].mxu0
    %v202 = vpop.f32.mrb[0].mxu0
    %203 = vdwg.mxu0
    %v204 = vmax.f32 %v158, 0.0
    %v205 = vmax.f32 %v160, 0.0
    %v206 = vmax.f32 %v199, 0.0
    %v207 = vpack.c.bf16 %v204, %v204
    %v208 = vpack.c.bf16 %v205, %v205
    %v209 = vpack.c.bf16 %v206, %v206
    %s210 = scalar_lea.vmem %s8, 1
    %v211 = vld [vmem:[%s210] ss:$8 sm:$0xf]
    %v212 = vld [vmem:[%s2] sm:$0xff]
    %v213 = vld [vmem:[%s2 + $0x8] sm:$0xff]
    %v214 = vld [vmem:[%s2 + $0x10] sm:$0xff]
    %v215 = vld [vmem:[%s2 + $0x18] sm:$0xff]
    %v216 = vld [vmem:[%s2 + $0x20] sm:$0xff]
    %v217 = vld [vmem:[%s2 + $0x28] sm:$0xff]
    %v218 = vld [vmem:[%s2 + $0x30] sm:$0xff]
    %v219 = vld [vmem:[%s2 + $0x38] sm:$0xff]
    %v220 = vld [vmem:[%s2 + $0x40] sm:$0xff]
    %v221 = vld [vmem:[%s2 + $0x48] sm:$0xff]
    %v222 = vld [vmem:[%s2 + $0x50] sm:$0xff]
    %v223 = vld [vmem:[%s2 + $0x58] sm:$0xff]
    %v224 = vld [vmem:[%s2 + $0x60] sm:$0xff]
    %v225 = vld [vmem:[%s2 + $0x68] sm:$0xff]
    %v226 = vld [vmem:[%s2 + $0x70] sm:$0xff]
    %v227 = vld [vmem:[%s2 + $0x78] sm:$0xff]
    %v228 = vld [vmem:[%s2 + $0x80] sm:$0xff]
    %v229 = vld [vmem:[%s2 + $0x88] sm:$0xff]
    %v230 = vld [vmem:[%s2 + $0x90] sm:$0xff]
    %v231 = vld [vmem:[%s2 + $0x98] sm:$0xff]
    %v232 = vld [vmem:[%s2 + $0xa0] sm:$0xff]
    %v233 = vld [vmem:[%s2 + $0xa8] sm:$0xff]
    %v234 = vld [vmem:[%s2 + $0xb0] sm:$0xff]
    %v235 = vld [vmem:[%s2 + $0xb8] sm:$0xff]
    %v236 = vld [vmem:[%s2 + $0xc0] sm:$0xff]
    %v237 = vld [vmem:[%s2 + $0xc8] sm:$0xff]
    %v238 = vld [vmem:[%s2 + $0xd0] sm:$0xff]
    %v239 = vld [vmem:[%s2 + $0xd8] sm:$0xff]
    %v240 = vld [vmem:[%s2 + $0xe0] sm:$0xff]
    %v241 = vld [vmem:[%s2 + $0xe8] sm:$0xff]
    %v242 = vld [vmem:[%s2 + $0xf0] sm:$0xff]
    %v243 = vld [vmem:[%s2 + $0xf8] sm:$0xff]
    %v244 = vld [vmem:[%s2 + $0x100] sm:$0xff]
    %v245 = vld [vmem:[%s2 + $0x108] sm:$0xff]
    %v246 = vld [vmem:[%s2 + $0x110] sm:$0xff]
    %v247 = vld [vmem:[%s2 + $0x118] sm:$0xff]
    %v248 = vld [vmem:[%s2 + $0x120] sm:$0xff]
    %v249 = vld [vmem:[%s2 + $0x128] sm:$0xff]
    %v250 = vld [vmem:[%s2 + $0x130] sm:$0xff]
    %v251 = vld [vmem:[%s2 + $0x138] sm:$0xff]
    %v252 = vld [vmem:[%s2 + $0x140] sm:$0xff]
    %v253 = vld [vmem:[%s2 + $0x148] sm:$0xff]
    %v254 = vld [vmem:[%s2 + $0x150] sm:$0xff]
    %v255 = vld [vmem:[%s2 + $0x158] sm:$0xff]
    %v256 = vld [vmem:[%s2 + $0x160] sm:$0xff]
    %v257 = vld [vmem:[%s2 + $0x168] sm:$0xff]
    %v258 = vld [vmem:[%s2 + $0x170] sm:$0xff]
    %v259 = vld [vmem:[%s2 + $0x178] sm:$0xff]
    %v260 = vld [vmem:[%s2 + $0x180] sm:$0xff]
    %v261 = vld [vmem:[%s2 + $0x188] sm:$0xff]
    %v262 = vld [vmem:[%s2 + $0x190] sm:$0xff]
    %v263 = vld [vmem:[%s2 + $0x198] sm:$0xff]
    %v264 = vld [vmem:[%s2 + $0x1a0] sm:$0xff]
    %v265 = vld [vmem:[%s2 + $0x1a8] sm:$0xff]
    %v266 = vld [vmem:[%s2 + $0x1b0] sm:$0xff]
    %v267 = vld [vmem:[%s2 + $0x1b8] sm:$0xff]
    %v268 = vld [vmem:[%s2 + $0x1c0] sm:$0xff]
    %v269 = vld [vmem:[%s2 + $0x1c8] sm:$0xff]
    %v270 = vld [vmem:[%s2 + $0x1d0] sm:$0xff]
    %v271 = vld [vmem:[%s2 + $0x1d8] sm:$0xff]
    %v272 = vld [vmem:[%s2 + $0x1e0] sm:$0xff]
    %v273 = vld [vmem:[%s2 + $0x1e8] sm:$0xff]
    %v274 = vld [vmem:[%s2 + $0x1f0] sm:$0xff]
    %v275 = vld [vmem:[%s2 + $0x1f8] sm:$0xff]
    %v276 = vld [vmem:[%s2 + $0x200] sm:$0xff]
    %v277 = vld [vmem:[%s2 + $0x208] sm:$0xff]
    %v278 = vld [vmem:[%s2 + $0x210] sm:$0xff]
    %v279 = vld [vmem:[%s2 + $0x218] sm:$0xff]
    %v280 = vld [vmem:[%s2 + $0x220] sm:$0xff]
    %v281 = vld [vmem:[%s2 + $0x228] sm:$0xff]
    %v282 = vld [vmem:[%s2 + $0x230] sm:$0xff]
    %v283 = vld [vmem:[%s2 + $0x238] sm:$0xff]
    %v284 = vld [vmem:[%s2 + $0x240] sm:$0xff]
    %v285 = vld [vmem:[%s2 + $0x248] sm:$0xff]
    %v286 = vld [vmem:[%s2 + $0x250] sm:$0x33]
    %v287 = vld [vmem:[%s2 + $0x258] sm:$0x33]
    %v289 = vlaneseq
    %v290 = vshrl.u32 %v289, 7
    %v291 = vsub.s32 0, %v290
    %v292 = vrot.slane %v211, %v291
    %v293 = vlaneseq
    %v294 = vshrl.u32 %v293, 7
    %v295 = vsub.s32 1, %v294
    %v296 = vrot.slane %v211, %v295
    %v297 = vlaneseq
    %v298 = vshrl.u32 %v297, 7
    %v299 = vsub.s32 2, %v298
    %v300 = vrot.slane %v211, %v299
    %v301 = vlaneseq
    %v302 = vshrl.u32 %v301, 7
    %v303 = vsub.s32 3, %v302
    %v304 = vrot.slane %v211, %v303
    %v385 = vunpack.c.l.b16 %v212
    %v386 = vunpack.c.h.b16 %v212
    %v387 = vunpack.c.l.b16 %v213
    %v388 = vunpack.c.h.b16 %v213
    %v389 = vunpack.c.l.b16 %v214
    %v390 = vunpack.c.h.b16 %v214
    %v391 = vunpack.c.l.b16 %v215
    %v392 = vunpack.c.h.b16 %v215
    %v393 = vunpack.c.l.b16 %v216
    %v394 = vunpack.c.h.b16 %v216
    %v395 = vunpack.c.l.b16 %v217
    %v396 = vunpack.c.h.b16 %v217
    %v397 = vunpack.c.l.b16 %v218
    %v398 = vunpack.c.h.b16 %v218
    %v399 = vunpack.c.l.b16 %v219
    %v400 = vunpack.c.h.b16 %v219
    %v401 = vunpack.c.l.b16 %v220
    %v402 = vunpack.c.h.b16 %v220
    %v403 = vunpack.c.l.b16 %v221
    %v404 = vunpack.c.h.b16 %v221
    %v405 = vunpack.c.l.b16 %v222
    %v406 = vunpack.c.h.b16 %v222
    %v407 = vunpack.c.l.b16 %v223
    %v408 = vunpack.c.h.b16 %v223
    %v409 = vunpack.c.l.b16 %v224
    %v410 = vunpack.c.h.b16 %v224
    %v411 = vunpack.c.l.b16 %v225
    %v412 = vunpack.c.h.b16 %v225
    %v413 = vunpack.c.l.b16 %v226
    %v414 = vunpack.c.h.b16 %v226
    %v415 = vunpack.c.l.b16 %v227
    %v416 = vunpack.c.h.b16 %v227
    %v417 = vunpack.c.l.b16 %v228
    %v418 = vunpack.c.h.b16 %v228
    %v419 = vunpack.c.l.b16 %v229
    %v420 = vunpack.c.h.b16 %v229
    %v421 = vunpack.c.l.b16 %v230
    %v422 = vunpack.c.h.b16 %v230
    %v423 = vunpack.c.l.b16 %v231
    %v424 = vunpack.c.h.b16 %v231
    %v425 = vunpack.c.l.b16 %v232
    %v426 = vunpack.c.h.b16 %v232
    %v427 = vunpack.c.l.b16 %v233
    %v428 = vunpack.c.h.b16 %v233
    %v429 = vunpack.c.l.b16 %v234
    %v430 = vunpack.c.h.b16 %v234
    %v431 = vunpack.c.l.b16 %v235
    %v432 = vunpack.c.h.b16 %v235
    %v433 = vunpack.c.l.b16 %v236
    %v434 = vunpack.c.h.b16 %v236
    %v435 = vunpack.c.l.b16 %v237
    %v436 = vunpack.c.h.b16 %v237
    %v437 = vunpack.c.l.b16 %v238
    %v438 = vunpack.c.h.b16 %v238
    %v439 = vunpack.c.l.b16 %v239
    %v440 = vunpack.c.h.b16 %v239
    %v441 = vunpack.c.l.b16 %v240
    %v442 = vunpack.c.h.b16 %v240
    %v443 = vunpack.c.l.b16 %v241
    %v444 = vunpack.c.h.b16 %v241
    %v445 = vunpack.c.l.b16 %v242
    %v446 = vunpack.c.h.b16 %v242
    %v447 = vunpack.c.l.b16 %v243
    %v448 = vunpack.c.h.b16 %v243
    %v449 = vunpack.c.l.b16 %v244
    %v450 = vunpack.c.h.b16 %v244
    %v451 = vunpack.c.l.b16 %v245
    %v452 = vunpack.c.h.b16 %v245
    %v453 = vunpack.c.l.b16 %v246
    %v454 = vunpack.c.h.b16 %v246
    %v455 = vunpack.c.l.b16 %v247
    %v456 = vunpack.c.h.b16 %v247
    %v457 = vunpack.c.l.b16 %v248
    %v458 = vunpack.c.h.b16 %v248
    %v459 = vunpack.c.l.b16 %v249
    %v460 = vunpack.c.h.b16 %v249
    %v461 = vunpack.c.l.b16 %v250
    %v462 = vunpack.c.h.b16 %v250
    %v463 = vunpack.c.l.b16 %v251
    %v464 = vunpack.c.h.b16 %v251
    %v465 = vunpack.c.l.b16 %v252
    %v466 = vunpack.c.h.b16 %v252
    %v467 = vunpack.c.l.b16 %v253
    %v468 = vunpack.c.h.b16 %v253
    %v469 = vunpack.c.l.b16 %v254
    %v470 = vunpack.c.h.b16 %v254
    %v471 = vunpack.c.l.b16 %v255
    %v472 = vunpack.c.h.b16 %v255
    %v473 = vunpack.c.l.b16 %v256
    %v474 = vunpack.c.h.b16 %v256
    %v475 = vunpack.c.l.b16 %v257
    %v476 = vunpack.c.h.b16 %v257
    %v477 = vunpack.c.l.b16 %v258
    %v478 = vunpack.c.h.b16 %v258
    %v479 = vunpack.c.l.b16 %v259
    %v480 = vunpack.c.h.b16 %v259
    %v481 = vunpack.c.l.b16 %v260
    %v482 = vunpack.c.h.b16 %v260
    %v483 = vunpack.c.l.b16 %v261
    %v484 = vunpack.c.h.b16 %v261
    %v485 = vunpack.c.l.b16 %v262
    %v486 = vunpack.c.h.b16 %v262
    %v487 = vunpack.c.l.b16 %v263
    %v488 = vunpack.c.h.b16 %v263
    %v489 = vunpack.c.l.b16 %v264
    %v490 = vunpack.c.h.b16 %v264
    %v491 = vunpack.c.l.b16 %v265
    %v492 = vunpack.c.h.b16 %v265
    %v493 = vunpack.c.l.b16 %v266
    %v494 = vunpack.c.h.b16 %v266
    %v495 = vunpack.c.l.b16 %v267
    %v496 = vunpack.c.h.b16 %v267
    %v497 = vunpack.c.l.b16 %v268
    %v498 = vunpack.c.h.b16 %v268
    %v499 = vunpack.c.l.b16 %v269
    %v500 = vunpack.c.h.b16 %v269
    %v501 = vunpack.c.l.b16 %v270
    %v502 = vunpack.c.h.b16 %v270
    %v503 = vunpack.c.l.b16 %v271
    %v504 = vunpack.c.h.b16 %v271
    %v505 = vunpack.c.l.b16 %v272
    %v506 = vunpack.c.h.b16 %v272
    %v507 = vunpack.c.l.b16 %v273
    %v508 = vunpack.c.h.b16 %v273
    %v509 = vunpack.c.l.b16 %v274
    %v510 = vunpack.c.h.b16 %v274
    %v511 = vunpack.c.l.b16 %v275
    %v512 = vunpack.c.h.b16 %v275
    %v513 = vunpack.c.l.b16 %v276
    %v514 = vunpack.c.h.b16 %v276
    %v515 = vunpack.c.l.b16 %v277
    %v516 = vunpack.c.h.b16 %v277
    %v517 = vunpack.c.l.b16 %v278
    %v518 = vunpack.c.h.b16 %v278
    %v519 = vunpack.c.l.b16 %v279
    %v520 = vunpack.c.h.b16 %v279
    %v521 = vunpack.c.l.b16 %v280
    %v522 = vunpack.c.h.b16 %v280
    %v523 = vunpack.c.l.b16 %v281
    %v524 = vunpack.c.h.b16 %v281
    %v525 = vunpack.c.l.b16 %v282
    %v526 = vunpack.c.h.b16 %v282
    %v527 = vunpack.c.l.b16 %v283
    %v528 = vunpack.c.h.b16 %v283
    %v529 = vunpack.c.l.b16 %v284
    %v530 = vunpack.c.h.b16 %v284
    %v531 = vunpack.c.l.b16 %v285
    %v532 = vunpack.c.h.b16 %v285
    %v533 = vunpack.c.l.b16 %v286
    %v534 = vunpack.c.h.b16 %v286
    %v535 = vunpack.c.l.b16 %v287
    %v536 = vunpack.c.h.b16 %v287
    %v537 = vpack.c.b16 %v389, %v385
    %v538 = vpack.c.b16 %v390, %v386
    %v539 = vpack.c.b16 %v391, %v387
    %v540 = vpack.c.b16 %v392, %v388
    %v541 = vpack.c.b16 %v397, %v393
    %v542 = vpack.c.b16 %v398, %v394
    %v543 = vpack.c.b16 %v399, %v395
    %v544 = vpack.c.b16 %v400, %v396
    %v545 = vpack.c.b16 %v405, %v401
    %v546 = vpack.c.b16 %v406, %v402
    %v547 = vpack.c.b16 %v407, %v403
    %v548 = vpack.c.b16 %v408, %v404
    %v549 = vpack.c.b16 %v413, %v409
    %v550 = vpack.c.b16 %v414, %v410
    %v551 = vpack.c.b16 %v415, %v411
    %v552 = vpack.c.b16 %v416, %v412
    %v553 = vpack.c.b16 %v421, %v417
    %v554 = vpack.c.b16 %v422, %v418
    %v555 = vpack.c.b16 %v423, %v419
    %v556 = vpack.c.b16 %v424, %v420
    %v557 = vpack.c.b16 %v429, %v425
    %v558 = vpack.c.b16 %v430, %v426
    %v559 = vpack.c.b16 %v431, %v427
    %v560 = vpack.c.b16 %v432, %v428
    %v561 = vpack.c.b16 %v437, %v433
    %v562 = vpack.c.b16 %v438, %v434
    %v563 = vpack.c.b16 %v439, %v435
    %v564 = vpack.c.b16 %v440, %v436
    %v565 = vpack.c.b16 %v445, %v441
    %v566 = vpack.c.b16 %v446, %v442
    %v567 = vpack.c.b16 %v447, %v443
    %v568 = vpack.c.b16 %v448, %v444
    %v569 = vpack.c.b16 %v453, %v449
    %v570 = vpack.c.b16 %v454, %v450
    %v571 = vpack.c.b16 %v455, %v451
    %v572 = vpack.c.b16 %v456, %v452
    %v573 = vpack.c.b16 %v461, %v457
    %v574 = vpack.c.b16 %v462, %v458
    %v575 = vpack.c.b16 %v463, %v459
    %v576 = vpack.c.b16 %v464, %v460
    %v577 = vpack.c.b16 %v469, %v465
    %v578 = vpack.c.b16 %v470, %v466
    %v579 = vpack.c.b16 %v471, %v467
    %v580 = vpack.c.b16 %v472, %v468
    %v581 = vpack.c.b16 %v477, %v473
    %v582 = vpack.c.b16 %v478, %v474
    %v583 = vpack.c.b16 %v479, %v475
    %v584 = vpack.c.b16 %v480, %v476
    %v585 = vpack.c.b16 %v485, %v481
    %v586 = vpack.c.b16 %v486, %v482
    %v587 = vpack.c.b16 %v487, %v483
    %v588 = vpack.c.b16 %v488, %v484
    %v589 = vpack.c.b16 %v493, %v489
    %v590 = vpack.c.b16 %v494, %v490
    %v591 = vpack.c.b16 %v495, %v491
    %v592 = vpack.c.b16 %v496, %v492
    %v593 = vpack.c.b16 %v501, %v497
    %v594 = vpack.c.b16 %v502, %v498
    %v595 = vpack.c.b16 %v503, %v499
    %v596 = vpack.c.b16 %v504, %v500
    %v597 = vpack.c.b16 %v509, %v505
    %v598 = vpack.c.b16 %v510, %v506
    %v599 = vpack.c.b16 %v511, %v507
    %v600 = vpack.c.b16 %v512, %v508
    %v601 = vpack.c.b16 %v517, %v513
    %v602 = vpack.c.b16 %v518, %v514
    %v603 = vpack.c.b16 %v519, %v515
    %v604 = vpack.c.b16 %v520, %v516
    %v605 = vpack.c.b16 %v525, %v521
    %v606 = vpack.c.b16 %v526, %v522
    %v607 = vpack.c.b16 %v527, %v523
    %v608 = vpack.c.b16 %v528, %v524
    %v609 = vpack.c.b16 %v533, %v529
    %v610 = vpack.c.b16 %v534, %v530
    %v611 = vpack.c.b16 %v535, %v531
    %v612 = vpack.c.b16 %v536, %v532
    %vm685 = vcmask 359424
    %v687 = vsel %vm685, %v209, 0
    %vm689 = vcmask 1045504
    %v691 = vsel %vm689, %v609, 0
    %v694 = vsel %vm689, %v610, 0
    %v697 = vsel %vm689, %v611, 0
    %v700 = vsel %vm689, %v612, 0
    %702 = vmatprep.subr.bf16.mxu0 %v538
    %703 = vmatpush1.bf16.msra.mxu0 %v537
    %704 = vmatprep.subr.bf16.mxu0 %v542
    %705 = vmatpush1.bf16.msra.mxu0 %v541
    %706 = vmatprep.subr.bf16.mxu0 %v546
    %707 = vmatpush1.bf16.msra.mxu0 %v545
    %708 = vmatprep.subr.bf16.mxu0 %v550
    %709 = vmatpush1.bf16.msra.mxu0 %v549
    %710 = vmatprep.subr.bf16.mxu0 %v554
    %711 = vmatpush1.bf16.msra.mxu0 %v553
    %712 = vmatprep.subr.bf16.mxu0 %v558
    %713 = vmatpush1.bf16.msra.mxu0 %v557
    %714 = vmatprep.subr.bf16.mxu0 %v562
    %715 = vmatpush1.bf16.msra.mxu0 %v561
    %716 = vmatprep.subr.bf16.mxu0 %v566
    %717 = vmatpush1.bf16.msra.mxu0 %v565
    %718 = vmatprep.subr.bf16.mxu0 %v570
    %719 = vmatpush1.bf16.msra.mxu0 %v569
    %720 = vmatprep.subr.bf16.mxu0 %v574
    %721 = vmatpush1.bf16.msra.mxu0 %v573
    %722 = vmatprep.subr.bf16.mxu0 %v578
    %723 = vmatpush1.bf16.msra.mxu0 %v577
    %724 = vmatprep.subr.bf16.mxu0 %v582
    %725 = vmatpush1.bf16.msra.mxu0 %v581
    %726 = vmatprep.subr.bf16.mxu0 %v586
    %727 = vmatpush1.bf16.msra.mxu0 %v585
    %728 = vmatprep.subr.bf16.mxu0 %v590
    %729 = vmatpush1.bf16.msra.mxu0 %v589
    %730 = vmatprep.subr.bf16.mxu0 %v594
    %731 = vmatpush1.bf16.msra.mxu0 %v593
    %732 = vmatprep.subr.bf16.mxu0 %v598
    %733 = vmatpush1.bf16.msra.mxu0 %v597
    %734 = vmatprep.mubr.bf16.mxu0 %v208
    %735 = vmatmul.mubr.bf16.gmra.mrb[0].mxu0 %v207
    %v736 = vpop.f32.mrb[0].mxu0
    %v737 = vadd.f32 %v292, %v736
    %v738 = vpop.f32.mrb[0].mxu0
    %v739 = vadd.f32 %v296, %v738
    %v740 = vpop.f32.mrb[0].mxu0
    %v741 = vpop.f32.mrb[0].mxu0
    %742 = vdwg.mxu0
    %743 = vmatprep.subr.bf16.mxu0 %v602
    %744 = vmatpush1.bf16.msra.mxu0 %v601
    %745 = vmatprep.subr.bf16.mxu0 %v606
    %746 = vmatpush1.bf16.msra.mxu0 %v605
    %747 = vmatprep.subr.bf16.mxu0 %v694
    %748 = vmatpush1.bf16.msra.mxu0 %v691
    %749 = vmatprep.subr.bf16.mxu0 0
    %750 = vmatpush1.bf16.msra.mxu0 0
    %751 = vmatprep.subr.bf16.mxu0 0
    %752 = vmatpush1.bf16.msra.mxu0 0
    %753 = vmatprep.subr.bf16.mxu0 0
    %754 = vmatpush1.bf16.msra.mxu0 0
    %755 = vmatprep.subr.bf16.mxu0 0
    %756 = vmatpush1.bf16.msra.mxu0 0
    %757 = vmatprep.subr.bf16.mxu0 0
    %758 = vmatpush1.bf16.msra.mxu0 0
    %759 = vmatprep.subr.bf16.mxu0 0
    %760 = vmatpush1.bf16.msra.mxu0 0
    %761 = vmatprep.subr.bf16.mxu0 0
    %762 = vmatpush1.bf16.msra.mxu0 0
    %763 = vmatprep.subr.bf16.mxu0 0
    %764 = vmatpush1.bf16.msra.mxu0 0
    %765 = vmatprep.subr.bf16.mxu0 0
    %766 = vmatpush1.bf16.msra.mxu0 0
    %767 = vmatprep.subr.bf16.mxu0 0
    %768 = vmatpush1.bf16.msra.mxu0 0
    %769 = vmatprep.subr.bf16.mxu0 0
    %770 = vmatpush1.bf16.msra.mxu0 0
    %771 = vmatprep.subr.bf16.mxu0 0
    %772 = vmatpush1.bf16.msra.mxu0 0
    %773 = vmatprep.subr.bf16.mxu0 0
    %774 = vmatpush1.bf16.msra.mxu0 0
    %775 = vmatprep.mubr.bf16.mxu0 0
    %776 = vmatmul.mubr.bf16.gmra.mrb[0].mxu0 %v687
    %v777 = vpop.f32.mrb[0].mxu0
    %v778 = vadd.f32 %v737, %v777
    %v779 = vpop.f32.mrb[0].mxu0
    %v780 = vadd.f32 %v739, %v779
    %v781 = vpop.f32.mrb[0].mxu0
    %v782 = vpop.f32.mrb[0].mxu0
    %783 = vdwg.mxu0
    %784 = vmatprep.subr.bf16.mxu0 %v540
    %785 = vmatpush1.bf16.msra.mxu0 %v539
    %786 = vmatprep.subr.bf16.mxu0 %v544
    %787 = vmatpush1.bf16.msra.mxu0 %v543
    %788 = vmatprep.subr.bf16.mxu0 %v548
    %789 = vmatpush1.bf16.msra.mxu0 %v547
    %790 = vmatprep.subr.bf16.mxu0 %v552
    %791 = vmatpush1.bf16.msra.mxu0 %v551
    %792 = vmatprep.subr.bf16.mxu0 %v556
    %793 = vmatpush1.bf16.msra.mxu0 %v555
    %794 = vmatprep.subr.bf16.mxu0 %v560
    %795 = vmatpush1.bf16.msra.mxu0 %v559
    %796 = vmatprep.subr.bf16.mxu0 %v564
    %797 = vmatpush1.bf16.msra.mxu0 %v563
    %798 = vmatprep.subr.bf16.mxu0 %v568
    %799 = vmatpush1.bf16.msra.mxu0 %v567
    %800 = vmatprep.subr.bf16.mxu0 %v572
    %801 = vmatpush1.bf16.msra.mxu0 %v571
    %802 = vmatprep.subr.bf16.mxu0 %v576
    %803 = vmatpush1.bf16.msra.mxu0 %v575
    %804 = vmatprep.subr.bf16.mxu0 %v580
    %805 = vmatpush1.bf16.msra.mxu0 %v579
    %806 = vmatprep.subr.bf16.mxu0 %v584
    %807 = vmatpush1.bf16.msra.mxu0 %v583
    %808 = vmatprep.subr.bf16.mxu0 %v588
    %809 = vmatpush1.bf16.msra.mxu0 %v587
    %810 = vmatprep.subr.bf16.mxu0 %v592
    %811 = vmatpush1.bf16.msra.mxu0 %v591
    %812 = vmatprep.subr.bf16.mxu0 %v596
    %813 = vmatpush1.bf16.msra.mxu0 %v595
    %814 = vmatprep.subr.bf16.mxu0 %v600
    %815 = vmatpush1.bf16.msra.mxu0 %v599
    %816 = vmatprep.mubr.bf16.mxu0 %v208
    %817 = vmatmul.mubr.bf16.gmra.mrb[0].mxu0 %v207
    %v818 = vpop.f32.mrb[0].mxu0
    %v819 = vadd.f32 %v300, %v818
    %v820 = vpop.f32.mrb[0].mxu0
    %v821 = vadd.f32 %v304, %v820
    %v822 = vpop.f32.mrb[0].mxu0
    %v823 = vpop.f32.mrb[0].mxu0
    %824 = vdwg.mxu0
    %825 = vmatprep.subr.bf16.mxu0 %v604
    %826 = vmatpush1.bf16.msra.mxu0 %v603
    %827 = vmatprep.subr.bf16.mxu0 %v608
    %828 = vmatpush1.bf16.msra.mxu0 %v607
    %829 = vmatprep.subr.bf16.mxu0 %v700
    %830 = vmatpush1.bf16.msra.mxu0 %v697
    %831 = vmatprep.subr.bf16.mxu0 0
    %832 = vmatpush1.bf16.msra.mxu0 0
    %833 = vmatprep.subr.bf16.mxu0 0
    %834 = vmatpush1.bf16.msra.mxu0 0
    %835 = vmatprep.subr.bf16.mxu0 0
    %836 = vmatpush1.bf16.msra.mxu0 0
    %837 = vmatprep.subr.bf16.mxu0 0
    %838 = vmatpush1.bf16.msra.mxu0 0
    %839 = vmatprep.subr.bf16.mxu0 0
    %840 = vmatpush1.bf16.msra.mxu0 0
    %841 = vmatprep.subr.bf16.mxu0 0
    %842 = vmatpush1.bf16.msra.mxu0 0
    %843 = vmatprep.subr.bf16.mxu0 0
    %844 = vmatpush1.bf16.msra.mxu0 0
    %845 = vmatprep.subr.bf16.mxu0 0
    %846 = vmatpush1.bf16.msra.mxu0 0
    %847 = vmatprep.subr.bf16.mxu0 0
    %848 = vmatpush1.bf16.msra.mxu0 0
    %849 = vmatprep.subr.bf16.mxu0 0
    %850 = vmatpush1.bf16.msra.mxu0 0
    %851 = vmatprep.subr.bf16.mxu0 0
    %852 = vmatpush1.bf16.msra.mxu0 0
    %853 = vmatprep.subr.bf16.mxu0 0
    %854 = vmatpush1.bf16.msra.mxu0 0
    %855 = vmatprep.subr.bf16.mxu0 0
    %856 = vmatpush1.bf16.msra.mxu0 0
    %857 = vmatprep.mubr.bf16.mxu0 0
    %858 = vmatmul.mubr.bf16.gmra.mrb[0].mxu0 %v687
    %v859 = vpop.f32.mrb[0].mxu0
    %v860 = vadd.f32 %v819, %v859
    %v861 = vpop.f32.mrb[0].mxu0
    %v862 = vadd.f32 %v821, %v861
    %v863 = vpop.f32.mrb[0].mxu0
    %v864 = vpop.f32.mrb[0].mxu0
    %865 = vdwg.mxu0
    %v866 = vmax.f32 %v778, 0.0
    %v867 = vmax.f32 %v780, 0.0
    %v868 = vmax.f32 %v860, 0.0
    %v869 = vmax.f32 %v862, 0.0
    %v870 = vpack.c.bf16 %v866, %v866
    %v871 = vpack.c.bf16 %v867, %v867
    %v872 = vpack.c.bf16 %v868, %v868
    %v873 = vpack.c.bf16 %v869, %v869
    %s874 = scalar_lea.vmem %s8, 2
    %v875 = vld [vmem:[%s874] ss:$8 sm:$0xf]
    %v876 = vld [vmem:[%s874] ss:$8 sm:$0xf0]
    %v877 = vor.u32 %v875, %v876
    %v878 = vld [vmem:[%s3] sm:$0xff]
    %v879 = vld [vmem:[%s3 + $0x8] sm:$0xff]
    %v880 = vld [vmem:[%s3 + $0x10] sm:$0xff]
    %v881 = vld [vmem:[%s3 + $0x18] sm:$0xff]
    %v882 = vld [vmem:[%s3 + $0x20] sm:$0xff]
    %v883 = vld [vmem:[%s3 + $0x28] sm:$0xff]
    %v884 = vld [vmem:[%s3 + $0x30] sm:$0xff]
    %v885 = vld [vmem:[%s3 + $0x38] sm:$0xff]
    %v886 = vld [vmem:[%s3 + $0x40] sm:$0xff]
    %v887 = vld [vmem:[%s3 + $0x48] sm:$0xff]
    %v888 = vld [vmem:[%s3 + $0x50] sm:$0xff]
    %v889 = vld [vmem:[%s3 + $0x58] sm:$0xff]
    %v890 = vld [vmem:[%s3 + $0x60] sm:$0xff]
    %v891 = vld [vmem:[%s3 + $0x68] sm:$0xff]
    %v892 = vld [vmem:[%s3 + $0x70] sm:$0xff]
    %v893 = vld [vmem:[%s3 + $0x78] sm:$0xff]
    %v894 = vld [vmem:[%s3 + $0x80] sm:$0xff]
    %v895 = vld [vmem:[%s3 + $0x88] sm:$0xff]
    %v896 = vld [vmem:[%s3 + $0x90] sm:$0xff]
    %v897 = vld [vmem:[%s3 + $0x98] sm:$0xff]
    %v898 = vld [vmem:[%s3 + $0xa0] sm:$0xff]
    %v899 = vld [vmem:[%s3 + $0xa8] sm:$0xff]
    %v900 = vld [vmem:[%s3 + $0xb0] sm:$0xff]
    %v901 = vld [vmem:[%s3 + $0xb8] sm:$0xff]
    %v902 = vld [vmem:[%s3 + $0xc0] sm:$0xff]
    %v903 = vld [vmem:[%s3 + $0xc8] sm:$0xff]
    %v904 = vld [vmem:[%s3 + $0xd0] sm:$0xff]
    %v905 = vld [vmem:[%s3 + $0xd8] sm:$0xff]
    %v906 = vld [vmem:[%s3 + $0xe0] sm:$0xff]
    %v907 = vld [vmem:[%s3 + $0xe8] sm:$0xff]
    %v908 = vld [vmem:[%s3 + $0xf0] sm:$0xff]
    %v909 = vld [vmem:[%s3 + $0xf8] sm:$0xff]
    %v910 = vld [vmem:[%s3 + $0x100] sm:$0xff]
    %v911 = vld [vmem:[%s3 + $0x108] sm:$0xff]
    %v912 = vld [vmem:[%s3 + $0x110] sm:$0xff]
    %v913 = vld [vmem:[%s3 + $0x118] sm:$0xff]
    %v914 = vld [vmem:[%s3 + $0x120] sm:$0xff]
    %v915 = vld [vmem:[%s3 + $0x128] sm:$0xff]
    %v916 = vld [vmem:[%s3 + $0x130] sm:$0xff]
    %v917 = vld [vmem:[%s3 + $0x138] sm:$0xff]
    %v918 = vld [vmem:[%s3 + $0x140] sm:$0xff]
    %v919 = vld [vmem:[%s3 + $0x148] sm:$0xff]
    %v920 = vld [vmem:[%s3 + $0x150] sm:$0xff]
    %v921 = vld [vmem:[%s3 + $0x158] sm:$0xff]
    %v922 = vld [vmem:[%s3 + $0x160] sm:$0xff]
    %v923 = vld [vmem:[%s3 + $0x168] sm:$0xff]
    %v924 = vld [vmem:[%s3 + $0x170] sm:$0xff]
    %v925 = vld [vmem:[%s3 + $0x178] sm:$0xff]
    %v926 = vld [vmem:[%s3 + $0x180] sm:$0xff]
    %v927 = vld [vmem:[%s3 + $0x188] sm:$0xff]
    %v928 = vld [vmem:[%s3 + $0x190] sm:$0xff]
    %v929 = vld [vmem:[%s3 + $0x198] sm:$0xff]
    %v930 = vld [vmem:[%s3 + $0x1a0] sm:$0xff]
    %v931 = vld [vmem:[%s3 + $0x1a8] sm:$0xff]
    %v932 = vld [vmem:[%s3 + $0x1b0] sm:$0xff]
    %v933 = vld [vmem:[%s3 + $0x1b8] sm:$0xff]
    %v934 = vld [vmem:[%s3 + $0x1c0] sm:$0xff]
    %v935 = vld [vmem:[%s3 + $0x1c8] sm:$0xff]
    %v936 = vld [vmem:[%s3 + $0x1d0] sm:$0xff]
    %v937 = vld [vmem:[%s3 + $0x1d8] sm:$0xff]
    %v938 = vld [vmem:[%s3 + $0x1e0] sm:$0xff]
    %v939 = vld [vmem:[%s3 + $0x1e8] sm:$0xff]
    %v940 = vld [vmem:[%s3 + $0x1f0] sm:$0xff]
    %v941 = vld [vmem:[%s3 + $0x1f8] sm:$0xff]
    %v942 = vld [vmem:[%s3 + $0x200] sm:$0xff]
    %v943 = vld [vmem:[%s3 + $0x208] sm:$0xff]
    %v944 = vld [vmem:[%s3 + $0x210] sm:$0xff]
    %v945 = vld [vmem:[%s3 + $0x218] sm:$0xff]
    %v946 = vld [vmem:[%s3 + $0x220] sm:$0xff]
    %v947 = vld [vmem:[%s3 + $0x228] sm:$0xff]
    %v948 = vld [vmem:[%s3 + $0x230] sm:$0xff]
    %v949 = vld [vmem:[%s3 + $0x238] sm:$0xff]
    %v950 = vld [vmem:[%s3 + $0x240] sm:$0xff]
    %v951 = vld [vmem:[%s3 + $0x248] sm:$0xff]
    %v952 = vld [vmem:[%s3 + $0x250] sm:$0xff]
    %v953 = vld [vmem:[%s3 + $0x258] sm:$0xff]
    %v954 = vld [vmem:[%s3 + $0x260] sm:$0xff]
    %v955 = vld [vmem:[%s3 + $0x268] sm:$0xff]
    %v956 = vld [vmem:[%s3 + $0x270] sm:$0xff]
    %v957 = vld [vmem:[%s3 + $0x278] sm:$0xff]
    %v958 = vld [vmem:[%s3 + $0x280] sm:$0xff]
    %v959 = vld [vmem:[%s3 + $0x288] sm:$0xff]
    %v960 = vld [vmem:[%s3 + $0x290] sm:$0xff]
    %v961 = vld [vmem:[%s3 + $0x298] sm:$0xff]
    %v962 = vld [vmem:[%s3 + $0x2a0] sm:$0xff]
    %v963 = vld [vmem:[%s3 + $0x2a8] sm:$0xff]
    %v964 = vld [vmem:[%s3 + $0x2b0] sm:$0xff]
    %v965 = vld [vmem:[%s3 + $0x2b8] sm:$0xff]
    %v966 = vld [vmem:[%s3 + $0x2c0] sm:$0xff]
    %v967 = vld [vmem:[%s3 + $0x2c8] sm:$0xff]
    %v968 = vld [vmem:[%s3 + $0x2d0] sm:$0xff]
    %v969 = vld [vmem:[%s3 + $0x2d8] sm:$0xff]
    %v970 = vld [vmem:[%s3 + $0x2e0] sm:$0xff]
    %v971 = vld [vmem:[%s3 + $0x2e8] sm:$0xff]
    %v972 = vld [vmem:[%s3 + $0x2f0] sm:$0xff]
    %v973 = vld [vmem:[%s3 + $0x2f8] sm:$0xff]
    %v974 = vld [vmem:[%s3 + $0x300] sm:$0xff]
    %v975 = vld [vmem:[%s3 + $0x308] sm:$0xff]
    %v976 = vld [vmem:[%s3 + $0x310] sm:$0xff]
    %v977 = vld [vmem:[%s3 + $0x318] sm:$0xff]
    %v978 = vld [vmem:[%s3 + $0x320] sm:$0xff]
    %v979 = vld [vmem:[%s3 + $0x328] sm:$0xff]
    %v980 = vld [vmem:[%s3 + $0x330] sm:$0xff]
    %v981 = vld [vmem:[%s3 + $0x338] sm:$0xff]
    %v982 = vld [vmem:[%s3 + $0x340] sm:$0xff]
    %v983 = vld [vmem:[%s3 + $0x348] sm:$0xff]
    %v984 = vld [vmem:[%s3 + $0x350] sm:$0xff]
    %v985 = vld [vmem:[%s3 + $0x358] sm:$0xff]
    %v986 = vld [vmem:[%s3 + $0x360] sm:$0xff]
    %v987 = vld [vmem:[%s3 + $0x368] sm:$0xff]
    %v988 = vld [vmem:[%s3 + $0x370] sm:$0xff]
    %v989 = vld [vmem:[%s3 + $0x378] sm:$0xff]
    %v990 = vld [vmem:[%s3 + $0x380] sm:$0xff]
    %v991 = vld [vmem:[%s3 + $0x388] sm:$0xff]
    %v992 = vld [vmem:[%s3 + $0x390] sm:$0xff]
    %v993 = vld [vmem:[%s3 + $0x398] sm:$0xff]
    %v994 = vld [vmem:[%s3 + $0x3a0] sm:$0xff]
    %v995 = vld [vmem:[%s3 + $0x3a8] sm:$0xff]
    %v996 = vld [vmem:[%s3 + $0x3b0] sm:$0xff]
    %v997 = vld [vmem:[%s3 + $0x3b8] sm:$0xff]
    %v998 = vld [vmem:[%s3 + $0x3c0] sm:$0xff]
    %v999 = vld [vmem:[%s3 + $0x3c8] sm:$0xff]
    %v1000 = vld [vmem:[%s3 + $0x3d0] sm:$0xff]
    %v1001 = vld [vmem:[%s3 + $0x3d8] sm:$0xff]
    %v1002 = vld [vmem:[%s3 + $0x3e0] sm:$0xff]
    %v1003 = vld [vmem:[%s3 + $0x3e8] sm:$0xff]
    %v1004 = vld [vmem:[%s3 + $0x3f0] sm:$0xff]
    %v1005 = vld [vmem:[%s3 + $0x3f8] sm:$0xff]
    %v1006 = vld [vmem:[%s3 + $0x400] sm:$0xff]
    %v1007 = vld [vmem:[%s3 + $0x408] sm:$0xff]
    %v1008 = vld [vmem:[%s3 + $0x410] sm:$0xff]
    %v1009 = vld [vmem:[%s3 + $0x418] sm:$0xff]
    %v1010 = vld [vmem:[%s3 + $0x420] sm:$0xff]
    %v1011 = vld [vmem:[%s3 + $0x428] sm:$0xff]
    %v1012 = vld [vmem:[%s3 + $0x430] sm:$0xff]
    %v1013 = vld [vmem:[%s3 + $0x438] sm:$0xff]
    %v1014 = vld [vmem:[%s3 + $0x440] sm:$0xff]
    %v1015 = vld [vmem:[%s3 + $0x448] sm:$0xff]
    %v1016 = vld [vmem:[%s3 + $0x450] sm:$0xff]
    %v1017 = vld [vmem:[%s3 + $0x458] sm:$0xff]
    %v1018 = vld [vmem:[%s3 + $0x460] sm:$0xff]
    %v1019 = vld [vmem:[%s3 + $0x468] sm:$0xff]
    %v1020 = vld [vmem:[%s3 + $0x470] sm:$0xff]
    %v1021 = vld [vmem:[%s3 + $0x478] sm:$0xff]
    %v1022 = vld [vmem:[%s3 + $0x480] sm:$0xff]
    %v1023 = vld [vmem:[%s3 + $0x488] sm:$0xff]
    %v1024 = vld [vmem:[%s3 + $0x490] sm:$0xff]
    %v1025 = vld [vmem:[%s3 + $0x498] sm:$0xff]
    %v1026 = vld [vmem:[%s3 + $0x4a0] sm:$0xff]
    %v1027 = vld [vmem:[%s3 + $0x4a8] sm:$0xff]
    %v1028 = vld [vmem:[%s3 + $0x4b0] sm:$0xff]
    %v1029 = vld [vmem:[%s3 + $0x4b8] sm:$0xff]
    %v1030 = vld [vmem:[%s3 + $0x4c0] sm:$0xff]
    %v1031 = vld [vmem:[%s3 + $0x4c8] sm:$0xff]
    %v1032 = vld [vmem:[%s3 + $0x4d0] sm:$0xff]
    %v1033 = vld [vmem:[%s3 + $0x4d8] sm:$0xff]
    %v1034 = vld [vmem:[%s3 + $0x4e0] sm:$0xff]
    %v1035 = vld [vmem:[%s3 + $0x4e8] sm:$0xff]
    %v1036 = vld [vmem:[%s3 + $0x4f0] sm:$0xff]
    %v1037 = vld [vmem:[%s3 + $0x4f8] sm:$0xff]
    %v1038 = vld [vmem:[%s3 + $0x500] sm:$0xff]
    %v1039 = vld [vmem:[%s3 + $0x508] sm:$0xff]
    %v1040 = vld [vmem:[%s3 + $0x510] sm:$0xff]
    %v1041 = vld [vmem:[%s3 + $0x518] sm:$0xff]
    %v1042 = vld [vmem:[%s3 + $0x520] sm:$0xff]
    %v1043 = vld [vmem:[%s3 + $0x528] sm:$0xff]
    %v1044 = vld [vmem:[%s3 + $0x530] sm:$0xff]
    %v1045 = vld [vmem:[%s3 + $0x538] sm:$0xff]
    %v1046 = vld [vmem:[%s3 + $0x540] sm:$0xff]
    %v1047 = vld [vmem:[%s3 + $0x548] sm:$0xff]
    %v1048 = vld [vmem:[%s3 + $0x550] sm:$0xff]
    %v1049 = vld [vmem:[%s3 + $0x558] sm:$0xff]
    %v1050 = vld [vmem:[%s3 + $0x560] sm:$0xff]
    %v1051 = vld [vmem:[%s3 + $0x568] sm:$0xff]
    %v1052 = vld [vmem:[%s3 + $0x570] sm:$0xff]
    %v1053 = vld [vmem:[%s3 + $0x578] sm:$0xff]
    %v1054 = vld [vmem:[%s3 + $0x580] sm:$0xff]
    %v1055 = vld [vmem:[%s3 + $0x588] sm:$0xff]
    %v1056 = vld [vmem:[%s3 + $0x590] sm:$0xff]
    %v1057 = vld [vmem:[%s3 + $0x598] sm:$0xff]
    %v1058 = vld [vmem:[%s3 + $0x5a0] sm:$0xff]
    %v1059 = vld [vmem:[%s3 + $0x5a8] sm:$0xff]
    %v1060 = vld [vmem:[%s3 + $0x5b0] sm:$0xff]
    %v1061 = vld [vmem:[%s3 + $0x5b8] sm:$0xff]
    %v1062 = vld [vmem:[%s3 + $0x5c0] sm:$0xff]
    %v1063 = vld [vmem:[%s3 + $0x5c8] sm:$0xff]
    %v1064 = vld [vmem:[%s3 + $0x5d0] sm:$0xff]
    %v1065 = vld [vmem:[%s3 + $0x5d8] sm:$0xff]
    %v1066 = vld [vmem:[%s3 + $0x5e0] sm:$0xff]
    %v1067 = vld [vmem:[%s3 + $0x5e8] sm:$0xff]
    %v1068 = vld [vmem:[%s3 + $0x5f0] sm:$0xff]
    %v1069 = vld [vmem:[%s3 + $0x5f8] sm:$0xff]
    %v1070 = vld [vmem:[%s3 + $0x600] sm:$0xff]
    %v1071 = vld [vmem:[%s3 + $0x608] sm:$0xff]
    %v1072 = vld [vmem:[%s3 + $0x610] sm:$0xff]
    %v1073 = vld [vmem:[%s3 + $0x618] sm:$0xff]
    %v1074 = vld [vmem:[%s3 + $0x620] sm:$0xff]
    %v1075 = vld [vmem:[%s3 + $0x628] sm:$0xff]
    %v1076 = vld [vmem:[%s3 + $0x630] sm:$0xff]
    %v1077 = vld [vmem:[%s3 + $0x638] sm:$0xff]
    %v1078 = vld [vmem:[%s3 + $0x640] sm:$0xff]
    %v1079 = vld [vmem:[%s3 + $0x648] sm:$0xff]
    %v1080 = vld [vmem:[%s3 + $0x650] sm:$0xff]
    %v1081 = vld [vmem:[%s3 + $0x658] sm:$0xff]
    %v1082 = vld [vmem:[%s3 + $0x660] sm:$0xff]
    %v1083 = vld [vmem:[%s3 + $0x668] sm:$0xff]
    %v1084 = vld [vmem:[%s3 + $0x670] sm:$0xff]
    %v1085 = vld [vmem:[%s3 + $0x678] sm:$0xff]
    %v1086 = vld [vmem:[%s3 + $0x680] sm:$0xff]
    %v1087 = vld [vmem:[%s3 + $0x688] sm:$0xff]
    %v1088 = vld [vmem:[%s3 + $0x690] sm:$0xff]
    %v1089 = vld [vmem:[%s3 + $0x698] sm:$0xff]
    %v1090 = vld [vmem:[%s3 + $0x6a0] sm:$0xff]
    %v1091 = vld [vmem:[%s3 + $0x6a8] sm:$0xff]
    %v1092 = vld [vmem:[%s3 + $0x6b0] sm:$0xff]
    %v1093 = vld [vmem:[%s3 + $0x6b8] sm:$0xff]
    %v1094 = vld [vmem:[%s3 + $0x6c0] sm:$0xff]
    %v1095 = vld [vmem:[%s3 + $0x6c8] sm:$0xff]
    %v1096 = vld [vmem:[%s3 + $0x6d0] sm:$0xff]
    %v1097 = vld [vmem:[%s3 + $0x6d8] sm:$0xff]
    %v1098 = vld [vmem:[%s3 + $0x6e0] sm:$0xff]
    %v1099 = vld [vmem:[%s3 + $0x6e8] sm:$0xff]
    %v1100 = vld [vmem:[%s3 + $0x6f0] sm:$0xff]
    %v1101 = vld [vmem:[%s3 + $0x6f8] sm:$0xff]
    %v1102 = vld [vmem:[%s3 + $0x700] sm:$0xff]
    %v1103 = vld [vmem:[%s3 + $0x708] sm:$0xff]
    %v1104 = vld [vmem:[%s3 + $0x710] sm:$0xff]
    %v1105 = vld [vmem:[%s3 + $0x718] sm:$0xff]
    %v1106 = vld [vmem:[%s3 + $0x720] sm:$0xff]
    %v1107 = vld [vmem:[%s3 + $0x728] sm:$0xff]
    %v1108 = vld [vmem:[%s3 + $0x730] sm:$0xff]
    %v1109 = vld [vmem:[%s3 + $0x738] sm:$0xff]
    %v1110 = vld [vmem:[%s3 + $0x740] sm:$0xff]
    %v1111 = vld [vmem:[%s3 + $0x748] sm:$0xff]
    %v1112 = vld [vmem:[%s3 + $0x750] sm:$0xff]
    %v1113 = vld [vmem:[%s3 + $0x758] sm:$0xff]
    %v1114 = vld [vmem:[%s3 + $0x760] sm:$0xff]
    %v1115 = vld [vmem:[%s3 + $0x768] sm:$0xff]
    %v1116 = vld [vmem:[%s3 + $0x770] sm:$0xff]
    %v1117 = vld [vmem:[%s3 + $0x778] sm:$0xff]
    %v1118 = vld [vmem:[%s3 + $0x780] sm:$0xff]
    %v1119 = vld [vmem:[%s3 + $0x788] sm:$0xff]
    %v1120 = vld [vmem:[%s3 + $0x790] sm:$0xff]
    %v1121 = vld [vmem:[%s3 + $0x798] sm:$0xff]
    %v1122 = vld [vmem:[%s3 + $0x7a0] sm:$0xff]
    %v1123 = vld [vmem:[%s3 + $0x7a8] sm:$0xff]
    %v1124 = vld [vmem:[%s3 + $0x7b0] sm:$0xff]
    %v1125 = vld [vmem:[%s3 + $0x7b8] sm:$0xff]
    %v1126 = vld [vmem:[%s3 + $0x7c0] sm:$0x33]
    %v1127 = vld [vmem:[%s3 + $0x7c8] sm:$0x33]
    %v1128 = vld [vmem:[%s3 + $0x7d0] sm:$0x33]
    %v1129 = vld [vmem:[%s3 + $0x7d8] sm:$0x33]
    %v1131 = vlaneseq
    %v1132 = vshrl.u32 %v1131, 7
    %v1133 = vsub.s32 0, %v1132
    %v1134 = vrot.slane %v877, %v1133
    %v1135 = vlaneseq
    %v1136 = vshrl.u32 %v1135, 7
    %v1137 = vsub.s32 1, %v1136
    %v1138 = vrot.slane %v877, %v1137
    %v1139 = vlaneseq
    %v1140 = vshrl.u32 %v1139, 7
    %v1141 = vsub.s32 2, %v1140
    %v1142 = vrot.slane %v877, %v1141
    %v1143 = vlaneseq
    %v1144 = vshrl.u32 %v1143, 7
    %v1145 = vsub.s32 3, %v1144
    %v1146 = vrot.slane %v877, %v1145
    %v1147 = vlaneseq
    %v1148 = vshrl.u32 %v1147, 7
    %v1149 = vsub.s32 4, %v1148
    %v1150 = vrot.slane %v877, %v1149
    %v1151 = vlaneseq
    %v1152 = vshrl.u32 %v1151, 7
    %v1153 = vsub.s32 5, %v1152
    %v1154 = vrot.slane %v877, %v1153
    %v1155 = vlaneseq
    %v1156 = vshrl.u32 %v1155, 7
    %v1157 = vsub.s32 6, %v1156
    %v1158 = vrot.slane %v877, %v1157
    %v1159 = vlaneseq
    %v1160 = vshrl.u32 %v1159, 7
    %v1161 = vsub.s32 7, %v1160
    %v1162 = vrot.slane %v877, %v1161
    %v1423 = vunpack.c.l.b16 %v878
    %v1424 = vunpack.c.h.b16 %v878
    %v1425 = vunpack.c.l.b16 %v879
    %v1426 = vunpack.c.h.b16 %v879
    %v1427 = vunpack.c.l.b16 %v880
    %v1428 = vunpack.c.h.b16 %v880
    %v1429 = vunpack.c.l.b16 %v881
    %v1430 = vunpack.c.h.b16 %v881
    %v1431 = vunpack.c.l.b16 %v882
    %v1432 = vunpack.c.h.b16 %v882
    %v1433 = vunpack.c.l.b16 %v883
    %v1434 = vunpack.c.h.b16 %v883
    %v1435 = vunpack.c.l.b16 %v884
    %v1436 = vunpack.c.h.b16 %v884
    %v1437 = vunpack.c.l.b16 %v885
    %v1438 = vunpack.c.h.b16 %v885
    %v1439 = vunpack.c.l.b16 %v886
    %v1440 = vunpack.c.h.b16 %v886
    %v1441 = vunpack.c.l.b16 %v887
    %v1442 = vunpack.c.h.b16 %v887
    %v1443 = vunpack.c.l.b16 %v888
    %v1444 = vunpack.c.h.b16 %v888
    %v1445 = vunpack.c.l.b16 %v889
    %v1446 = vunpack.c.h.b16 %v889
    %v1447 = vunpack.c.l.b16 %v890
    %v1448 = vunpack.c.h.b16 %v890
    %v1449 = vunpack.c.l.b16 %v891
    %v1450 = vunpack.c.h.b16 %v891
    %v1451 = vunpack.c.l.b16 %v892
    %v1452 = vunpack.c.h.b16 %v892
    %v1453 = vunpack.c.l.b16 %v893
    %v1454 = vunpack.c.h.b16 %v893
    %v1455 = vunpack.c.l.b16 %v894
    %v1456 = vunpack.c.h.b16 %v894
    %v1457 = vunpack.c.l.b16 %v895
    %v1458 = vunpack.c.h.b16 %v895
    %v1459 = vunpack.c.l.b16 %v896
    %v1460 = vunpack.c.h.b16 %v896
    %v1461 = vunpack.c.l.b16 %v897
    %v1462 = vunpack.c.h.b16 %v897
    %v1463 = vunpack.c.l.b16 %v898
    %v1464 = vunpack.c.h.b16 %v898
    %v1465 = vunpack.c.l.b16 %v899
    %v1466 = vunpack.c.h.b16 %v899
    %v1467 = vunpack.c.l.b16 %v900
    %v1468 = vunpack.c.h.b16 %v900
    %v1469 = vunpack.c.l.b16 %v901
    %v1470 = vunpack.c.h.b16 %v901
    %v1471 = vunpack.c.l.b16 %v902
    %v1472 = vunpack.c.h.b16 %v902
    %v1473 = vunpack.c.l.b16 %v903
    %v1474 = vunpack.c.h.b16 %v903
    %v1475 = vunpack.c.l.b16 %v904
    %v1476 = vunpack.c.h.b16 %v904
    %v1477 = vunpack.c.l.b16 %v905
    %v1478 = vunpack.c.h.b16 %v905
    %v1479 = vunpack.c.l.b16 %v906
    %v1480 = vunpack.c.h.b16 %v906
    %v1481 = vunpack.c.l.b16 %v907
    %v1482 = vunpack.c.h.b16 %v907
    %v1483 = vunpack.c.l.b16 %v908
    %v1484 = vunpack.c.h.b16 %v908
    %v1485 = vunpack.c.l.b16 %v909
    %v1486 = vunpack.c.h.b16 %v909
    %v1487 = vunpack.c.l.b16 %v910
    %v1488 = vunpack.c.h.b16 %v910
    %v1489 = vunpack.c.l.b16 %v911
    %v1490 = vunpack.c.h.b16 %v911
    %v1491 = vunpack.c.l.b16 %v912
    %v1492 = vunpack.c.h.b16 %v912
    %v1493 = vunpack.c.l.b16 %v913
    %v1494 = vunpack.c.h.b16 %v913
    %v1495 = vunpack.c.l.b16 %v914
    %v1496 = vunpack.c.h.b16 %v914
    %v1497 = vunpack.c.l.b16 %v915
    %v1498 = vunpack.c.h.b16 %v915
    %v1499 = vunpack.c.l.b16 %v916
    %v1500 = vunpack.c.h.b16 %v916
    %v1501 = vunpack.c.l.b16 %v917
    %v1502 = vunpack.c.h.b16 %v917
    %v1503 = vunpack.c.l.b16 %v918
    %v1504 = vunpack.c.h.b16 %v918
    %v1505 = vunpack.c.l.b16 %v919
    %v1506 = vunpack.c.h.b16 %v919
    %v1507 = vunpack.c.l.b16 %v920
    %v1508 = vunpack.c.h.b16 %v920
    %v1509 = vunpack.c.l.b16 %v921
    %v1510 = vunpack.c.h.b16 %v921
    %v1511 = vunpack.c.l.b16 %v922
    %v1512 = vunpack.c.h.b16 %v922
    %v1513 = vunpack.c.l.b16 %v923
    %v1514 = vunpack.c.h.b16 %v923
    %v1515 = vunpack.c.l.b16 %v924
    %v1516 = vunpack.c.h.b16 %v924
    %v1517 = vunpack.c.l.b16 %v925
    %v1518 = vunpack.c.h.b16 %v925
    %v1519 = vunpack.c.l.b16 %v926
    %v1520 = vunpack.c.h.b16 %v926
    %v1521 = vunpack.c.l.b16 %v927
    %v1522 = vunpack.c.h.b16 %v927
    %v1523 = vunpack.c.l.b16 %v928
    %v1524 = vunpack.c.h.b16 %v928
    %v1525 = vunpack.c.l.b16 %v929
    %v1526 = vunpack.c.h.b16 %v929
    %v1527 = vunpack.c.l.b16 %v930
    %v1528 = vunpack.c.h.b16 %v930
    %v1529 = vunpack.c.l.b16 %v931
    %v1530 = vunpack.c.h.b16 %v931
    %v1531 = vunpack.c.l.b16 %v932
    %v1532 = vunpack.c.h.b16 %v932
    %v1533 = vunpack.c.l.b16 %v933
    %v1534 = vunpack.c.h.b16 %v933
    %v1535 = vunpack.c.l.b16 %v934
    %v1536 = vunpack.c.h.b16 %v934
    %v1537 = vunpack.c.l.b16 %v935
    %v1538 = vunpack.c.h.b16 %v935
    %v1539 = vunpack.c.l.b16 %v936
    %v1540 = vunpack.c.h.b16 %v936
    %v1541 = vunpack.c.l.b16 %v937
    %v1542 = vunpack.c.h.b16 %v937
    %v1543 = vunpack.c.l.b16 %v938
    %v1544 = vunpack.c.h.b16 %v938
    %v1545 = vunpack.c.l.b16 %v939
    %v1546 = vunpack.c.h.b16 %v939
    %v1547 = vunpack.c.l.b16 %v940
    %v1548 = vunpack.c.h.b16 %v940
    %v1549 = vunpack.c.l.b16 %v941
    %v1550 = vunpack.c.h.b16 %v941
    %v1551 = vunpack.c.l.b16 %v942
    %v1552 = vunpack.c.h.b16 %v942
    %v1553 = vunpack.c.l.b16 %v943
    %v1554 = vunpack.c.h.b16 %v943
    %v1555 = vunpack.c.l.b16 %v944
    %v1556 = vunpack.c.h.b16 %v944
    %v1557 = vunpack.c.l.b16 %v945
    %v1558 = vunpack.c.h.b16 %v945
    %v1559 = vunpack.c.l.b16 %v946
    %v1560 = vunpack.c.h.b16 %v946
    %v1561 = vunpack.c.l.b16 %v947
    %v1562 = vunpack.c.h.b16 %v947
    %v1563 = vunpack.c.l.b16 %v948
    %v1564 = vunpack.c.h.b16 %v948
    %v1565 = vunpack.c.l.b16 %v949
    %v1566 = vunpack.c.h.b16 %v949
    %v1567 = vunpack.c.l.b16 %v950
    %v1568 = vunpack.c.h.b16 %v950
    %v1569 = vunpack.c.l.b16 %v951
    %v1570 = vunpack.c.h.b16 %v951
    %v1571 = vunpack.c.l.b16 %v952
    %v1572 = vunpack.c.h.b16 %v952
    %v1573 = vunpack.c.l.b16 %v953
    %v1574 = vunpack.c.h.b16 %v953
    %v1575 = vunpack.c.l.b16 %v954
    %v1576 = vunpack.c.h.b16 %v954
    %v1577 = vunpack.c.l.b16 %v955
    %v1578 = vunpack.c.h.b16 %v955
    %v1579 = vunpack.c.l.b16 %v956
    %v1580 = vunpack.c.h.b16 %v956
    %v1581 = vunpack.c.l.b16 %v957
    %v1582 = vunpack.c.h.b16 %v957
    %v1583 = vunpack.c.l.b16 %v958
    %v1584 = vunpack.c.h.b16 %v958
    %v1585 = vunpack.c.l.b16 %v959
    %v1586 = vunpack.c.h.b16 %v959
    %v1587 = vunpack.c.l.b16 %v960
    %v1588 = vunpack.c.h.b16 %v960
    %v1589 = vunpack.c.l.b16 %v961
    %v1590 = vunpack.c.h.b16 %v961
    %v1591 = vunpack.c.l.b16 %v962
    %v1592 = vunpack.c.h.b16 %v962
    %v1593 = vunpack.c.l.b16 %v963
    %v1594 = vunpack.c.h.b16 %v963
    %v1595 = vunpack.c.l.b16 %v964
    %v1596 = vunpack.c.h.b16 %v964
    %v1597 = vunpack.c.l.b16 %v965
    %v1598 = vunpack.c.h.b16 %v965
    %v1599 = vunpack.c.l.b16 %v966
    %v1600 = vunpack.c.h.b16 %v966
    %v1601 = vunpack.c.l.b16 %v967
    %v1602 = vunpack.c.h.b16 %v967
    %v1603 = vunpack.c.l.b16 %v968
    %v1604 = vunpack.c.h.b16 %v968
    %v1605 = vunpack.c.l.b16 %v969
    %v1606 = vunpack.c.h.b16 %v969
    %v1607 = vunpack.c.l.b16 %v970
    %v1608 = vunpack.c.h.b16 %v970
    %v1609 = vunpack.c.l.b16 %v971
    %v1610 = vunpack.c.h.b16 %v971
    %v1611 = vunpack.c.l.b16 %v972
    %v1612 = vunpack.c.h.b16 %v972
    %v1613 = vunpack.c.l.b16 %v973
    %v1614 = vunpack.c.h.b16 %v973
    %v1615 = vunpack.c.l.b16 %v974
    %v1616 = vunpack.c.h.b16 %v974
    %v1617 = vunpack.c.l.b16 %v975
    %v1618 = vunpack.c.h.b16 %v975
    %v1619 = vunpack.c.l.b16 %v976
    %v1620 = vunpack.c.h.b16 %v976
    %v1621 = vunpack.c.l.b16 %v977
    %v1622 = vunpack.c.h.b16 %v977
    %v1623 = vunpack.c.l.b16 %v978
    %v1624 = vunpack.c.h.b16 %v978
    %v1625 = vunpack.c.l.b16 %v979
    %v1626 = vunpack.c.h.b16 %v979
    %v1627 = vunpack.c.l.b16 %v980
    %v1628 = vunpack.c.h.b16 %v980
    %v1629 = vunpack.c.l.b16 %v981
    %v1630 = vunpack.c.h.b16 %v981
    %v1631 = vunpack.c.l.b16 %v982
    %v1632 = vunpack.c.h.b16 %v982
    %v1633 = vunpack.c.l.b16 %v983
    %v1634 = vunpack.c.h.b16 %v983
    %v1635 = vunpack.c.l.b16 %v984
    %v1636 = vunpack.c.h.b16 %v984
    %v1637 = vunpack.c.l.b16 %v985
    %v1638 = vunpack.c.h.b16 %v985
    %v1639 = vunpack.c.l.b16 %v986
    %v1640 = vunpack.c.h.b16 %v986
    %v1641 = vunpack.c.l.b16 %v987
    %v1642 = vunpack.c.h.b16 %v987
    %v1643 = vunpack.c.l.b16 %v988
    %v1644 = vunpack.c.h.b16 %v988
    %v1645 = vunpack.c.l.b16 %v989
    %v1646 = vunpack.c.h.b16 %v989
    %v1647 = vunpack.c.l.b16 %v990
    %v1648 = vunpack.c.h.b16 %v990
    %v1649 = vunpack.c.l.b16 %v991
    %v1650 = vunpack.c.h.b16 %v991
    %v1651 = vunpack.c.l.b16 %v992
    %v1652 = vunpack.c.h.b16 %v992
    %v1653 = vunpack.c.l.b16 %v993
    %v1654 = vunpack.c.h.b16 %v993
    %v1655 = vunpack.c.l.b16 %v994
    %v1656 = vunpack.c.h.b16 %v994
    %v1657 = vunpack.c.l.b16 %v995
    %v1658 = vunpack.c.h.b16 %v995
    %v1659 = vunpack.c.l.b16 %v996
    %v1660 = vunpack.c.h.b16 %v996
    %v1661 = vunpack.c.l.b16 %v997
    %v1662 = vunpack.c.h.b16 %v997
    %v1663 = vunpack.c.l.b16 %v998
    %v1664 = vunpack.c.h.b16 %v998
    %v1665 = vunpack.c.l.b16 %v999
    %v1666 = vunpack.c.h.b16 %v999
    %v1667 = vunpack.c.l.b16 %v1000
    %v1668 = vunpack.c.h.b16 %v1000
    %v1669 = vunpack.c.l.b16 %v1001
    %v1670 = vunpack.c.h.b16 %v1001
    %v1671 = vunpack.c.l.b16 %v1002
    %v1672 = vunpack.c.h.b16 %v1002
    %v1673 = vunpack.c.l.b16 %v1003
    %v1674 = vunpack.c.h.b16 %v1003
    %v1675 = vunpack.c.l.b16 %v1004
    %v1676 = vunpack.c.h.b16 %v1004
    %v1677 = vunpack.c.l.b16 %v1005
    %v1678 = vunpack.c.h.b16 %v1005
    %v1679 = vunpack.c.l.b16 %v1006
    %v1680 = vunpack.c.h.b16 %v1006
    %v1681 = vunpack.c.l.b16 %v1007
    %v1682 = vunpack.c.h.b16 %v1007
    %v1683 = vunpack.c.l.b16 %v1008
    %v1684 = vunpack.c.h.b16 %v1008
    %v1685 = vunpack.c.l.b16 %v1009
    %v1686 = vunpack.c.h.b16 %v1009
    %v1687 = vunpack.c.l.b16 %v1010
    %v1688 = vunpack.c.h.b16 %v1010
    %v1689 = vunpack.c.l.b16 %v1011
    %v1690 = vunpack.c.h.b16 %v1011
    %v1691 = vunpack.c.l.b16 %v1012
    %v1692 = vunpack.c.h.b16 %v1012
    %v1693 = vunpack.c.l.b16 %v1013
    %v1694 = vunpack.c.h.b16 %v1013
    %v1695 = vunpack.c.l.b16 %v1014
    %v1696 = vunpack.c.h.b16 %v1014
    %v1697 = vunpack.c.l.b16 %v1015
    %v1698 = vunpack.c.h.b16 %v1015
    %v1699 = vunpack.c.l.b16 %v1016
    %v1700 = vunpack.c.h.b16 %v1016
    %v1701 = vunpack.c.l.b16 %v1017
    %v1702 = vunpack.c.h.b16 %v1017
    %v1703 = vunpack.c.l.b16 %v1018
    %v1704 = vunpack.c.h.b16 %v1018
    %v1705 = vunpack.c.l.b16 %v1019
    %v1706 = vunpack.c.h.b16 %v1019
    %v1707 = vunpack.c.l.b16 %v1020
    %v1708 = vunpack.c.h.b16 %v1020
    %v1709 = vunpack.c.l.b16 %v1021
    %v1710 = vunpack.c.h.b16 %v1021
    %v1711 = vunpack.c.l.b16 %v1022
    %v1712 = vunpack.c.h.b16 %v1022
    %v1713 = vunpack.c.l.b16 %v1023
    %v1714 = vunpack.c.h.b16 %v1023
    %v1715 = vunpack.c.l.b16 %v1024
    %v1716 = vunpack.c.h.b16 %v1024
    %v1717 = vunpack.c.l.b16 %v1025
    %v1718 = vunpack.c.h.b16 %v1025
    %v1719 = vunpack.c.l.b16 %v1026
    %v1720 = vunpack.c.h.b16 %v1026
    %v1721 = vunpack.c.l.b16 %v1027
    %v1722 = vunpack.c.h.b16 %v1027
    %v1723 = vunpack.c.l.b16 %v1028
    %v1724 = vunpack.c.h.b16 %v1028
    %v1725 = vunpack.c.l.b16 %v1029
    %v1726 = vunpack.c.h.b16 %v1029
    %v1727 = vunpack.c.l.b16 %v1030
    %v1728 = vunpack.c.h.b16 %v1030
    %v1729 = vunpack.c.l.b16 %v1031
    %v1730 = vunpack.c.h.b16 %v1031
    %v1731 = vunpack.c.l.b16 %v1032
    %v1732 = vunpack.c.h.b16 %v1032
    %v1733 = vunpack.c.l.b16 %v1033
    %v1734 = vunpack.c.h.b16 %v1033
    %v1735 = vunpack.c.l.b16 %v1034
    %v1736 = vunpack.c.h.b16 %v1034
    %v1737 = vunpack.c.l.b16 %v1035
    %v1738 = vunpack.c.h.b16 %v1035
    %v1739 = vunpack.c.l.b16 %v1036
    %v1740 = vunpack.c.h.b16 %v1036
    %v1741 = vunpack.c.l.b16 %v1037
    %v1742 = vunpack.c.h.b16 %v1037
    %v1743 = vunpack.c.l.b16 %v1038
    %v1744 = vunpack.c.h.b16 %v1038
    %v1745 = vunpack.c.l.b16 %v1039
    %v1746 = vunpack.c.h.b16 %v1039
    %v1747 = vunpack.c.l.b16 %v1040
    %v1748 = vunpack.c.h.b16 %v1040
    %v1749 = vunpack.c.l.b16 %v1041
    %v1750 = vunpack.c.h.b16 %v1041
    %v1751 = vunpack.c.l.b16 %v1042
    %v1752 = vunpack.c.h.b16 %v1042
    %v1753 = vunpack.c.l.b16 %v1043
    %v1754 = vunpack.c.h.b16 %v1043
    %v1755 = vunpack.c.l.b16 %v1044
    %v1756 = vunpack.c.h.b16 %v1044
    %v1757 = vunpack.c.l.b16 %v1045
    %v1758 = vunpack.c.h.b16 %v1045
    %v1759 = vunpack.c.l.b16 %v1046
    %v1760 = vunpack.c.h.b16 %v1046
    %v1761 = vunpack.c.l.b16 %v1047
    %v1762 = vunpack.c.h.b16 %v1047
    %v1763 = vunpack.c.l.b16 %v1048
    %v1764 = vunpack.c.h.b16 %v1048
    %v1765 = vunpack.c.l.b16 %v1049
    %v1766 = vunpack.c.h.b16 %v1049
    %v1767 = vunpack.c.l.b16 %v1050
    %v1768 = vunpack.c.h.b16 %v1050
    %v1769 = vunpack.c.l.b16 %v1051
    %v1770 = vunpack.c.h.b16 %v1051
    %v1771 = vunpack.c.l.b16 %v1052
    %v1772 = vunpack.c.h.b16 %v1052
    %v1773 = vunpack.c.l.b16 %v1053
    %v1774 = vunpack.c.h.b16 %v1053
    %v1775 = vunpack.c.l.b16 %v1054
    %v1776 = vunpack.c.h.b16 %v1054
    %v1777 = vunpack.c.l.b16 %v1055
    %v1778 = vunpack.c.h.b16 %v1055
    %v1779 = vunpack.c.l.b16 %v1056
    %v1780 = vunpack.c.h.b16 %v1056
    %v1781 = vunpack.c.l.b16 %v1057
    %v1782 = vunpack.c.h.b16 %v1057
    %v1783 = vunpack.c.l.b16 %v1058
    %v1784 = vunpack.c.h.b16 %v1058
    %v1785 = vunpack.c.l.b16 %v1059
    %v1786 = vunpack.c.h.b16 %v1059
    %v1787 = vunpack.c.l.b16 %v1060
    %v1788 = vunpack.c.h.b16 %v1060
    %v1789 = vunpack.c.l.b16 %v1061
    %v1790 = vunpack.c.h.b16 %v1061
    %v1791 = vunpack.c.l.b16 %v1062
    %v1792 = vunpack.c.h.b16 %v1062
    %v1793 = vunpack.c.l.b16 %v1063
    %v1794 = vunpack.c.h.b16 %v1063
    %v1795 = vunpack.c.l.b16 %v1064
    %v1796 = vunpack.c.h.b16 %v1064
    %v1797 = vunpack.c.l.b16 %v1065
    %v1798 = vunpack.c.h.b16 %v1065
    %v1799 = vunpack.c.l.b16 %v1066
    %v1800 = vunpack.c.h.b16 %v1066
    %v1801 = vunpack.c.l.b16 %v1067
    %v1802 = vunpack.c.h.b16 %v1067
    %v1803 = vunpack.c.l.b16 %v1068
    %v1804 = vunpack.c.h.b16 %v1068
    %v1805 = vunpack.c.l.b16 %v1069
    %v1806 = vunpack.c.h.b16 %v1069
    %v1807 = vunpack.c.l.b16 %v1070
    %v1808 = vunpack.c.h.b16 %v1070
    %v1809 = vunpack.c.l.b16 %v1071
    %v1810 = vunpack.c.h.b16 %v1071
    %v1811 = vunpack.c.l.b16 %v1072
    %v1812 = vunpack.c.h.b16 %v1072
    %v1813 = vunpack.c.l.b16 %v1073
    %v1814 = vunpack.c.h.b16 %v1073
    %v1815 = vunpack.c.l.b16 %v1074
    %v1816 = vunpack.c.h.b16 %v1074
    %v1817 = vunpack.c.l.b16 %v1075
    %v1818 = vunpack.c.h.b16 %v1075
    %v1819 = vunpack.c.l.b16 %v1076
    %v1820 = vunpack.c.h.b16 %v1076
    %v1821 = vunpack.c.l.b16 %v1077
    %v1822 = vunpack.c.h.b16 %v1077
    %v1823 = vunpack.c.l.b16 %v1078
    %v1824 = vunpack.c.h.b16 %v1078
    %v1825 = vunpack.c.l.b16 %v1079
    %v1826 = vunpack.c.h.b16 %v1079
    %v1827 = vunpack.c.l.b16 %v1080
    %v1828 = vunpack.c.h.b16 %v1080
    %v1829 = vunpack.c.l.b16 %v1081
    %v1830 = vunpack.c.h.b16 %v1081
    %v1831 = vunpack.c.l.b16 %v1082
    %v1832 = vunpack.c.h.b16 %v1082
    %v1833 = vunpack.c.l.b16 %v1083
    %v1834 = vunpack.c.h.b16 %v1083
    %v1835 = vunpack.c.l.b16 %v1084
    %v1836 = vunpack.c.h.b16 %v1084
    %v1837 = vunpack.c.l.b16 %v1085
    %v1838 = vunpack.c.h.b16 %v1085
    %v1839 = vunpack.c.l.b16 %v1086
    %v1840 = vunpack.c.h.b16 %v1086
    %v1841 = vunpack.c.l.b16 %v1087
    %v1842 = vunpack.c.h.b16 %v1087
    %v1843 = vunpack.c.l.b16 %v1088
    %v1844 = vunpack.c.h.b16 %v1088
    %v1845 = vunpack.c.l.b16 %v1089
    %v1846 = vunpack.c.h.b16 %v1089
    %v1847 = vunpack.c.l.b16 %v1090
    %v1848 = vunpack.c.h.b16 %v1090
    %v1849 = vunpack.c.l.b16 %v1091
    %v1850 = vunpack.c.h.b16 %v1091
    %v1851 = vunpack.c.l.b16 %v1092
    %v1852 = vunpack.c.h.b16 %v1092
    %v1853 = vunpack.c.l.b16 %v1093
    %v1854 = vunpack.c.h.b16 %v1093
    %v1855 = vunpack.c.l.b16 %v1094
    %v1856 = vunpack.c.h.b16 %v1094
    %v1857 = vunpack.c.l.b16 %v1095
    %v1858 = vunpack.c.h.b16 %v1095
    %v1859 = vunpack.c.l.b16 %v1096
    %v1860 = vunpack.c.h.b16 %v1096
    %v1861 = vunpack.c.l.b16 %v1097
    %v1862 = vunpack.c.h.b16 %v1097
    %v1863 = vunpack.c.l.b16 %v1098
    %v1864 = vunpack.c.h.b16 %v1098
    %v1865 = vunpack.c.l.b16 %v1099
    %v1866 = vunpack.c.h.b16 %v1099
    %v1867 = vunpack.c.l.b16 %v1100
    %v1868 = vunpack.c.h.b16 %v1100
    %v1869 = vunpack.c.l.b16 %v1101
    %v1870 = vunpack.c.h.b16 %v1101
    %v1871 = vunpack.c.l.b16 %v1102
    %v1872 = vunpack.c.h.b16 %v1102
    %v1873 = vunpack.c.l.b16 %v1103
    %v1874 = vunpack.c.h.b16 %v1103
    %v1875 = vunpack.c.l.b16 %v1104
    %v1876 = vunpack.c.h.b16 %v1104
    %v1877 = vunpack.c.l.b16 %v1105
    %v1878 = vunpack.c.h.b16 %v1105
    %v1879 = vunpack.c.l.b16 %v1106
    %v1880 = vunpack.c.h.b16 %v1106
    %v1881 = vunpack.c.l.b16 %v1107
    %v1882 = vunpack.c.h.b16 %v1107
    %v1883 = vunpack.c.l.b16 %v1108
    %v1884 = vunpack.c.h.b16 %v1108
    %v1885 = vunpack.c.l.b16 %v1109
    %v1886 = vunpack.c.h.b16 %v1109
    %v1887 = vunpack.c.l.b16 %v1110
    %v1888 = vunpack.c.h.b16 %v1110
    %v1889 = vunpack.c.l.b16 %v1111
    %v1890 = vunpack.c.h.b16 %v1111
    %v1891 = vunpack.c.l.b16 %v1112
    %v1892 = vunpack.c.h.b16 %v1112
    %v1893 = vunpack.c.l.b16 %v1113
    %v1894 = vunpack.c.h.b16 %v1113
    %v1895 = vunpack.c.l.b16 %v1114
    %v1896 = vunpack.c.h.b16 %v1114
    %v1897 = vunpack.c.l.b16 %v1115
    %v1898 = vunpack.c.h.b16 %v1115
    %v1899 = vunpack.c.l.b16 %v1116
    %v1900 = vunpack.c.h.b16 %v1116
    %v1901 = vunpack.c.l.b16 %v1117
    %v1902 = vunpack.c.h.b16 %v1117
    %v1903 = vunpack.c.l.b16 %v1118
    %v1904 = vunpack.c.h.b16 %v1118
    %v1905 = vunpack.c.l.b16 %v1119
    %v1906 = vunpack.c.h.b16 %v1119
    %v1907 = vunpack.c.l.b16 %v1120
    %v1908 = vunpack.c.h.b16 %v1120
    %v1909 = vunpack.c.l.b16 %v1121
    %v1910 = vunpack.c.h.b16 %v1121
    %v1911 = vunpack.c.l.b16 %v1122
    %v1912 = vunpack.c.h.b16 %v1122
    %v1913 = vunpack.c.l.b16 %v1123
    %v1914 = vunpack.c.h.b16 %v1123
    %v1915 = vunpack.c.l.b16 %v1124
    %v1916 = vunpack.c.h.b16 %v1124
    %v1917 = vunpack.c.l.b16 %v1125
    %v1918 = vunpack.c.h.b16 %v1125
    %v1919 = vunpack.c.l.b16 %v1126
    %v1920 = vunpack.c.h.b16 %v1126
    %v1921 = vunpack.c.l.b16 %v1127
    %v1922 = vunpack.c.h.b16 %v1127
    %v1923 = vunpack.c.l.b16 %v1128
    %v1924 = vunpack.c.h.b16 %v1128
    %v1925 = vunpack.c.l.b16 %v1129
    %v1926 = vunpack.c.h.b16 %v1129
    %v1927 = vpack.c.b16 %v1431, %v1423
    %v1928 = vpack.c.b16 %v1432, %v1424
    %v1929 = vpack.c.b16 %v1433, %v1425
    %v1930 = vpack.c.b16 %v1434, %v1426
    %v1931 = vpack.c.b16 %v1435, %v1427
    %v1932 = vpack.c.b16 %v1436, %v1428
    %v1933 = vpack.c.b16 %v1437, %v1429
    %v1934 = vpack.c.b16 %v1438, %v1430
    %v1935 = vpack.c.b16 %v1447, %v1439
    %v1936 = vpack.c.b16 %v1448, %v1440
    %v1937 = vpack.c.b16 %v1449, %v1441
    %v1938 = vpack.c.b16 %v1450, %v1442
    %v1939 = vpack.c.b16 %v1451, %v1443
    %v1940 = vpack.c.b16 %v1452, %v1444
    %v1941 = vpack.c.b16 %v1453, %v1445
    %v1942 = vpack.c.b16 %v1454, %v1446
    %v1943 = vpack.c.b16 %v1463, %v1455
    %v1944 = vpack.c.b16 %v1464, %v1456
    %v1945 = vpack.c.b16 %v1465, %v1457
    %v1946 = vpack.c.b16 %v1466, %v1458
    %v1947 = vpack.c.b16 %v1467, %v1459
    %v1948 = vpack.c.b16 %v1468, %v1460
    %v1949 = vpack.c.b16 %v1469, %v1461
    %v1950 = vpack.c.b16 %v1470, %v1462
    %v1951 = vpack.c.b16 %v1479, %v1471
    %v1952 = vpack.c.b16 %v1480, %v1472
    %v1953 = vpack.c.b16 %v1481, %v1473
    %v1954 = vpack.c.b16 %v1482, %v1474
    %v1955 = vpack.c.b16 %v1483, %v1475
    %v1956 = vpack.c.b16 %v1484, %v1476
    %v1957 = vpack.c.b16 %v1485, %v1477
    %v1958 = vpack.c.b16 %v1486, %v1478
    %v1959 = vpack.c.b16 %v1495, %v1487
    %v1960 = vpack.c.b16 %v1496, %v1488
    %v1961 = vpack.c.b16 %v1497, %v1489
    %v1962 = vpack.c.b16 %v1498, %v1490
    %v1963 = vpack.c.b16 %v1499, %v1491
    %v1964 = vpack.c.b16 %v1500, %v1492
    %v1965 = vpack.c.b16 %v1501, %v1493
    %v1966 = vpack.c.b16 %v1502, %v1494
    %v1967 = vpack.c.b16 %v1511, %v1503
    %v1968 = vpack.c.b16 %v1512, %v1504
    %v1969 = vpack.c.b16 %v1513, %v1505
    %v1970 = vpack.c.b16 %v1514, %v1506
    %v1971 = vpack.c.b16 %v1515, %v1507
    %v1972 = vpack.c.b16 %v1516, %v1508
    %v1973 = vpack.c.b16 %v1517, %v1509
    %v1974 = vpack.c.b16 %v1518, %v1510
    %v1975 = vpack.c.b16 %v1527, %v1519
    %v1976 = vpack.c.b16 %v1528, %v1520
    %v1977 = vpack.c.b16 %v1529, %v1521
    %v1978 = vpack.c.b16 %v1530, %v1522
    %v1979 = vpack.c.b16 %v1531, %v1523
    %v1980 = vpack.c.b16 %v1532, %v1524
    %v1981 = vpack.c.b16 %v1533, %v1525
    %v1982 = vpack.c.b16 %v1534, %v1526
    %v1983 = vpack.c.b16 %v1543, %v1535
    %v1984 = vpack.c.b16 %v1544, %v1536
    %v1985 = vpack.c.b16 %v1545, %v1537
    %v1986 = vpack.c.b16 %v1546, %v1538
    %v1987 = vpack.c.b16 %v1547, %v1539
    %v1988 = vpack.c.b16 %v1548, %v1540
    %v1989 = vpack.c.b16 %v1549, %v1541
    %v1990 = vpack.c.b16 %v1550, %v1542
    %v1991 = vpack.c.b16 %v1559, %v1551
    %v1992 = vpack.c.b16 %v1560, %v1552
    %v1993 = vpack.c.b16 %v1561, %v1553
    %v1994 = vpack.c.b16 %v1562, %v1554
    %v1995 = vpack.c.b16 %v1563, %v1555
    %v1996 = vpack.c.b16 %v1564, %v1556
    %v1997 = vpack.c.b16 %v1565, %v1557
    %v1998 = vpack.c.b16 %v1566, %v1558
    %v1999 = vpack.c.b16 %v1575, %v1567
    %v2000 = vpack.c.b16 %v1576, %v1568
    %v2001 = vpack.c.b16 %v1577, %v1569
    %v2002 = vpack.c.b16 %v1578, %v1570
    %v2003 = vpack.c.b16 %v1579, %v1571
    %v2004 = vpack.c.b16 %v1580, %v1572
    %v2005 = vpack.c.b16 %v1581, %v1573
    %v2006 = vpack.c.b16 %v1582, %v1574
    %v2007 = vpack.c.b16 %v1591, %v1583
    %v2008 = vpack.c.b16 %v1592, %v1584
    %v2009 = vpack.c.b16 %v1593, %v1585
    %v2010 = vpack.c.b16 %v1594, %v1586
    %v2011 = vpack.c.b16 %v1595, %v1587
    %v2012 = vpack.c.b16 %v1596, %v1588
    %v2013 = vpack.c.b16 %v1597, %v1589
    %v2014 = vpack.c.b16 %v1598, %v1590
    %v2015 = vpack.c.b16 %v1607, %v1599
    %v2016 = vpack.c.b16 %v1608, %v1600
    %v2017 = vpack.c.b16 %v1609, %v1601
    %v2018 = vpack.c.b16 %v1610, %v1602
    %v2019 = vpack.c.b16 %v1611, %v1603
    %v2020 = vpack.c.b16 %v1612, %v1604
    %v2021 = vpack.c.b16 %v1613, %v1605
    %v2022 = vpack.c.b16 %v1614, %v1606
    %v2023 = vpack.c.b16 %v1623, %v1615
    %v2024 = vpack.c.b16 %v1624, %v1616
    %v2025 = vpack.c.b16 %v1625, %v1617
    %v2026 = vpack.c.b16 %v1626, %v1618
    %v2027 = vpack.c.b16 %v1627, %v1619
    %v2028 = vpack.c.b16 %v1628, %v1620
    %v2029 = vpack.c.b16 %v1629, %v1621
    %v2030 = vpack.c.b16 %v1630, %v1622
    %v2031 = vpack.c.b16 %v1639, %v1631
    %v2032 = vpack.c.b16 %v1640, %v1632
    %v2033 = vpack.c.b16 %v1641, %v1633
    %v2034 = vpack.c.b16 %v1642, %v1634
    %v2035 = vpack.c.b16 %v1643, %v1635
    %v2036 = vpack.c.b16 %v1644, %v1636
    %v2037 = vpack.c.b16 %v1645, %v1637
    %v2038 = vpack.c.b16 %v1646, %v1638
    %v2039 = vpack.c.b16 %v1655, %v1647
    %v2040 = vpack.c.b16 %v1656, %v1648
    %v2041 = vpack.c.b16 %v1657, %v1649
    %v2042 = vpack.c.b16 %v1658, %v1650
    %v2043 = vpack.c.b16 %v1659, %v1651
    %v2044 = vpack.c.b16 %v1660, %v1652
    %v2045 = vpack.c.b16 %v1661, %v1653
    %v2046 = vpack.c.b16 %v1662, %v1654
    %v2047 = vpack.c.b16 %v1671, %v1663
    %v2048 = vpack.c.b16 %v1672, %v1664
    %v2049 = vpack.c.b16 %v1673, %v1665
    %v2050 = vpack.c.b16 %v1674, %v1666
    %v2051 = vpack.c.b16 %v1675, %v1667
    %v2052 = vpack.c.b16 %v1676, %v1668
    %v2053 = vpack.c.b16 %v1677, %v1669
    %v2054 = vpack.c.b16 %v1678, %v1670
    %v2055 = vpack.c.b16 %v1687, %v1679
    %v2056 = vpack.c.b16 %v1688, %v1680
    %v2057 = vpack.c.b16 %v1689, %v1681
    %v2058 = vpack.c.b16 %v1690, %v1682
    %v2059 = vpack.c.b16 %v1691, %v1683
    %v2060 = vpack.c.b16 %v1692, %v1684
    %v2061 = vpack.c.b16 %v1693, %v1685
    %v2062 = vpack.c.b16 %v1694, %v1686
    %v2063 = vpack.c.b16 %v1703, %v1695
    %v2064 = vpack.c.b16 %v1704, %v1696
    %v2065 = vpack.c.b16 %v1705, %v1697
    %v2066 = vpack.c.b16 %v1706, %v1698
    %v2067 = vpack.c.b16 %v1707, %v1699
    %v2068 = vpack.c.b16 %v1708, %v1700
    %v2069 = vpack.c.b16 %v1709, %v1701
    %v2070 = vpack.c.b16 %v1710, %v1702
    %v2071 = vpack.c.b16 %v1719, %v1711
    %v2072 = vpack.c.b16 %v1720, %v1712
    %v2073 = vpack.c.b16 %v1721, %v1713
    %v2074 = vpack.c.b16 %v1722, %v1714
    %v2075 = vpack.c.b16 %v1723, %v1715
    %v2076 = vpack.c.b16 %v1724, %v1716
    %v2077 = vpack.c.b16 %v1725, %v1717
    %v2078 = vpack.c.b16 %v1726, %v1718
    %v2079 = vpack.c.b16 %v1735, %v1727
    %v2080 = vpack.c.b16 %v1736, %v1728
    %v2081 = vpack.c.b16 %v1737, %v1729
    %v2082 = vpack.c.b16 %v1738, %v1730
    %v2083 = vpack.c.b16 %v1739, %v1731
    %v2084 = vpack.c.b16 %v1740, %v1732
    %v2085 = vpack.c.b16 %v1741, %v1733
    %v2086 = vpack.c.b16 %v1742, %v1734
    %v2087 = vpack.c.b16 %v1751, %v1743
    %v2088 = vpack.c.b16 %v1752, %v1744
    %v2089 = vpack.c.b16 %v1753, %v1745
    %v2090 = vpack.c.b16 %v1754, %v1746
    %v2091 = vpack.c.b16 %v1755, %v1747
    %v2092 = vpack.c.b16 %v1756, %v1748
    %v2093 = vpack.c.b16 %v1757, %v1749
    %v2094 = vpack.c.b16 %v1758, %v1750
    %v2095 = vpack.c.b16 %v1767, %v1759
    %v2096 = vpack.c.b16 %v1768, %v1760
    %v2097 = vpack.c.b16 %v1769, %v1761
    %v2098 = vpack.c.b16 %v1770, %v1762
    %v2099 = vpack.c.b16 %v1771, %v1763
    %v2100 = vpack.c.b16 %v1772, %v1764
    %v2101 = vpack.c.b16 %v1773, %v1765
    %v2102 = vpack.c.b16 %v1774, %v1766
    %v2103 = vpack.c.b16 %v1783, %v1775
    %v2104 = vpack.c.b16 %v1784, %v1776
    %v2105 = vpack.c.b16 %v1785, %v1777
    %v2106 = vpack.c.b16 %v1786, %v1778
    %v2107 = vpack.c.b16 %v1787, %v1779
    %v2108 = vpack.c.b16 %v1788, %v1780
    %v2109 = vpack.c.b16 %v1789, %v1781
    %v2110 = vpack.c.b16 %v1790, %v1782
    %v2111 = vpack.c.b16 %v1799, %v1791
    %v2112 = vpack.c.b16 %v1800, %v1792
    %v2113 = vpack.c.b16 %v1801, %v1793
    %v2114 = vpack.c.b16 %v1802, %v1794
    %v2115 = vpack.c.b16 %v1803, %v1795
    %v2116 = vpack.c.b16 %v1804, %v1796
    %v2117 = vpack.c.b16 %v1805, %v1797
    %v2118 = vpack.c.b16 %v1806, %v1798
    %v2119 = vpack.c.b16 %v1815, %v1807
    %v2120 = vpack.c.b16 %v1816, %v1808
    %v2121 = vpack.c.b16 %v1817, %v1809
    %v2122 = vpack.c.b16 %v1818, %v1810
    %v2123 = vpack.c.b16 %v1819, %v1811
    %v2124 = vpack.c.b16 %v1820, %v1812
    %v2125 = vpack.c.b16 %v1821, %v1813
    %v2126 = vpack.c.b16 %v1822, %v1814
    %v2127 = vpack.c.b16 %v1831, %v1823
    %v2128 = vpack.c.b16 %v1832, %v1824
    %v2129 = vpack.c.b16 %v1833, %v1825
    %v2130 = vpack.c.b16 %v1834, %v1826
    %v2131 = vpack.c.b16 %v1835, %v1827
    %v2132 = vpack.c.b16 %v1836, %v1828
    %v2133 = vpack.c.b16 %v1837, %v1829
    %v2134 = vpack.c.b16 %v1838, %v1830
    %v2135 = vpack.c.b16 %v1847, %v1839
    %v2136 = vpack.c.b16 %v1848, %v1840
    %v2137 = vpack.c.b16 %v1849, %v1841
    %v2138 = vpack.c.b16 %v1850, %v1842
    %v2139 = vpack.c.b16 %v1851, %v1843
    %v2140 = vpack.c.b16 %v1852, %v1844
    %v2141 = vpack.c.b16 %v1853, %v1845
    %v2142 = vpack.c.b16 %v1854, %v1846
    %v2143 = vpack.c.b16 %v1863, %v1855
    %v2144 = vpack.c.b16 %v1864, %v1856
    %v2145 = vpack.c.b16 %v1865, %v1857
    %v2146 = vpack.c.b16 %v1866, %v1858
    %v2147 = vpack.c.b16 %v1867, %v1859
    %v2148 = vpack.c.b16 %v1868, %v1860
    %v2149 = vpack.c.b16 %v1869, %v1861
    %v2150 = vpack.c.b16 %v1870, %v1862
    %v2151 = vpack.c.b16 %v1879, %v1871
    %v2152 = vpack.c.b16 %v1880, %v1872
    %v2153 = vpack.c.b16 %v1881, %v1873
    %v2154 = vpack.c.b16 %v1882, %v1874
    %v2155 = vpack.c.b16 %v1883, %v1875
    %v2156 = vpack.c.b16 %v1884, %v1876
    %v2157 = vpack.c.b16 %v1885, %v1877
    %v2158 = vpack.c.b16 %v1886, %v1878
    %v2159 = vpack.c.b16 %v1895, %v1887
    %v2160 = vpack.c.b16 %v1896, %v1888
    %v2161 = vpack.c.b16 %v1897, %v1889
    %v2162 = vpack.c.b16 %v1898, %v1890
    %v2163 = vpack.c.b16 %v1899, %v1891
    %v2164 = vpack.c.b16 %v1900, %v1892
    %v2165 = vpack.c.b16 %v1901, %v1893
    %v2166 = vpack.c.b16 %v1902, %v1894
    %v2167 = vpack.c.b16 %v1911, %v1903
    %v2168 = vpack.c.b16 %v1912, %v1904
    %v2169 = vpack.c.b16 %v1913, %v1905
    %v2170 = vpack.c.b16 %v1914, %v1906
    %v2171 = vpack.c.b16 %v1915, %v1907
    %v2172 = vpack.c.b16 %v1916, %v1908
    %v2173 = vpack.c.b16 %v1917, %v1909
    %v2174 = vpack.c.b16 %v1918, %v1910
    %v2175 = vpack.c.b16 %v1919, %v1919
    %v2176 = vpack.c.b16 %v1920, %v1920
    %v2177 = vpack.c.b16 %v1921, %v1921
    %v2178 = vpack.c.b16 %v1922, %v1922
    %v2179 = vpack.c.b16 %v1923, %v1923
    %v2180 = vpack.c.b16 %v1924, %v1924
    %v2181 = vpack.c.b16 %v1925, %v1925
    %v2182 = vpack.c.b16 %v1926, %v1926
    %vm2431 = vcmask 949248
    %v2433 = vsel %vm2431, %v873, 0
    %vm2435 = vcmask 1041408
    %v2437 = vsel %vm2435, %v2175, 0
    %v2440 = vsel %vm2435, %v2176, 0
    %v2443 = vsel %vm2435, %v2177, 0
    %v2446 = vsel %vm2435, %v2178, 0
    %v2449 = vsel %vm2435, %v2179, 0
    %v2452 = vsel %vm2435, %v2180, 0
    %v2455 = vsel %vm2435, %v2181, 0
    %v2458 = vsel %vm2435, %v2182, 0
    %2460 = vmatprep.subr.bf16.mxu0 %v1928
    %2461 = vmatpush1.bf16.msra.mxu0 %v1927
    %2462 = vmatprep.subr.bf16.mxu0 %v1936
    %2463 = vmatpush1.bf16.msra.mxu0 %v1935
    %2464 = vmatprep.subr.bf16.mxu0 %v1944
    %2465 = vmatpush1.bf16.msra.mxu0 %v1943
    %2466 = vmatprep.subr.bf16.mxu0 %v1952
    %2467 = vmatpush1.bf16.msra.mxu0 %v1951
    %2468 = vmatprep.subr.bf16.mxu0 %v1960
    %2469 = vmatpush1.bf16.msra.mxu0 %v1959
    %2470 = vmatprep.subr.bf16.mxu0 %v1968
    %2471 = vmatpush1.bf16.msra.mxu0 %v1967
    %2472 = vmatprep.subr.bf16.mxu0 %v1976
    %2473 = vmatpush1.bf16.msra.mxu0 %v1975
    %2474 = vmatprep.subr.bf16.mxu0 %v1984
    %2475 = vmatpush1.bf16.msra.mxu0 %v1983
    %2476 = vmatprep.subr.bf16.mxu0 %v1992
    %2477 = vmatpush1.bf16.msra.mxu0 %v1991
    %2478 = vmatprep.subr.bf16.mxu0 %v2000
    %2479 = vmatpush1.bf16.msra.mxu0 %v1999
    %2480 = vmatprep.subr.bf16.mxu0 %v2008
    %2481 = vmatpush1.bf16.msra.mxu0 %v2007
    %2482 = vmatprep.subr.bf16.mxu0 %v2016
    %2483 = vmatpush1.bf16.msra.mxu0 %v2015
    %2484 = vmatprep.subr.bf16.mxu0 %v2024
    %2485 = vmatpush1.bf16.msra.mxu0 %v2023
    %2486 = vmatprep.subr.bf16.mxu0 %v2032
    %2487 = vmatpush1.bf16.msra.mxu0 %v2031
    %2488 = vmatprep.subr.bf16.mxu0 %v2040
    %2489 = vmatpush1.bf16.msra.mxu0 %v2039
    %2490 = vmatprep.subr.bf16.mxu0 %v2048
    %2491 = vmatpush1.bf16.msra.mxu0 %v2047
    %2492 = vmatprep.mubr.bf16.mxu0 %v871
    %2493 = vmatmul.mubr.bf16.gmra.mrb[0].mxu0 %v870
    %v2494 = vpop.f32.mrb[0].mxu0
    %v2495 = vadd.f32 %v1134, %v2494
    %v2496 = vpop.f32.mrb[0].mxu0
    %v2497 = vadd.f32 %v1138, %v2496
    %v2498 = vpop.f32.mrb[0].mxu0
    %v2499 = vpop.f32.mrb[0].mxu0
    %2500 = vdwg.mxu0
    %2501 = vmatprep.subr.bf16.mxu0 %v2056
    %2502 = vmatpush1.bf16.msra.mxu0 %v2055
    %2503 = vmatprep.subr.bf16.mxu0 %v2064
    %2504 = vmatpush1.bf16.msra.mxu0 %v2063
    %2505 = vmatprep.subr.bf16.mxu0 %v2072
    %2506 = vmatpush1.bf16.msra.mxu0 %v2071
    %2507 = vmatprep.subr.bf16.mxu0 %v2080
    %2508 = vmatpush1.bf16.msra.mxu0 %v2079
    %2509 = vmatprep.subr.bf16.mxu0 %v2088
    %2510 = vmatpush1.bf16.msra.mxu0 %v2087
    %2511 = vmatprep.subr.bf16.mxu0 %v2096
    %2512 = vmatpush1.bf16.msra.mxu0 %v2095
    %2513 = vmatprep.subr.bf16.mxu0 %v2104
    %2514 = vmatpush1.bf16.msra.mxu0 %v2103
    %2515 = vmatprep.subr.bf16.mxu0 %v2112
    %2516 = vmatpush1.bf16.msra.mxu0 %v2111
    %2517 = vmatprep.subr.bf16.mxu0 %v2120
    %2518 = vmatpush1.bf16.msra.mxu0 %v2119
    %2519 = vmatprep.subr.bf16.mxu0 %v2128
    %2520 = vmatpush1.bf16.msra.mxu0 %v2127
    %2521 = vmatprep.subr.bf16.mxu0 %v2136
    %2522 = vmatpush1.bf16.msra.mxu0 %v2135
    %2523 = vmatprep.subr.bf16.mxu0 %v2144
    %2524 = vmatpush1.bf16.msra.mxu0 %v2143
    %2525 = vmatprep.subr.bf16.mxu0 %v2152
    %2526 = vmatpush1.bf16.msra.mxu0 %v2151
    %2527 = vmatprep.subr.bf16.mxu0 %v2160
    %2528 = vmatpush1.bf16.msra.mxu0 %v2159
    %2529 = vmatprep.subr.bf16.mxu0 %v2168
    %2530 = vmatpush1.bf16.msra.mxu0 %v2167
    %2531 = vmatprep.subr.bf16.mxu0 %v2440
    %2532 = vmatpush1.bf16.msra.mxu0 %v2437
    %2533 = vmatprep.mubr.bf16.mxu0 %v2433
    %2534 = vmatmul.mubr.bf16.gmra.mrb[0].mxu0 %v872
    %v2535 = vpop.f32.mrb[0].mxu0
    %v2536 = vadd.f32 %v2495, %v2535
    %v2537 = vpop.f32.mrb[0].mxu0
    %v2538 = vadd.f32 %v2497, %v2537
    %v2539 = vpop.f32.mrb[0].mxu0
    %v2540 = vpop.f32.mrb[0].mxu0
    %2541 = vdwg.mxu0
    %2542 = vmatprep.subr.bf16.mxu0 %v1930
    %2543 = vmatpush1.bf16.msra.mxu0 %v1929
    %2544 = vmatprep.subr.bf16.mxu0 %v1938
    %2545 = vmatpush1.bf16.msra.mxu0 %v1937
    %2546 = vmatprep.subr.bf16.mxu0 %v1946
    %2547 = vmatpush1.bf16.msra.mxu0 %v1945
    %2548 = vmatprep.subr.bf16.mxu0 %v1954
    %2549 = vmatpush1.bf16.msra.mxu0 %v1953
    %2550 = vmatprep.subr.bf16.mxu0 %v1962
    %2551 = vmatpush1.bf16.msra.mxu0 %v1961
    %2552 = vmatprep.subr.bf16.mxu0 %v1970
    %2553 = vmatpush1.bf16.msra.mxu0 %v1969
    %2554 = vmatprep.subr.bf16.mxu0 %v1978
    %2555 = vmatpush1.bf16.msra.mxu0 %v1977
    %2556 = vmatprep.subr.bf16.mxu0 %v1986
    %2557 = vmatpush1.bf16.msra.mxu0 %v1985
    %2558 = vmatprep.subr.bf16.mxu0 %v1994
    %2559 = vmatpush1.bf16.msra.mxu0 %v1993
    %2560 = vmatprep.subr.bf16.mxu0 %v2002
    %2561 = vmatpush1.bf16.msra.mxu0 %v2001
    %2562 = vmatprep.subr.bf16.mxu0 %v2010
    %2563 = vmatpush1.bf16.msra.mxu0 %v2009
    %2564 = vmatprep.subr.bf16.mxu0 %v2018
    %2565 = vmatpush1.bf16.msra.mxu0 %v2017
    %2566 = vmatprep.subr.bf16.mxu0 %v2026
    %2567 = vmatpush1.bf16.msra.mxu0 %v2025
    %2568 = vmatprep.subr.bf16.mxu0 %v2034
    %2569 = vmatpush1.bf16.msra.mxu0 %v2033
    %2570 = vmatprep.subr.bf16.mxu0 %v2042
    %2571 = vmatpush1.bf16.msra.mxu0 %v2041
    %2572 = vmatprep.subr.bf16.mxu0 %v2050
    %2573 = vmatpush1.bf16.msra.mxu0 %v2049
    %2574 = vmatprep.mubr.bf16.mxu0 %v871
    %2575 = vmatmul.mubr.bf16.gmra.mrb[0].mxu0 %v870
    %v2576 = vpop.f32.mrb[0].mxu0
    %v2577 = vadd.f32 %v1142, %v2576
    %v2578 = vpop.f32.mrb[0].mxu0
    %v2579 = vadd.f32 %v1146, %v2578
    %v2580 = vpop.f32.mrb[0].mxu0
    %v2581 = vpop.f32.mrb[0].mxu0
    %2582 = vdwg.mxu0
    %2583 = vmatprep.subr.bf16.mxu0 %v2058
    %2584 = vmatpush1.bf16.msra.mxu0 %v2057
    %2585 = vmatprep.subr.bf16.mxu0 %v2066
    %2586 = vmatpush1.bf16.msra.mxu0 %v2065
    %2587 = vmatprep.subr.bf16.mxu0 %v2074
    %2588 = vmatpush1.bf16.msra.mxu0 %v2073
    %2589 = vmatprep.subr.bf16.mxu0 %v2082
    %2590 = vmatpush1.bf16.msra.mxu0 %v2081
    %2591 = vmatprep.subr.bf16.mxu0 %v2090
    %2592 = vmatpush1.bf16.msra.mxu0 %v2089
    %2593 = vmatprep.subr.bf16.mxu0 %v2098
    %2594 = vmatpush1.bf16.msra.mxu0 %v2097
    %2595 = vmatprep.subr.bf16.mxu0 %v2106
    %2596 = vmatpush1.bf16.msra.mxu0 %v2105
    %2597 = vmatprep.subr.bf16.mxu0 %v2114
    %2598 = vmatpush1.bf16.msra.mxu0 %v2113
    %2599 = vmatprep.subr.bf16.mxu0 %v2122
    %2600 = vmatpush1.bf16.msra.mxu0 %v2121
    %2601 = vmatprep.subr.bf16.mxu0 %v2130
    %2602 = vmatpush1.bf16.msra.mxu0 %v2129
    %2603 = vmatprep.subr.bf16.mxu0 %v2138
    %2604 = vmatpush1.bf16.msra.mxu0 %v2137
    %2605 = vmatprep.subr.bf16.mxu0 %v2146
    %2606 = vmatpush1.bf16.msra.mxu0 %v2145
    %2607 = vmatprep.subr.bf16.mxu0 %v2154
    %2608 = vmatpush1.bf16.msra.mxu0 %v2153
    %2609 = vmatprep.subr.bf16.mxu0 %v2162
    %2610 = vmatpush1.bf16.msra.mxu0 %v2161
    %2611 = vmatprep.subr.bf16.mxu0 %v2170
    %2612 = vmatpush1.bf16.msra.mxu0 %v2169
    %2613 = vmatprep.subr.bf16.mxu0 %v2446
    %2614 = vmatpush1.bf16.msra.mxu0 %v2443
    %2615 = vmatprep.mubr.bf16.mxu0 %v2433
    %2616 = vmatmul.mubr.bf16.gmra.mrb[0].mxu0 %v872
    %v2617 = vpop.f32.mrb[0].mxu0
    %v2618 = vadd.f32 %v2577, %v2617
    %v2619 = vpop.f32.mrb[0].mxu0
    %v2620 = vadd.f32 %v2579, %v2619
    %v2621 = vpop.f32.mrb[0].mxu0
    %v2622 = vpop.f32.mrb[0].mxu0
    %2623 = vdwg.mxu0
    %2624 = vmatprep.subr.bf16.mxu0 %v1932
    %2625 = vmatpush1.bf16.msra.mxu0 %v1931
    %2626 = vmatprep.subr.bf16.mxu0 %v1940
    %2627 = vmatpush1.bf16.msra.mxu0 %v1939
    %2628 = vmatprep.subr.bf16.mxu0 %v1948
    %2629 = vmatpush1.bf16.msra.mxu0 %v1947
    %2630 = vmatprep.subr.bf16.mxu0 %v1956
    %2631 = vmatpush1.bf16.msra.mxu0 %v1955
    %2632 = vmatprep.subr.bf16.mxu0 %v1964
    %2633 = vmatpush1.bf16.msra.mxu0 %v1963
    %2634 = vmatprep.subr.bf16.mxu0 %v1972
    %2635 = vmatpush1.bf16.msra.mxu0 %v1971
    %2636 = vmatprep.subr.bf16.mxu0 %v1980
    %2637 = vmatpush1.bf16.msra.mxu0 %v1979
    %2638 = vmatprep.subr.bf16.mxu0 %v1988
    %2639 = vmatpush1.bf16.msra.mxu0 %v1987
    %2640 = vmatprep.subr.bf16.mxu0 %v1996
    %2641 = vmatpush1.bf16.msra.mxu0 %v1995
    %2642 = vmatprep.subr.bf16.mxu0 %v2004
    %2643 = vmatpush1.bf16.msra.mxu0 %v2003
    %2644 = vmatprep.subr.bf16.mxu0 %v2012
    %2645 = vmatpush1.bf16.msra.mxu0 %v2011
    %2646 = vmatprep.subr.bf16.mxu0 %v2020
    %2647 = vmatpush1.bf16.msra.mxu0 %v2019
    %2648 = vmatprep.subr.bf16.mxu0 %v2028
    %2649 = vmatpush1.bf16.msra.mxu0 %v2027
    %2650 = vmatprep.subr.bf16.mxu0 %v2036
    %2651 = vmatpush1.bf16.msra.mxu0 %v2035
    %2652 = vmatprep.subr.bf16.mxu0 %v2044
    %2653 = vmatpush1.bf16.msra.mxu0 %v2043
    %2654 = vmatprep.subr.bf16.mxu0 %v2052
    %2655 = vmatpush1.bf16.msra.mxu0 %v2051
    %2656 = vmatprep.mubr.bf16.mxu0 %v871
    %2657 = vmatmul.mubr.bf16.gmra.mrb[0].mxu0 %v870
    %v2658 = vpop.f32.mrb[0].mxu0
    %v2659 = vadd.f32 %v1150, %v2658
    %v2660 = vpop.f32.mrb[0].mxu0
    %v2661 = vadd.f32 %v1154, %v2660
    %v2662 = vpop.f32.mrb[0].mxu0
    %v2663 = vpop.f32.mrb[0].mxu0
    %2664 = vdwg.mxu0
    %2665 = vmatprep.subr.bf16.mxu0 %v2060
    %2666 = vmatpush1.bf16.msra.mxu0 %v2059
    %2667 = vmatprep.subr.bf16.mxu0 %v2068
    %2668 = vmatpush1.bf16.msra.mxu0 %v2067
    %2669 = vmatprep.subr.bf16.mxu0 %v2076
    %2670 = vmatpush1.bf16.msra.mxu0 %v2075
    %2671 = vmatprep.subr.bf16.mxu0 %v2084
    %2672 = vmatpush1.bf16.msra.mxu0 %v2083
    %2673 = vmatprep.subr.bf16.mxu0 %v2092
    %2674 = vmatpush1.bf16.msra.mxu0 %v2091
    %2675 = vmatprep.subr.bf16.mxu0 %v2100
    %2676 = vmatpush1.bf16.msra.mxu0 %v2099
    %2677 = vmatprep.subr.bf16.mxu0 %v2108
    %2678 = vmatpush1.bf16.msra.mxu0 %v2107
    %2679 = vmatprep.subr.bf16.mxu0 %v2116
    %2680 = vmatpush1.bf16.msra.mxu0 %v2115
    %2681 = vmatprep.subr.bf16.mxu0 %v2124
    %2682 = vmatpush1.bf16.msra.mxu0 %v2123
    %2683 = vmatprep.subr.bf16.mxu0 %v2132
    %2684 = vmatpush1.bf16.msra.mxu0 %v2131
    %2685 = vmatprep.subr.bf16.mxu0 %v2140
    %2686 = vmatpush1.bf16.msra.mxu0 %v2139
    %2687 = vmatprep.subr.bf16.mxu0 %v2148
    %2688 = vmatpush1.bf16.msra.mxu0 %v2147
    %2689 = vmatprep.subr.bf16.mxu0 %v2156
    %2690 = vmatpush1.bf16.msra.mxu0 %v2155
    %2691 = vmatprep.subr.bf16.mxu0 %v2164
    %2692 = vmatpush1.bf16.msra.mxu0 %v2163
    %2693 = vmatprep.subr.bf16.mxu0 %v2172
    %2694 = vmatpush1.bf16.msra.mxu0 %v2171
    %2695 = vmatprep.subr.bf16.mxu0 %v2452
    %2696 = vmatpush1.bf16.msra.mxu0 %v2449
    %2697 = vmatprep.mubr.bf16.mxu0 %v2433
    %2698 = vmatmul.mubr.bf16.gmra.mrb[0].mxu0 %v872
    %v2699 = vpop.f32.mrb[0].mxu0
    %v2700 = vadd.f32 %v2659, %v2699
    %v2701 = vpop.f32.mrb[0].mxu0
    %v2702 = vadd.f32 %v2661, %v2701
    %v2703 = vpop.f32.mrb[0].mxu0
    %v2704 = vpop.f32.mrb[0].mxu0
    %2705 = vdwg.mxu0
    %2706 = vmatprep.subr.bf16.mxu0 %v1934
    %2707 = vmatpush1.bf16.msra.mxu0 %v1933
    %2708 = vmatprep.subr.bf16.mxu0 %v1942
    %2709 = vmatpush1.bf16.msra.mxu0 %v1941
    %2710 = vmatprep.subr.bf16.mxu0 %v1950
    %2711 = vmatpush1.bf16.msra.mxu0 %v1949
    %2712 = vmatprep.subr.bf16.mxu0 %v1958
    %2713 = vmatpush1.bf16.msra.mxu0 %v1957
    %2714 = vmatprep.subr.bf16.mxu0 %v1966
    %2715 = vmatpush1.bf16.msra.mxu0 %v1965
    %2716 = vmatprep.subr.bf16.mxu0 %v1974
    %2717 = vmatpush1.bf16.msra.mxu0 %v1973
    %2718 = vmatprep.subr.bf16.mxu0 %v1982
    %2719 = vmatpush1.bf16.msra.mxu0 %v1981
    %2720 = vmatprep.subr.bf16.mxu0 %v1990
    %2721 = vmatpush1.bf16.msra.mxu0 %v1989
    %2722 = vmatprep.subr.bf16.mxu0 %v1998
    %2723 = vmatpush1.bf16.msra.mxu0 %v1997
    %2724 = vmatprep.subr.bf16.mxu0 %v2006
    %2725 = vmatpush1.bf16.msra.mxu0 %v2005
    %2726 = vmatprep.subr.bf16.mxu0 %v2014
    %2727 = vmatpush1.bf16.msra.mxu0 %v2013
    %2728 = vmatprep.subr.bf16.mxu0 %v2022
    %2729 = vmatpush1.bf16.msra.mxu0 %v2021
    %2730 = vmatprep.subr.bf16.mxu0 %v2030
    %2731 = vmatpush1.bf16.msra.mxu0 %v2029
    %2732 = vmatprep.subr.bf16.mxu0 %v2038
    %2733 = vmatpush1.bf16.msra.mxu0 %v2037
    %2734 = vmatprep.subr.bf16.mxu0 %v2046
    %2735 = vmatpush1.bf16.msra.mxu0 %v2045
    %2736 = vmatprep.subr.bf16.mxu0 %v2054
    %2737 = vmatpush1.bf16.msra.mxu0 %v2053
    %2738 = vmatprep.mubr.bf16.mxu0 %v871
    %2739 = vmatmul.mubr.bf16.gmra.mrb[0].mxu0 %v870
    %v2740 = vpop.f32.mrb[0].mxu0
    %v2741 = vadd.f32 %v1158, %v2740
    %v2742 = vpop.f32.mrb[0].mxu0
    %v2743 = vadd.f32 %v1162, %v2742
    %v2744 = vpop.f32.mrb[0].mxu0
    %v2745 = vpop.f32.mrb[0].mxu0
    %2746 = vdwg.mxu0
    %2747 = vmatprep.subr.bf16.mxu0 %v2062
    %2748 = vmatpush1.bf16.msra.mxu0 %v2061
    %2749 = vmatprep.subr.bf16.mxu0 %v2070
    %2750 = vmatpush1.bf16.msra.mxu0 %v2069
    %2751 = vmatprep.subr.bf16.mxu0 %v2078
    %2752 = vmatpush1.bf16.msra.mxu0 %v2077
    %2753 = vmatprep.subr.bf16.mxu0 %v2086
    %2754 = vmatpush1.bf16.msra.mxu0 %v2085
    %2755 = vmatprep.subr.bf16.mxu0 %v2094
    %2756 = vmatpush1.bf16.msra.mxu0 %v2093
    %2757 = vmatprep.subr.bf16.mxu0 %v2102
    %2758 = vmatpush1.bf16.msra.mxu0 %v2101
    %2759 = vmatprep.subr.bf16.mxu0 %v2110
    %2760 = vmatpush1.bf16.msra.mxu0 %v2109
    %2761 = vmatprep.subr.bf16.mxu0 %v2118
    %2762 = vmatpush1.bf16.msra.mxu0 %v2117
    %2763 = vmatprep.subr.bf16.mxu0 %v2126
    %2764 = vmatpush1.bf16.msra.mxu0 %v2125
    %2765 = vmatprep.subr.bf16.mxu0 %v2134
    %2766 = vmatpush1.bf16.msra.mxu0 %v2133
    %2767 = vmatprep.subr.bf16.mxu0 %v2142
    %2768 = vmatpush1.bf16.msra.mxu0 %v2141
    %2769 = vmatprep.subr.bf16.mxu0 %v2150
    %2770 = vmatpush1.bf16.msra.mxu0 %v2149
    %2771 = vmatprep.subr.bf16.mxu0 %v2158
    %2772 = vmatpush1.bf16.msra.mxu0 %v2157
    %2773 = vmatprep.subr.bf16.mxu0 %v2166
    %2774 = vmatpush1.bf16.msra.mxu0 %v2165
    %2775 = vmatprep.subr.bf16.mxu0 %v2174
    %2776 = vmatpush1.bf16.msra.mxu0 %v2173
    %2777 = vmatprep.subr.bf16.mxu0 %v2458
    %2778 = vmatpush1.bf16.msra.mxu0 %v2455
    %2779 = vmatprep.mubr.bf16.mxu0 %v2433
    %2780 = vmatmul.mubr.bf16.gmra.mrb[0].mxu0 %v872
    %v2781 = vpop.f32.mrb[0].mxu0
    %v2782 = vadd.f32 %v2741, %v2781
    %v2783 = vpop.f32.mrb[0].mxu0
    %v2784 = vadd.f32 %v2743, %v2783
    %v2785 = vpop.f32.mrb[0].mxu0
    %v2786 = vpop.f32.mrb[0].mxu0
    %2787 = vdwg.mxu0
    %v2788 = vmax.f32 %v2536, 0.0
    %v2789 = vmax.f32 %v2538, 0.0
    %v2790 = vmax.f32 %v2618, 0.0
    %v2791 = vmax.f32 %v2620, 0.0
    %v2792 = vmax.f32 %v2700, 0.0
    %v2793 = vmax.f32 %v2702, 0.0
    %v2794 = vmax.f32 %v2782, 0.0
    %v2795 = vmax.f32 %v2784, 0.0
    %v2796 = vpack.c.bf16 %v2788, %v2788
    %v2797 = vpack.c.bf16 %v2789, %v2789
    %v2798 = vpack.c.bf16 %v2790, %v2790
    %v2799 = vpack.c.bf16 %v2791, %v2791
    %v2800 = vpack.c.bf16 %v2792, %v2792
    %v2801 = vpack.c.bf16 %v2793, %v2793
    %v2802 = vpack.c.bf16 %v2794, %v2794
    %v2803 = vpack.c.bf16 %v2795, %v2795
    %s2804 = scalar_lea.vmem %s8, 3
    %v2805 = vld [vmem:[%s2804] ss:$8 sm:$0xf]
    %v2806 = vld [vmem:[%s2804] ss:$8 sm:$0x10]
    %v2807 = vor.u32 %v2805, %v2806
    %v2808 = vld [vmem:[%s4] sm:$0xff]
    %v2809 = vld [vmem:[%s4 + $0x8] sm:$0xff]
    %v2810 = vld [vmem:[%s4 + $0x10] sm:$0xf]
    %v2811 = vld [vmem:[%s4 + $0x14] sm:$0xff]
    %v2812 = vld [vmem:[%s4 + $0x1c] sm:$0xff]
    %v2813 = vld [vmem:[%s4 + $0x24] sm:$0xf]
    %v2814 = vld [vmem:[%s4 + $0x28] sm:$0xff]
    %v2815 = vld [vmem:[%s4 + $0x30] sm:$0xff]
    %v2816 = vld [vmem:[%s4 + $0x38] sm:$0xf]
    %v2817 = vld [vmem:[%s4 + $0x3c] sm:$0xff]
    %v2818 = vld [vmem:[%s4 + $0x44] sm:$0xff]
    %v2819 = vld [vmem:[%s4 + $0x4c] sm:$0xf]
    %v2820 = vld [vmem:[%s4 + $0x50] sm:$0xff]
    %v2821 = vld [vmem:[%s4 + $0x58] sm:$0xff]
    %v2822 = vld [vmem:[%s4 + $0x60] sm:$0xf]
    %v2823 = vld [vmem:[%s4 + $0x64] sm:$0xff]
    %v2824 = vld [vmem:[%s4 + $0x6c] sm:$0xff]
    %v2825 = vld [vmem:[%s4 + $0x74] sm:$0xf]
    %v2826 = vld [vmem:[%s4 + $0x78] sm:$0xff]
    %v2827 = vld [vmem:[%s4 + $0x80] sm:$0xff]
    %v2828 = vld [vmem:[%s4 + $0x88] sm:$0xf]
    %v2829 = vld [vmem:[%s4 + $0x8c] sm:$0xff]
    %v2830 = vld [vmem:[%s4 + $0x94] sm:$0xff]
    %v2831 = vld [vmem:[%s4 + $0x9c] sm:$0xf]
    %v2832 = vld [vmem:[%s4 + $0xa0] sm:$0xff]
    %v2833 = vld [vmem:[%s4 + $0xa8] sm:$0xff]
    %v2834 = vld [vmem:[%s4 + $0xb0] sm:$0xf]
    %v2835 = vld [vmem:[%s4 + $0xb4] sm:$0xff]
    %v2836 = vld [vmem:[%s4 + $0xbc] sm:$0xff]
    %v2837 = vld [vmem:[%s4 + $0xc4] sm:$0xf]
    %v2838 = vld [vmem:[%s4 + $0xc8] sm:$0xff]
    %v2839 = vld [vmem:[%s4 + $0xd0] sm:$0xff]
    %v2840 = vld [vmem:[%s4 + $0xd8] sm:$0xf]
    %v2841 = vld [vmem:[%s4 + $0xdc] sm:$0xff]
    %v2842 = vld [vmem:[%s4 + $0xe4] sm:$0xff]
    %v2843 = vld [vmem:[%s4 + $0xec] sm:$0xf]
    %v2844 = vld [vmem:[%s4 + $0xf0] sm:$0xff]
    %v2845 = vld [vmem:[%s4 + $0xf8] sm:$0xff]
    %v2846 = vld [vmem:[%s4 + $0x100] sm:$0xf]
    %v2847 = vld [vmem:[%s4 + $0x104] sm:$0xff]
    %v2848 = vld [vmem:[%s4 + $0x10c] sm:$0xff]
    %v2849 = vld [vmem:[%s4 + $0x114] sm:$0xf]
    %v2850 = vld [vmem:[%s4 + $0x118] sm:$0xff]
    %v2851 = vld [vmem:[%s4 + $0x120] sm:$0xff]
    %v2852 = vld [vmem:[%s4 + $0x128] sm:$0xf]
    %v2853 = vld [vmem:[%s4 + $0x12c] sm:$0xff]
    %v2854 = vld [vmem:[%s4 + $0x134] sm:$0xff]
    %v2855 = vld [vmem:[%s4 + $0x13c] sm:$0xf]
    %v2856 = vld [vmem:[%s4 + $0x140] sm:$0xff]
    %v2857 = vld [vmem:[%s4 + $0x148] sm:$0xff]
    %v2858 = vld [vmem:[%s4 + $0x150] sm:$0xf]
    %v2859 = vld [vmem:[%s4 + $0x154] sm:$0xff]
    %v2860 = vld [vmem:[%s4 + $0x15c] sm:$0xff]
    %v2861 = vld [vmem:[%s4 + $0x164] sm:$0xf]
    %v2862 = vld [vmem:[%s4 + $0x168] sm:$0xff]
    %v2863 = vld [vmem:[%s4 + $0x170] sm:$0xff]
    %v2864 = vld [vmem:[%s4 + $0x178] sm:$0xf]
    %v2865 = vld [vmem:[%s4 + $0x17c] sm:$0xff]
    %v2866 = vld [vmem:[%s4 + $0x184] sm:$0xff]
    %v2867 = vld [vmem:[%s4 + $0x18c] sm:$0xf]
    %v2868 = vld [vmem:[%s4 + $0x190] sm:$0xff]
    %v2869 = vld [vmem:[%s4 + $0x198] sm:$0xff]
    %v2870 = vld [vmem:[%s4 + $0x1a0] sm:$0xf]
    %v2871 = vld [vmem:[%s4 + $0x1a4] sm:$0xff]
    %v2872 = vld [vmem:[%s4 + $0x1ac] sm:$0xff]
    %v2873 = vld [vmem:[%s4 + $0x1b4] sm:$0xf]
    %v2874 = vld [vmem:[%s4 + $0x1b8] sm:$0xff]
    %v2875 = vld [vmem:[%s4 + $0x1c0] sm:$0xff]
    %v2876 = vld [vmem:[%s4 + $0x1c8] sm:$0xf]
    %v2877 = vld [vmem:[%s4 + $0x1cc] sm:$0xff]
    %v2878 = vld [vmem:[%s4 + $0x1d4] sm:$0xff]
    %v2879 = vld [vmem:[%s4 + $0x1dc] sm:$0xf]
    %v2880 = vld [vmem:[%s4 + $0x1e0] sm:$0xff]
    %v2881 = vld [vmem:[%s4 + $0x1e8] sm:$0xff]
    %v2882 = vld [vmem:[%s4 + $0x1f0] sm:$0xf]
    %v2883 = vld [vmem:[%s4 + $0x1f4] sm:$0xff]
    %v2884 = vld [vmem:[%s4 + $0x1fc] sm:$0xff]
    %v2885 = vld [vmem:[%s4 + $0x204] sm:$0xf]
    %v2886 = vld [vmem:[%s4 + $0x208] sm:$0xff]
    %v2887 = vld [vmem:[%s4 + $0x210] sm:$0xff]
    %v2888 = vld [vmem:[%s4 + $0x218] sm:$0xf]
    %v2889 = vld [vmem:[%s4 + $0x21c] sm:$0xff]
    %v2890 = vld [vmem:[%s4 + $0x224] sm:$0xff]
    %v2891 = vld [vmem:[%s4 + $0x22c] sm:$0xf]
    %v2892 = vld [vmem:[%s4 + $0x230] sm:$0xff]
    %v2893 = vld [vmem:[%s4 + $0x238] sm:$0xff]
    %v2894 = vld [vmem:[%s4 + $0x240] sm:$0xf]
    %v2895 = vld [vmem:[%s4 + $0x244] sm:$0xff]
    %v2896 = vld [vmem:[%s4 + $0x24c] sm:$0xff]
    %v2897 = vld [vmem:[%s4 + $0x254] sm:$0xf]
    %v2898 = vld [vmem:[%s4 + $0x258] sm:$0xff]
    %v2899 = vld [vmem:[%s4 + $0x260] sm:$0xff]
    %v2900 = vld [vmem:[%s4 + $0x268] sm:$0xf]
    %v2901 = vld [vmem:[%s4 + $0x26c] sm:$0xff]
    %v2902 = vld [vmem:[%s4 + $0x274] sm:$0xff]
    %v2903 = vld [vmem:[%s4 + $0x27c] sm:$0xf]
    %v2904 = vld [vmem:[%s4 + $0x280] sm:$0xff]
    %v2905 = vld [vmem:[%s4 + $0x288] sm:$0xff]
    %v2906 = vld [vmem:[%s4 + $0x290] sm:$0xf]
    %v2907 = vld [vmem:[%s4 + $0x294] sm:$0xff]
    %v2908 = vld [vmem:[%s4 + $0x29c] sm:$0xff]
    %v2909 = vld [vmem:[%s4 + $0x2a4] sm:$0xf]
    %v2910 = vld [vmem:[%s4 + $0x2a8] sm:$0xff]
    %v2911 = vld [vmem:[%s4 + $0x2b0] sm:$0xff]
    %v2912 = vld [vmem:[%s4 + $0x2b8] sm:$0xf]
    %v2913 = vld [vmem:[%s4 + $0x2bc] sm:$0xff]
    %v2914 = vld [vmem:[%s4 + $0x2c4] sm:$0xff]
    %v2915 = vld [vmem:[%s4 + $0x2cc] sm:$0xf]
    %v2916 = vld [vmem:[%s4 + $0x2d0] sm:$0xff]
    %v2917 = vld [vmem:[%s4 + $0x2d8] sm:$0xff]
    %v2918 = vld [vmem:[%s4 + $0x2e0] sm:$0xf]
    %v2919 = vld [vmem:[%s4 + $0x2e4] sm:$0xff]
    %v2920 = vld [vmem:[%s4 + $0x2ec] sm:$0xff]
    %v2921 = vld [vmem:[%s4 + $0x2f4] sm:$0xf]
    %v2922 = vld [vmem:[%s4 + $0x2f8] sm:$0xff]
    %v2923 = vld [vmem:[%s4 + $0x300] sm:$0xff]
    %v2924 = vld [vmem:[%s4 + $0x308] sm:$0xf]
    %v2925 = vld [vmem:[%s4 + $0x30c] sm:$0xff]
    %v2926 = vld [vmem:[%s4 + $0x314] sm:$0xff]
    %v2927 = vld [vmem:[%s4 + $0x31c] sm:$0xf]
    %v2928 = vld [vmem:[%s4 + $0x320] sm:$0xff]
    %v2929 = vld [vmem:[%s4 + $0x328] sm:$0xff]
    %v2930 = vld [vmem:[%s4 + $0x330] sm:$0xf]
    %v2931 = vld [vmem:[%s4 + $0x334] sm:$0xff]
    %v2932 = vld [vmem:[%s4 + $0x33c] sm:$0xff]
    %v2933 = vld [vmem:[%s4 + $0x344] sm:$0xf]
    %v2934 = vld [vmem:[%s4 + $0x348] sm:$0xff]
    %v2935 = vld [vmem:[%s4 + $0x350] sm:$0xff]
    %v2936 = vld [vmem:[%s4 + $0x358] sm:$0xf]
    %v2937 = vld [vmem:[%s4 + $0x35c] sm:$0xff]
    %v2938 = vld [vmem:[%s4 + $0x364] sm:$0xff]
    %v2939 = vld [vmem:[%s4 + $0x36c] sm:$0xf]
    %v2940 = vld [vmem:[%s4 + $0x370] sm:$0xff]
    %v2941 = vld [vmem:[%s4 + $0x378] sm:$0xff]
    %v2942 = vld [vmem:[%s4 + $0x380] sm:$0xf]
    %v2943 = vld [vmem:[%s4 + $0x384] sm:$0xff]
    %v2944 = vld [vmem:[%s4 + $0x38c] sm:$0xff]
    %v2945 = vld [vmem:[%s4 + $0x394] sm:$0xf]
    %v2946 = vld [vmem:[%s4 + $0x398] sm:$0xff]
    %v2947 = vld [vmem:[%s4 + $0x3a0] sm:$0xff]
    %v2948 = vld [vmem:[%s4 + $0x3a8] sm:$0xf]
    %v2949 = vld [vmem:[%s4 + $0x3ac] sm:$0xff]
    %v2950 = vld [vmem:[%s4 + $0x3b4] sm:$0xff]
    %v2951 = vld [vmem:[%s4 + $0x3bc] sm:$0xf]
    %v2952 = vld [vmem:[%s4 + $0x3c0] sm:$0xff]
    %v2953 = vld [vmem:[%s4 + $0x3c8] sm:$0xff]
    %v2954 = vld [vmem:[%s4 + $0x3d0] sm:$0xf]
    %v2955 = vld [vmem:[%s4 + $0x3d4] sm:$0xff]
    %v2956 = vld [vmem:[%s4 + $0x3dc] sm:$0xff]
    %v2957 = vld [vmem:[%s4 + $0x3e4] sm:$0xf]
    %v2958 = vld [vmem:[%s4 + $0x3e8] sm:$0xff]
    %v2959 = vld [vmem:[%s4 + $0x3f0] sm:$0xff]
    %v2960 = vld [vmem:[%s4 + $0x3f8] sm:$0xf]
    %v2961 = vld [vmem:[%s4 + $0x3fc] sm:$0xff]
    %v2962 = vld [vmem:[%s4 + $0x404] sm:$0xff]
    %v2963 = vld [vmem:[%s4 + $0x40c] sm:$0xf]
    %v2964 = vld [vmem:[%s4 + $0x410] sm:$0xff]
    %v2965 = vld [vmem:[%s4 + $0x418] sm:$0xff]
    %v2966 = vld [vmem:[%s4 + $0x420] sm:$0xf]
    %v2967 = vld [vmem:[%s4 + $0x424] sm:$0xff]
    %v2968 = vld [vmem:[%s4 + $0x42c] sm:$0xff]
    %v2969 = vld [vmem:[%s4 + $0x434] sm:$0xf]
    %v2970 = vld [vmem:[%s4 + $0x438] sm:$0xff]
    %v2971 = vld [vmem:[%s4 + $0x440] sm:$0xff]
    %v2972 = vld [vmem:[%s4 + $0x448] sm:$0xf]
    %v2973 = vld [vmem:[%s4 + $0x44c] sm:$0xff]
    %v2974 = vld [vmem:[%s4 + $0x454] sm:$0xff]
    %v2975 = vld [vmem:[%s4 + $0x45c] sm:$0xf]
    %v2976 = vld [vmem:[%s4 + $0x460] sm:$0xff]
    %v2977 = vld [vmem:[%s4 + $0x468] sm:$0xff]
    %v2978 = vld [vmem:[%s4 + $0x470] sm:$0xf]
    %v2979 = vld [vmem:[%s4 + $0x474] sm:$0xff]
    %v2980 = vld [vmem:[%s4 + $0x47c] sm:$0xff]
    %v2981 = vld [vmem:[%s4 + $0x484] sm:$0xf]
    %v2982 = vld [vmem:[%s4 + $0x488] sm:$0xff]
    %v2983 = vld [vmem:[%s4 + $0x490] sm:$0xff]
    %v2984 = vld [vmem:[%s4 + $0x498] sm:$0xf]
    %v2985 = vld [vmem:[%s4 + $0x49c] sm:$0xff]
    %v2986 = vld [vmem:[%s4 + $0x4a4] sm:$0xff]
    %v2987 = vld [vmem:[%s4 + $0x4ac] sm:$0xf]
    %v2988 = vld [vmem:[%s4 + $0x4b0] sm:$0xff]
    %v2989 = vld [vmem:[%s4 + $0x4b8] sm:$0xff]
    %v2990 = vld [vmem:[%s4 + $0x4c0] sm:$0xf]
    %v2991 = vld [vmem:[%s4 + $0x4c4] sm:$0xff]
    %v2992 = vld [vmem:[%s4 + $0x4cc] sm:$0xff]
    %v2993 = vld [vmem:[%s4 + $0x4d4] sm:$0xf]
    %v2994 = vld [vmem:[%s4 + $0x4d8] sm:$0xff]
    %v2995 = vld [vmem:[%s4 + $0x4e0] sm:$0xff]
    %v2996 = vld [vmem:[%s4 + $0x4e8] sm:$0xf]
    %v2997 = vld [vmem:[%s4 + $0x4ec] sm:$0xff]
    %v2998 = vld [vmem:[%s4 + $0x4f4] sm:$0xff]
    %v2999 = vld [vmem:[%s4 + $0x4fc] sm:$0xf]
    %v3000 = vld [vmem:[%s4 + $0x500] sm:$0xff]
    %v3001 = vld [vmem:[%s4 + $0x508] sm:$0xff]
    %v3002 = vld [vmem:[%s4 + $0x510] sm:$0xf]
    %v3003 = vld [vmem:[%s4 + $0x514] sm:$0xff]
    %v3004 = vld [vmem:[%s4 + $0x51c] sm:$0xff]
    %v3005 = vld [vmem:[%s4 + $0x524] sm:$0xf]
    %v3006 = vld [vmem:[%s4 + $0x528] sm:$0xff]
    %v3007 = vld [vmem:[%s4 + $0x530] sm:$0xff]
    %v3008 = vld [vmem:[%s4 + $0x538] sm:$0xf]
    %v3009 = vld [vmem:[%s4 + $0x53c] sm:$0xff]
    %v3010 = vld [vmem:[%s4 + $0x544] sm:$0xff]
    %v3011 = vld [vmem:[%s4 + $0x54c] sm:$0xf]
    %v3012 = vld [vmem:[%s4 + $0x550] sm:$0xff]
    %v3013 = vld [vmem:[%s4 + $0x558] sm:$0xff]
    %v3014 = vld [vmem:[%s4 + $0x560] sm:$0xf]
    %v3015 = vld [vmem:[%s4 + $0x564] sm:$0xff]
    %v3016 = vld [vmem:[%s4 + $0x56c] sm:$0xff]
    %v3017 = vld [vmem:[%s4 + $0x574] sm:$0xf]
    %v3018 = vld [vmem:[%s4 + $0x578] sm:$0xff]
    %v3019 = vld [vmem:[%s4 + $0x580] sm:$0xff]
    %v3020 = vld [vmem:[%s4 + $0x588] sm:$0xf]
    %v3021 = vld [vmem:[%s4 + $0x58c] sm:$0xff]
    %v3022 = vld [vmem:[%s4 + $0x594] sm:$0xff]
    %v3023 = vld [vmem:[%s4 + $0x59c] sm:$0xf]
    %v3024 = vld [vmem:[%s4 + $0x5a0] sm:$0xff]
    %v3025 = vld [vmem:[%s4 + $0x5a8] sm:$0xff]
    %v3026 = vld [vmem:[%s4 + $0x5b0] sm:$0xf]
    %v3027 = vld [vmem:[%s4 + $0x5b4] sm:$0xff]
    %v3028 = vld [vmem:[%s4 + $0x5bc] sm:$0xff]
    %v3029 = vld [vmem:[%s4 + $0x5c4] sm:$0xf]
    %v3030 = vld [vmem:[%s4 + $0x5c8] sm:$0xff]
    %v3031 = vld [vmem:[%s4 + $0x5d0] sm:$0xff]
    %v3032 = vld [vmem:[%s4 + $0x5d8] sm:$0xf]
    %v3033 = vld [vmem:[%s4 + $0x5dc] sm:$0xff]
    %v3034 = vld [vmem:[%s4 + $0x5e4] sm:$0xff]
    %v3035 = vld [vmem:[%s4 + $0x5ec] sm:$0xf]
    %v3036 = vld [vmem:[%s4 + $0x5f0] sm:$0xff]
    %v3037 = vld [vmem:[%s4 + $0x5f8] sm:$0xff]
    %v3038 = vld [vmem:[%s4 + $0x600] sm:$0xf]
    %v3039 = vld [vmem:[%s4 + $0x604] sm:$0xff]
    %v3040 = vld [vmem:[%s4 + $0x60c] sm:$0xff]
    %v3041 = vld [vmem:[%s4 + $0x614] sm:$0xf]
    %v3042 = vld [vmem:[%s4 + $0x618] sm:$0xff]
    %v3043 = vld [vmem:[%s4 + $0x620] sm:$0xff]
    %v3044 = vld [vmem:[%s4 + $0x628] sm:$0xf]
    %v3045 = vld [vmem:[%s4 + $0x62c] sm:$0xff]
    %v3046 = vld [vmem:[%s4 + $0x634] sm:$0xff]
    %v3047 = vld [vmem:[%s4 + $0x63c] sm:$0xf]
    %v3048 = vld [vmem:[%s4 + $0x640] sm:$0xff]
    %v3049 = vld [vmem:[%s4 + $0x648] sm:$0xff]
    %v3050 = vld [vmem:[%s4 + $0x650] sm:$0xf]
    %v3051 = vld [vmem:[%s4 + $0x654] sm:$0xff]
    %v3052 = vld [vmem:[%s4 + $0x65c] sm:$0xff]
    %v3053 = vld [vmem:[%s4 + $0x664] sm:$0xf]
    %v3054 = vld [vmem:[%s4 + $0x668] sm:$0xff]
    %v3055 = vld [vmem:[%s4 + $0x670] sm:$0xff]
    %v3056 = vld [vmem:[%s4 + $0x678] sm:$0xf]
    %v3057 = vld [vmem:[%s4 + $0x67c] sm:$0xff]
    %v3058 = vld [vmem:[%s4 + $0x684] sm:$0xff]
    %v3059 = vld [vmem:[%s4 + $0x68c] sm:$0xf]
    %v3060 = vld [vmem:[%s4 + $0x690] sm:$0xff]
    %v3061 = vld [vmem:[%s4 + $0x698] sm:$0xff]
    %v3062 = vld [vmem:[%s4 + $0x6a0] sm:$0xf]
    %v3063 = vld [vmem:[%s4 + $0x6a4] sm:$0xff]
    %v3064 = vld [vmem:[%s4 + $0x6ac] sm:$0xff]
    %v3065 = vld [vmem:[%s4 + $0x6b4] sm:$0xf]
    %v3066 = vld [vmem:[%s4 + $0x6b8] sm:$0xff]
    %v3067 = vld [vmem:[%s4 + $0x6c0] sm:$0xff]
    %v3068 = vld [vmem:[%s4 + $0x6c8] sm:$0xf]
    %v3069 = vld [vmem:[%s4 + $0x6cc] sm:$0xff]
    %v3070 = vld [vmem:[%s4 + $0x6d4] sm:$0xff]
    %v3071 = vld [vmem:[%s4 + $0x6dc] sm:$0xf]
    %v3072 = vld [vmem:[%s4 + $0x6e0] sm:$0xff]
    %v3073 = vld [vmem:[%s4 + $0x6e8] sm:$0xff]
    %v3074 = vld [vmem:[%s4 + $0x6f0] sm:$0xf]
    %v3075 = vld [vmem:[%s4 + $0x6f4] sm:$0xff]
    %v3076 = vld [vmem:[%s4 + $0x6fc] sm:$0xff]
    %v3077 = vld [vmem:[%s4 + $0x704] sm:$0xf]
    %v3078 = vld [vmem:[%s4 + $0x708] sm:$0xff]
    %v3079 = vld [vmem:[%s4 + $0x710] sm:$0xff]
    %v3080 = vld [vmem:[%s4 + $0x718] sm:$0xf]
    %v3081 = vld [vmem:[%s4 + $0x71c] sm:$0xff]
    %v3082 = vld [vmem:[%s4 + $0x724] sm:$0xff]
    %v3083 = vld [vmem:[%s4 + $0x72c] sm:$0xf]
    %v3084 = vld [vmem:[%s4 + $0x730] sm:$0xff]
    %v3085 = vld [vmem:[%s4 + $0x738] sm:$0xff]
    %v3086 = vld [vmem:[%s4 + $0x740] sm:$0xf]
    %v3087 = vld [vmem:[%s4 + $0x744] sm:$0xff]
    %v3088 = vld [vmem:[%s4 + $0x74c] sm:$0xff]
    %v3089 = vld [vmem:[%s4 + $0x754] sm:$0xf]
    %v3090 = vld [vmem:[%s4 + $0x758] sm:$0xff]
    %v3091 = vld [vmem:[%s4 + $0x760] sm:$0xff]
    %v3092 = vld [vmem:[%s4 + $0x768] sm:$0xf]
    %v3093 = vld [vmem:[%s4 + $0x76c] sm:$0xff]
    %v3094 = vld [vmem:[%s4 + $0x774] sm:$0xff]
    %v3095 = vld [vmem:[%s4 + $0x77c] sm:$0xf]
    %v3096 = vld [vmem:[%s4 + $0x780] sm:$0xff]
    %v3097 = vld [vmem:[%s4 + $0x788] sm:$0xff]
    %v3098 = vld [vmem:[%s4 + $0x790] sm:$0xf]
    %v3099 = vld [vmem:[%s4 + $0x794] sm:$0xff]
    %v3100 = vld [vmem:[%s4 + $0x79c] sm:$0xff]
    %v3101 = vld [vmem:[%s4 + $0x7a4] sm:$0xf]
    %v3102 = vld [vmem:[%s4 + $0x7a8] sm:$0xff]
    %v3103 = vld [vmem:[%s4 + $0x7b0] sm:$0xff]
    %v3104 = vld [vmem:[%s4 + $0x7b8] sm:$0xf]
    %v3105 = vld [vmem:[%s4 + $0x7bc] sm:$0xff]
    %v3106 = vld [vmem:[%s4 + $0x7c4] sm:$0xff]
    %v3107 = vld [vmem:[%s4 + $0x7cc] sm:$0xf]
    %v3108 = vld [vmem:[%s4 + $0x7d0] sm:$0xff]
    %v3109 = vld [vmem:[%s4 + $0x7d8] sm:$0xff]
    %v3110 = vld [vmem:[%s4 + $0x7e0] sm:$0xf]
    %v3111 = vld [vmem:[%s4 + $0x7e4] sm:$0xff]
    %v3112 = vld [vmem:[%s4 + $0x7ec] sm:$0xff]
    %v3113 = vld [vmem:[%s4 + $0x7f4] sm:$0xf]
    %v3114 = vld [vmem:[%s4 + $0x7f8] sm:$0xff]
    %v3115 = vld [vmem:[%s4 + $0x800] sm:$0xff]
    %v3116 = vld [vmem:[%s4 + $0x808] sm:$0xf]
    %v3117 = vld [vmem:[%s4 + $0x80c] sm:$0xff]
    %v3118 = vld [vmem:[%s4 + $0x814] sm:$0xff]
    %v3119 = vld [vmem:[%s4 + $0x81c] sm:$0xf]
    %v3120 = vld [vmem:[%s4 + $0x820] sm:$0xff]
    %v3121 = vld [vmem:[%s4 + $0x828] sm:$0xff]
    %v3122 = vld [vmem:[%s4 + $0x830] sm:$0xf]
    %v3123 = vld [vmem:[%s4 + $0x834] sm:$0xff]
    %v3124 = vld [vmem:[%s4 + $0x83c] sm:$0xff]
    %v3125 = vld [vmem:[%s4 + $0x844] sm:$0xf]
    %v3126 = vld [vmem:[%s4 + $0x848] sm:$0xff]
    %v3127 = vld [vmem:[%s4 + $0x850] sm:$0xff]
    %v3128 = vld [vmem:[%s4 + $0x858] sm:$0xf]
    %v3129 = vld [vmem:[%s4 + $0x85c] sm:$0xff]
    %v3130 = vld [vmem:[%s4 + $0x864] sm:$0xff]
    %v3131 = vld [vmem:[%s4 + $0x86c] sm:$0xf]
    %v3132 = vld [vmem:[%s4 + $0x870] sm:$0xff]
    %v3133 = vld [vmem:[%s4 + $0x878] sm:$0xff]
    %v3134 = vld [vmem:[%s4 + $0x880] sm:$0xf]
    %v3135 = vld [vmem:[%s4 + $0x884] sm:$0xff]
    %v3136 = vld [vmem:[%s4 + $0x88c] sm:$0xff]
    %v3137 = vld [vmem:[%s4 + $0x894] sm:$0xf]
    %v3138 = vld [vmem:[%s4 + $0x898] sm:$0xff]
    %v3139 = vld [vmem:[%s4 + $0x8a0] sm:$0xff]
    %v3140 = vld [vmem:[%s4 + $0x8a8] sm:$0xf]
    %v3141 = vld [vmem:[%s4 + $0x8ac] sm:$0xff]
    %v3142 = vld [vmem:[%s4 + $0x8b4] sm:$0xff]
    %v3143 = vld [vmem:[%s4 + $0x8bc] sm:$0xf]
    %v3144 = vld [vmem:[%s4 + $0x8c0] sm:$0xff]
    %v3145 = vld [vmem:[%s4 + $0x8c8] sm:$0xff]
    %v3146 = vld [vmem:[%s4 + $0x8d0] sm:$0xf]
    %v3147 = vld [vmem:[%s4 + $0x8d4] sm:$0xff]
    %v3148 = vld [vmem:[%s4 + $0x8dc] sm:$0xff]
    %v3149 = vld [vmem:[%s4 + $0x8e4] sm:$0xf]
    %v3150 = vld [vmem:[%s4 + $0x8e8] sm:$0xff]
    %v3151 = vld [vmem:[%s4 + $0x8f0] sm:$0xff]
    %v3152 = vld [vmem:[%s4 + $0x8f8] sm:$0xf]
    %v3153 = vld [vmem:[%s4 + $0x8fc] sm:$0xff]
    %v3154 = vld [vmem:[%s4 + $0x904] sm:$0xff]
    %v3155 = vld [vmem:[%s4 + $0x90c] sm:$0xf]
    %v3156 = vld [vmem:[%s4 + $0x910] sm:$0xff]
    %v3157 = vld [vmem:[%s4 + $0x918] sm:$0xff]
    %v3158 = vld [vmem:[%s4 + $0x920] sm:$0xf]
    %v3159 = vld [vmem:[%s4 + $0x924] sm:$0xff]
    %v3160 = vld [vmem:[%s4 + $0x92c] sm:$0xff]
    %v3161 = vld [vmem:[%s4 + $0x934] sm:$0xf]
    %v3162 = vld [vmem:[%s4 + $0x938] sm:$0xff]
    %v3163 = vld [vmem:[%s4 + $0x940] sm:$0xff]
    %v3164 = vld [vmem:[%s4 + $0x948] sm:$0xf]
    %v3165 = vld [vmem:[%s4 + $0x94c] sm:$0xff]
    %v3166 = vld [vmem:[%s4 + $0x954] sm:$0xff]
    %v3167 = vld [vmem:[%s4 + $0x95c] sm:$0xf]
    %v3168 = vld [vmem:[%s4 + $0x960] sm:$0xff]
    %v3169 = vld [vmem:[%s4 + $0x968] sm:$0xff]
    %v3170 = vld [vmem:[%s4 + $0x970] sm:$0xf]
    %v3171 = vld [vmem:[%s4 + $0x974] sm:$0xff]
    %v3172 = vld [vmem:[%s4 + $0x97c] sm:$0xff]
    %v3173 = vld [vmem:[%s4 + $0x984] sm:$0xf]
    %v3174 = vld [vmem:[%s4 + $0x988] sm:$0xff]
    %v3175 = vld [vmem:[%s4 + $0x990] sm:$0xff]
    %v3176 = vld [vmem:[%s4 + $0x998] sm:$0xf]
    %v3177 = vld [vmem:[%s4 + $0x99c] sm:$0xff]
    %v3178 = vld [vmem:[%s4 + $0x9a4] sm:$0xff]
    %v3179 = vld [vmem:[%s4 + $0x9ac] sm:$0xf]
    %v3180 = vld [vmem:[%s4 + $0x9b0] sm:$0xff]
    %v3181 = vld [vmem:[%s4 + $0x9b8] sm:$0xff]
    %v3182 = vld [vmem:[%s4 + $0x9c0] sm:$0xf]
    %v3184 = vlaneseq
    %v3185 = vshrl.u32 %v3184, 7
    %v3186 = vsub.s32 0, %v3185
    %v3187 = vrot.slane %v2807, %v3186
    %v3188 = vlaneseq
    %v3189 = vshrl.u32 %v3188, 7
    %v3190 = vsub.s32 1, %v3189
    %v3191 = vrot.slane %v2807, %v3190
    %v3192 = vlaneseq
    %v3193 = vshrl.u32 %v3192, 7
    %v3194 = vsub.s32 2, %v3193
    %v3195 = vrot.slane %v2807, %v3194
    %v3196 = vlaneseq
    %v3197 = vshrl.u32 %v3196, 7
    %v3198 = vsub.s32 3, %v3197
    %v3199 = vrot.slane %v2807, %v3198
    %v3200 = vlaneseq
    %v3201 = vshrl.u32 %v3200, 7
    %v3202 = vsub.s32 4, %v3201
    %v3203 = vrot.slane %v2807, %v3202
    %v3584 = vunpack.c.l.b16 %v2808
    %v3585 = vunpack.c.h.b16 %v2808
    %v3586 = vunpack.c.l.b16 %v2809
    %v3587 = vunpack.c.h.b16 %v2809
    %v3588 = vunpack.c.l.b16 %v2810
    %v3589 = vunpack.c.l.b16 %v2811
    %v3590 = vunpack.c.h.b16 %v2811
    %v3591 = vunpack.c.l.b16 %v2812
    %v3592 = vunpack.c.h.b16 %v2812
    %v3593 = vunpack.c.l.b16 %v2813
    %v3594 = vunpack.c.l.b16 %v2814
    %v3595 = vunpack.c.h.b16 %v2814
    %v3596 = vunpack.c.l.b16 %v2815
    %v3597 = vunpack.c.h.b16 %v2815
    %v3598 = vunpack.c.l.b16 %v2816
    %v3599 = vunpack.c.l.b16 %v2817
    %v3600 = vunpack.c.h.b16 %v2817
    %v3601 = vunpack.c.l.b16 %v2818
    %v3602 = vunpack.c.h.b16 %v2818
    %v3603 = vunpack.c.l.b16 %v2819
    %v3604 = vunpack.c.l.b16 %v2820
    %v3605 = vunpack.c.h.b16 %v2820
    %v3606 = vunpack.c.l.b16 %v2821
    %v3607 = vunpack.c.h.b16 %v2821
    %v3608 = vunpack.c.l.b16 %v2822
    %v3609 = vunpack.c.l.b16 %v2823
    %v3610 = vunpack.c.h.b16 %v2823
    %v3611 = vunpack.c.l.b16 %v2824
    %v3612 = vunpack.c.h.b16 %v2824
    %v3613 = vunpack.c.l.b16 %v2825
    %v3614 = vunpack.c.l.b16 %v2826
    %v3615 = vunpack.c.h.b16 %v2826
    %v3616 = vunpack.c.l.b16 %v2827
    %v3617 = vunpack.c.h.b16 %v2827
    %v3618 = vunpack.c.l.b16 %v2828
    %v3619 = vunpack.c.l.b16 %v2829
    %v3620 = vunpack.c.h.b16 %v2829
    %v3621 = vunpack.c.l.b16 %v2830
    %v3622 = vunpack.c.h.b16 %v2830
    %v3623 = vunpack.c.l.b16 %v2831
    %v3624 = vunpack.c.l.b16 %v2832
    %v3625 = vunpack.c.h.b16 %v2832
    %v3626 = vunpack.c.l.b16 %v2833
    %v3627 = vunpack.c.h.b16 %v2833
    %v3628 = vunpack.c.l.b16 %v2834
    %v3629 = vunpack.c.l.b16 %v2835
    %v3630 = vunpack.c.h.b16 %v2835
    %v3631 = vunpack.c.l.b16 %v2836
    %v3632 = vunpack.c.h.b16 %v2836
    %v3633 = vunpack.c.l.b16 %v2837
    %v3634 = vunpack.c.l.b16 %v2838
    %v3635 = vunpack.c.h.b16 %v2838
    %v3636 = vunpack.c.l.b16 %v2839
    %v3637 = vunpack.c.h.b16 %v2839
    %v3638 = vunpack.c.l.b16 %v2840
    %v3639 = vunpack.c.l.b16 %v2841
    %v3640 = vunpack.c.h.b16 %v2841
    %v3641 = vunpack.c.l.b16 %v2842
    %v3642 = vunpack.c.h.b16 %v2842
    %v3643 = vunpack.c.l.b16 %v2843
    %v3644 = vunpack.c.l.b16 %v2844
    %v3645 = vunpack.c.h.b16 %v2844
    %v3646 = vunpack.c.l.b16 %v2845
    %v3647 = vunpack.c.h.b16 %v2845
    %v3648 = vunpack.c.l.b16 %v2846
    %v3649 = vunpack.c.l.b16 %v2847
    %v3650 = vunpack.c.h.b16 %v2847
    %v3651 = vunpack.c.l.b16 %v2848
    %v3652 = vunpack.c.h.b16 %v2848
    %v3653 = vunpack.c.l.b16 %v2849
    %v3654 = vunpack.c.l.b16 %v2850
    %v3655 = vunpack.c.h.b16 %v2850
    %v3656 = vunpack.c.l.b16 %v2851
    %v3657 = vunpack.c.h.b16 %v2851
    %v3658 = vunpack.c.l.b16 %v2852
    %v3659 = vunpack.c.l.b16 %v2853
    %v3660 = vunpack.c.h.b16 %v2853
    %v3661 = vunpack.c.l.b16 %v2854
    %v3662 = vunpack.c.h.b16 %v2854
    %v3663 = vunpack.c.l.b16 %v2855
    %v3664 = vunpack.c.l.b16 %v2856
    %v3665 = vunpack.c.h.b16 %v2856
    %v3666 = vunpack.c.l.b16 %v2857
    %v3667 = vunpack.c.h.b16 %v2857
    %v3668 = vunpack.c.l.b16 %v2858
    %v3669 = vunpack.c.l.b16 %v2859
    %v3670 = vunpack.c.h.b16 %v2859
    %v3671 = vunpack.c.l.b16 %v2860
    %v3672 = vunpack.c.h.b16 %v2860
    %v3673 = vunpack.c.l.b16 %v2861
    %v3674 = vunpack.c.l.b16 %v2862
    %v3675 = vunpack.c.h.b16 %v2862
    %v3676 = vunpack.c.l.b16 %v2863
    %v3677 = vunpack.c.h.b16 %v2863
    %v3678 = vunpack.c.l.b16 %v2864
    %v3679 = vunpack.c.l.b16 %v2865
    %v3680 = vunpack.c.h.b16 %v2865
    %v3681 = vunpack.c.l.b16 %v2866
    %v3682 = vunpack.c.h.b16 %v2866
    %v3683 = vunpack.c.l.b16 %v2867
    %v3684 = vunpack.c.l.b16 %v2868
    %v3685 = vunpack.c.h.b16 %v2868
    %v3686 = vunpack.c.l.b16 %v2869
    %v3687 = vunpack.c.h.b16 %v2869
    %v3688 = vunpack.c.l.b16 %v2870
    %v3689 = vunpack.c.l.b16 %v2871
    %v3690 = vunpack.c.h.b16 %v2871
    %v3691 = vunpack.c.l.b16 %v2872
    %v3692 = vunpack.c.h.b16 %v2872
    %v3693 = vunpack.c.l.b16 %v2873
    %v3694 = vunpack.c.l.b16 %v2874
    %v3695 = vunpack.c.h.b16 %v2874
    %v3696 = vunpack.c.l.b16 %v2875
    %v3697 = vunpack.c.h.b16 %v2875
    %v3698 = vunpack.c.l.b16 %v2876
    %v3699 = vunpack.c.l.b16 %v2877
    %v3700 = vunpack.c.h.b16 %v2877
    %v3701 = vunpack.c.l.b16 %v2878
    %v3702 = vunpack.c.h.b16 %v2878
    %v3703 = vunpack.c.l.b16 %v2879
    %v3704 = vunpack.c.l.b16 %v2880
    %v3705 = vunpack.c.h.b16 %v2880
    %v3706 = vunpack.c.l.b16 %v2881
    %v3707 = vunpack.c.h.b16 %v2881
    %v3708 = vunpack.c.l.b16 %v2882
    %v3709 = vunpack.c.l.b16 %v2883
    %v3710 = vunpack.c.h.b16 %v2883
    %v3711 = vunpack.c.l.b16 %v2884
    %v3712 = vunpack.c.h.b16 %v2884
    %v3713 = vunpack.c.l.b16 %v2885
    %v3714 = vunpack.c.l.b16 %v2886
    %v3715 = vunpack.c.h.b16 %v2886
    %v3716 = vunpack.c.l.b16 %v2887
    %v3717 = vunpack.c.h.b16 %v2887
    %v3718 = vunpack.c.l.b16 %v2888
    %v3719 = vunpack.c.l.b16 %v2889
    %v3720 = vunpack.c.h.b16 %v2889
    %v3721 = vunpack.c.l.b16 %v2890
    %v3722 = vunpack.c.h.b16 %v2890
    %v3723 = vunpack.c.l.b16 %v2891
    %v3724 = vunpack.c.l.b16 %v2892
    %v3725 = vunpack.c.h.b16 %v2892
    %v3726 = vunpack.c.l.b16 %v2893
    %v3727 = vunpack.c.h.b16 %v2893
    %v3728 = vunpack.c.l.b16 %v2894
    %v3729 = vunpack.c.l.b16 %v2895
    %v3730 = vunpack.c.h.b16 %v2895
    %v3731 = vunpack.c.l.b16 %v2896
    %v3732 = vunpack.c.h.b16 %v2896
    %v3733 = vunpack.c.l.b16 %v2897
    %v3734 = vunpack.c.l.b16 %v2898
    %v3735 = vunpack.c.h.b16 %v2898
    %v3736 = vunpack.c.l.b16 %v2899
    %v3737 = vunpack.c.h.b16 %v2899
    %v3738 = vunpack.c.l.b16 %v2900
    %v3739 = vunpack.c.l.b16 %v2901
    %v3740 = vunpack.c.h.b16 %v2901
    %v3741 = vunpack.c.l.b16 %v2902
    %v3742 = vunpack.c.h.b16 %v2902
    %v3743 = vunpack.c.l.b16 %v2903
    %v3744 = vunpack.c.l.b16 %v2904
    %v3745 = vunpack.c.h.b16 %v2904
    %v3746 = vunpack.c.l.b16 %v2905
    %v3747 = vunpack.c.h.b16 %v2905
    %v3748 = vunpack.c.l.b16 %v2906
    %v3749 = vunpack.c.l.b16 %v2907
    %v3750 = vunpack.c.h.b16 %v2907
    %v3751 = vunpack.c.l.b16 %v2908
    %v3752 = vunpack.c.h.b16 %v2908
    %v3753 = vunpack.c.l.b16 %v2909
    %v3754 = vunpack.c.l.b16 %v2910
    %v3755 = vunpack.c.h.b16 %v2910
    %v3756 = vunpack.c.l.b16 %v2911
    %v3757 = vunpack.c.h.b16 %v2911
    %v3758 = vunpack.c.l.b16 %v2912
    %v3759 = vunpack.c.l.b16 %v2913
    %v3760 = vunpack.c.h.b16 %v2913
    %v3761 = vunpack.c.l.b16 %v2914
    %v3762 = vunpack.c.h.b16 %v2914
    %v3763 = vunpack.c.l.b16 %v2915
    %v3764 = vunpack.c.l.b16 %v2916
    %v3765 = vunpack.c.h.b16 %v2916
    %v3766 = vunpack.c.l.b16 %v2917
    %v3767 = vunpack.c.h.b16 %v2917
    %v3768 = vunpack.c.l.b16 %v2918
    %v3769 = vunpack.c.l.b16 %v2919
    %v3770 = vunpack.c.h.b16 %v2919
    %v3771 = vunpack.c.l.b16 %v2920
    %v3772 = vunpack.c.h.b16 %v2920
    %v3773 = vunpack.c.l.b16 %v2921
    %v3774 = vunpack.c.l.b16 %v2922
    %v3775 = vunpack.c.h.b16 %v2922
    %v3776 = vunpack.c.l.b16 %v2923
    %v3777 = vunpack.c.h.b16 %v2923
    %v3778 = vunpack.c.l.b16 %v2924
    %v3779 = vunpack.c.l.b16 %v2925
    %v3780 = vunpack.c.h.b16 %v2925
    %v3781 = vunpack.c.l.b16 %v2926
    %v3782 = vunpack.c.h.b16 %v2926
    %v3783 = vunpack.c.l.b16 %v2927
    %v3784 = vunpack.c.l.b16 %v2928
    %v3785 = vunpack.c.h.b16 %v2928
    %v3786 = vunpack.c.l.b16 %v2929
    %v3787 = vunpack.c.h.b16 %v2929
    %v3788 = vunpack.c.l.b16 %v2930
    %v3789 = vunpack.c.l.b16 %v2931
    %v3790 = vunpack.c.h.b16 %v2931
    %v3791 = vunpack.c.l.b16 %v2932
    %v3792 = vunpack.c.h.b16 %v2932
    %v3793 = vunpack.c.l.b16 %v2933
    %v3794 = vunpack.c.l.b16 %v2934
    %v3795 = vunpack.c.h.b16 %v2934
    %v3796 = vunpack.c.l.b16 %v2935
    %v3797 = vunpack.c.h.b16 %v2935
    %v3798 = vunpack.c.l.b16 %v2936
    %v3799 = vunpack.c.l.b16 %v2937
    %v3800 = vunpack.c.h.b16 %v2937
    %v3801 = vunpack.c.l.b16 %v2938
    %v3802 = vunpack.c.h.b16 %v2938
    %v3803 = vunpack.c.l.b16 %v2939
    %v3804 = vunpack.c.l.b16 %v2940
    %v3805 = vunpack.c.h.b16 %v2940
    %v3806 = vunpack.c.l.b16 %v2941
    %v3807 = vunpack.c.h.b16 %v2941
    %v3808 = vunpack.c.l.b16 %v2942
    %v3809 = vunpack.c.l.b16 %v2943
    %v3810 = vunpack.c.h.b16 %v2943
    %v3811 = vunpack.c.l.b16 %v2944
    %v3812 = vunpack.c.h.b16 %v2944
    %v3813 = vunpack.c.l.b16 %v2945
    %v3814 = vunpack.c.l.b16 %v2946
    %v3815 = vunpack.c.h.b16 %v2946
    %v3816 = vunpack.c.l.b16 %v2947
    %v3817 = vunpack.c.h.b16 %v2947
    %v3818 = vunpack.c.l.b16 %v2948
    %v3819 = vunpack.c.l.b16 %v2949
    %v3820 = vunpack.c.h.b16 %v2949
    %v3821 = vunpack.c.l.b16 %v2950
    %v3822 = vunpack.c.h.b16 %v2950
    %v3823 = vunpack.c.l.b16 %v2951
    %v3824 = vunpack.c.l.b16 %v2952
    %v3825 = vunpack.c.h.b16 %v2952
    %v3826 = vunpack.c.l.b16 %v2953
    %v3827 = vunpack.c.h.b16 %v2953
    %v3828 = vunpack.c.l.b16 %v2954
    %v3829 = vunpack.c.l.b16 %v2955
    %v3830 = vunpack.c.h.b16 %v2955
    %v3831 = vunpack.c.l.b16 %v2956
    %v3832 = vunpack.c.h.b16 %v2956
    %v3833 = vunpack.c.l.b16 %v2957
    %v3834 = vunpack.c.l.b16 %v2958
    %v3835 = vunpack.c.h.b16 %v2958
    %v3836 = vunpack.c.l.b16 %v2959
    %v3837 = vunpack.c.h.b16 %v2959
    %v3838 = vunpack.c.l.b16 %v2960
    %v3839 = vunpack.c.l.b16 %v2961
    %v3840 = vunpack.c.h.b16 %v2961
    %v3841 = vunpack.c.l.b16 %v2962
    %v3842 = vunpack.c.h.b16 %v2962
    %v3843 = vunpack.c.l.b16 %v2963
    %v3844 = vunpack.c.l.b16 %v2964
    %v3845 = vunpack.c.h.b16 %v2964
    %v3846 = vunpack.c.l.b16 %v2965
    %v3847 = vunpack.c.h.b16 %v2965
    %v3848 = vunpack.c.l.b16 %v2966
    %v3849 = vunpack.c.l.b16 %v2967
    %v3850 = vunpack.c.h.b16 %v2967
    %v3851 = vunpack.c.l.b16 %v2968
    %v3852 = vunpack.c.h.b16 %v2968
    %v3853 = vunpack.c.l.b16 %v2969
    %v3854 = vunpack.c.l.b16 %v2970
    %v3855 = vunpack.c.h.b16 %v2970
    %v3856 = vunpack.c.l.b16 %v2971
    %v3857 = vunpack.c.h.b16 %v2971
    %v3858 = vunpack.c.l.b16 %v2972
    %v3859 = vunpack.c.l.b16 %v2973
    %v3860 = vunpack.c.h.b16 %v2973
    %v3861 = vunpack.c.l.b16 %v2974
    %v3862 = vunpack.c.h.b16 %v2974
    %v3863 = vunpack.c.l.b16 %v2975
    %v3864 = vunpack.c.l.b16 %v2976
    %v3865 = vunpack.c.h.b16 %v2976
    %v3866 = vunpack.c.l.b16 %v2977
    %v3867 = vunpack.c.h.b16 %v2977
    %v3868 = vunpack.c.l.b16 %v2978
    %v3869 = vunpack.c.l.b16 %v2979
    %v3870 = vunpack.c.h.b16 %v2979
    %v3871 = vunpack.c.l.b16 %v2980
    %v3872 = vunpack.c.h.b16 %v2980
    %v3873 = vunpack.c.l.b16 %v2981
    %v3874 = vunpack.c.l.b16 %v2982
    %v3875 = vunpack.c.h.b16 %v2982
    %v3876 = vunpack.c.l.b16 %v2983
    %v3877 = vunpack.c.h.b16 %v2983
    %v3878 = vunpack.c.l.b16 %v2984
    %v3879 = vunpack.c.l.b16 %v2985
    %v3880 = vunpack.c.h.b16 %v2985
    %v3881 = vunpack.c.l.b16 %v2986
    %v3882 = vunpack.c.h.b16 %v2986
    %v3883 = vunpack.c.l.b16 %v2987
    %v3884 = vunpack.c.l.b16 %v2988
    %v3885 = vunpack.c.h.b16 %v2988
    %v3886 = vunpack.c.l.b16 %v2989
    %v3887 = vunpack.c.h.b16 %v2989
    %v3888 = vunpack.c.l.b16 %v2990
    %v3889 = vunpack.c.l.b16 %v2991
    %v3890 = vunpack.c.h.b16 %v2991
    %v3891 = vunpack.c.l.b16 %v2992
    %v3892 = vunpack.c.h.b16 %v2992
    %v3893 = vunpack.c.l.b16 %v2993
    %v3894 = vunpack.c.l.b16 %v2994
    %v3895 = vunpack.c.h.b16 %v2994
    %v3896 = vunpack.c.l.b16 %v2995
    %v3897 = vunpack.c.h.b16 %v2995
    %v3898 = vunpack.c.l.b16 %v2996
    %v3899 = vunpack.c.l.b16 %v2997
    %v3900 = vunpack.c.h.b16 %v2997
    %v3901 = vunpack.c.l.b16 %v2998
    %v3902 = vunpack.c.h.b16 %v2998
    %v3903 = vunpack.c.l.b16 %v2999
    %v3904 = vunpack.c.l.b16 %v3000
    %v3905 = vunpack.c.h.b16 %v3000
    %v3906 = vunpack.c.l.b16 %v3001
    %v3907 = vunpack.c.h.b16 %v3001
    %v3908 = vunpack.c.l.b16 %v3002
    %v3909 = vunpack.c.l.b16 %v3003
    %v3910 = vunpack.c.h.b16 %v3003
    %v3911 = vunpack.c.l.b16 %v3004
    %v3912 = vunpack.c.h.b16 %v3004
    %v3913 = vunpack.c.l.b16 %v3005
    %v3914 = vunpack.c.l.b16 %v3006
    %v3915 = vunpack.c.h.b16 %v3006
    %v3916 = vunpack.c.l.b16 %v3007
    %v3917 = vunpack.c.h.b16 %v3007
    %v3918 = vunpack.c.l.b16 %v3008
    %v3919 = vunpack.c.l.b16 %v3009
    %v3920 = vunpack.c.h.b16 %v3009
    %v3921 = vunpack.c.l.b16 %v3010
    %v3922 = vunpack.c.h.b16 %v3010
    %v3923 = vunpack.c.l.b16 %v3011
    %v3924 = vunpack.c.l.b16 %v3012
    %v3925 = vunpack.c.h.b16 %v3012
    %v3926 = vunpack.c.l.b16 %v3013
    %v3927 = vunpack.c.h.b16 %v3013
    %v3928 = vunpack.c.l.b16 %v3014
    %v3929 = vunpack.c.l.b16 %v3015
    %v3930 = vunpack.c.h.b16 %v3015
    %v3931 = vunpack.c.l.b16 %v3016
    %v3932 = vunpack.c.h.b16 %v3016
    %v3933 = vunpack.c.l.b16 %v3017
    %v3934 = vunpack.c.l.b16 %v3018
    %v3935 = vunpack.c.h.b16 %v3018
    %v3936 = vunpack.c.l.b16 %v3019
    %v3937 = vunpack.c.h.b16 %v3019
    %v3938 = vunpack.c.l.b16 %v3020
    %v3939 = vunpack.c.l.b16 %v3021
    %v3940 = vunpack.c.h.b16 %v3021
    %v3941 = vunpack.c.l.b16 %v3022
    %v3942 = vunpack.c.h.b16 %v3022
    %v3943 = vunpack.c.l.b16 %v3023
    %v3944 = vunpack.c.l.b16 %v3024
    %v3945 = vunpack.c.h.b16 %v3024
    %v3946 = vunpack.c.l.b16 %v3025
    %v3947 = vunpack.c.h.b16 %v3025
    %v3948 = vunpack.c.l.b16 %v3026
    %v3949 = vunpack.c.l.b16 %v3027
    %v3950 = vunpack.c.h.b16 %v3027
    %v3951 = vunpack.c.l.b16 %v3028
    %v3952 = vunpack.c.h.b16 %v3028
    %v3953 = vunpack.c.l.b16 %v3029
    %v3954 = vunpack.c.l.b16 %v3030
    %v3955 = vunpack.c.h.b16 %v3030
    %v3956 = vunpack.c.l.b16 %v3031
    %v3957 = vunpack.c.h.b16 %v3031
    %v3958 = vunpack.c.l.b16 %v3032
    %v3959 = vunpack.c.l.b16 %v3033
    %v3960 = vunpack.c.h.b16 %v3033
    %v3961 = vunpack.c.l.b16 %v3034
    %v3962 = vunpack.c.h.b16 %v3034
    %v3963 = vunpack.c.l.b16 %v3035
    %v3964 = vunpack.c.l.b16 %v3036
    %v3965 = vunpack.c.h.b16 %v3036
    %v3966 = vunpack.c.l.b16 %v3037
    %v3967 = vunpack.c.h.b16 %v3037
    %v3968 = vunpack.c.l.b16 %v3038
    %v3969 = vunpack.c.l.b16 %v3039
    %v3970 = vunpack.c.h.b16 %v3039
    %v3971 = vunpack.c.l.b16 %v3040
    %v3972 = vunpack.c.h.b16 %v3040
    %v3973 = vunpack.c.l.b16 %v3041
    %v3974 = vunpack.c.l.b16 %v3042
    %v3975 = vunpack.c.h.b16 %v3042
    %v3976 = vunpack.c.l.b16 %v3043
    %v3977 = vunpack.c.h.b16 %v3043
    %v3978 = vunpack.c.l.b16 %v3044
    %v3979 = vunpack.c.l.b16 %v3045
    %v3980 = vunpack.c.h.b16 %v3045
    %v3981 = vunpack.c.l.b16 %v3046
    %v3982 = vunpack.c.h.b16 %v3046
    %v3983 = vunpack.c.l.b16 %v3047
    %v3984 = vunpack.c.l.b16 %v3048
    %v3985 = vunpack.c.h.b16 %v3048
    %v3986 = vunpack.c.l.b16 %v3049
    %v3987 = vunpack.c.h.b16 %v3049
    %v3988 = vunpack.c.l.b16 %v3050
    %v3989 = vunpack.c.l.b16 %v3051
    %v3990 = vunpack.c.h.b16 %v3051
    %v3991 = vunpack.c.l.b16 %v3052
    %v3992 = vunpack.c.h.b16 %v3052
    %v3993 = vunpack.c.l.b16 %v3053
    %v3994 = vunpack.c.l.b16 %v3054
    %v3995 = vunpack.c.h.b16 %v3054
    %v3996 = vunpack.c.l.b16 %v3055
    %v3997 = vunpack.c.h.b16 %v3055
    %v3998 = vunpack.c.l.b16 %v3056
    %v3999 = vunpack.c.l.b16 %v3057
    %v4000 = vunpack.c.h.b16 %v3057
    %v4001 = vunpack.c.l.b16 %v3058
    %v4002 = vunpack.c.h.b16 %v3058
    %v4003 = vunpack.c.l.b16 %v3059
    %v4004 = vunpack.c.l.b16 %v3060
    %v4005 = vunpack.c.h.b16 %v3060
    %v4006 = vunpack.c.l.b16 %v3061
    %v4007 = vunpack.c.h.b16 %v3061
    %v4008 = vunpack.c.l.b16 %v3062
    %v4009 = vunpack.c.l.b16 %v3063
    %v4010 = vunpack.c.h.b16 %v3063
    %v4011 = vunpack.c.l.b16 %v3064
    %v4012 = vunpack.c.h.b16 %v3064
    %v4013 = vunpack.c.l.b16 %v3065
    %v4014 = vunpack.c.l.b16 %v3066
    %v4015 = vunpack.c.h.b16 %v3066
    %v4016 = vunpack.c.l.b16 %v3067
    %v4017 = vunpack.c.h.b16 %v3067
    %v4018 = vunpack.c.l.b16 %v3068
    %v4019 = vunpack.c.l.b16 %v3069
    %v4020 = vunpack.c.h.b16 %v3069
    %v4021 = vunpack.c.l.b16 %v3070
    %v4022 = vunpack.c.h.b16 %v3070
    %v4023 = vunpack.c.l.b16 %v3071
    %v4024 = vunpack.c.l.b16 %v3072
    %v4025 = vunpack.c.h.b16 %v3072
    %v4026 = vunpack.c.l.b16 %v3073
    %v4027 = vunpack.c.h.b16 %v3073
    %v4028 = vunpack.c.l.b16 %v3074
    %v4029 = vunpack.c.l.b16 %v3075
    %v4030 = vunpack.c.h.b16 %v3075
    %v4031 = vunpack.c.l.b16 %v3076
    %v4032 = vunpack.c.h.b16 %v3076
    %v4033 = vunpack.c.l.b16 %v3077
    %v4034 = vunpack.c.l.b16 %v3078
    %v4035 = vunpack.c.h.b16 %v3078
    %v4036 = vunpack.c.l.b16 %v3079
    %v4037 = vunpack.c.h.b16 %v3079
    %v4038 = vunpack.c.l.b16 %v3080
    %v4039 = vunpack.c.l.b16 %v3081
    %v4040 = vunpack.c.h.b16 %v3081
    %v4041 = vunpack.c.l.b16 %v3082
    %v4042 = vunpack.c.h.b16 %v3082
    %v4043 = vunpack.c.l.b16 %v3083
    %v4044 = vunpack.c.l.b16 %v3084
    %v4045 = vunpack.c.h.b16 %v3084
    %v4046 = vunpack.c.l.b16 %v3085
    %v4047 = vunpack.c.h.b16 %v3085
    %v4048 = vunpack.c.l.b16 %v3086
    %v4049 = vunpack.c.l.b16 %v3087
    %v4050 = vunpack.c.h.b16 %v3087
    %v4051 = vunpack.c.l.b16 %v3088
    %v4052 = vunpack.c.h.b16 %v3088
    %v4053 = vunpack.c.l.b16 %v3089
    %v4054 = vunpack.c.l.b16 %v3090
    %v4055 = vunpack.c.h.b16 %v3090
    %v4056 = vunpack.c.l.b16 %v3091
    %v4057 = vunpack.c.h.b16 %v3091
    %v4058 = vunpack.c.l.b16 %v3092
    %v4059 = vunpack.c.l.b16 %v3093
    %v4060 = vunpack.c.h.b16 %v3093
    %v4061 = vunpack.c.l.b16 %v3094
    %v4062 = vunpack.c.h.b16 %v3094
    %v4063 = vunpack.c.l.b16 %v3095
    %v4064 = vunpack.c.l.b16 %v3096
    %v4065 = vunpack.c.h.b16 %v3096
    %v4066 = vunpack.c.l.b16 %v3097
    %v4067 = vunpack.c.h.b16 %v3097
    %v4068 = vunpack.c.l.b16 %v3098
    %v4069 = vunpack.c.l.b16 %v3099
    %v4070 = vunpack.c.h.b16 %v3099
    %v4071 = vunpack.c.l.b16 %v3100
    %v4072 = vunpack.c.h.b16 %v3100
    %v4073 = vunpack.c.l.b16 %v3101
    %v4074 = vunpack.c.l.b16 %v3102
    %v4075 = vunpack.c.h.b16 %v3102
    %v4076 = vunpack.c.l.b16 %v3103
    %v4077 = vunpack.c.h.b16 %v3103
    %v4078 = vunpack.c.l.b16 %v3104
    %v4079 = vunpack.c.l.b16 %v3105
    %v4080 = vunpack.c.h.b16 %v3105
    %v4081 = vunpack.c.l.b16 %v3106
    %v4082 = vunpack.c.h.b16 %v3106
    %v4083 = vunpack.c.l.b16 %v3107
    %v4084 = vunpack.c.l.b16 %v3108
    %v4085 = vunpack.c.h.b16 %v3108
    %v4086 = vunpack.c.l.b16 %v3109
    %v4087 = vunpack.c.h.b16 %v3109
    %v4088 = vunpack.c.l.b16 %v3110
    %v4089 = vunpack.c.l.b16 %v3111
    %v4090 = vunpack.c.h.b16 %v3111
    %v4091 = vunpack.c.l.b16 %v3112
    %v4092 = vunpack.c.h.b16 %v3112
    %v4093 = vunpack.c.l.b16 %v3113
    %v4094 = vunpack.c.l.b16 %v3114
    %v4095 = vunpack.c.h.b16 %v3114
    %v4096 = vunpack.c.l.b16 %v3115
    %v4097 = vunpack.c.h.b16 %v3115
    %v4098 = vunpack.c.l.b16 %v3116
    %v4099 = vunpack.c.l.b16 %v3117
    %v4100 = vunpack.c.h.b16 %v3117
    %v4101 = vunpack.c.l.b16 %v3118
    %v4102 = vunpack.c.h.b16 %v3118
    %v4103 = vunpack.c.l.b16 %v3119
    %v4104 = vunpack.c.l.b16 %v3120
    %v4105 = vunpack.c.h.b16 %v3120
    %v4106 = vunpack.c.l.b16 %v3121
    %v4107 = vunpack.c.h.b16 %v3121
    %v4108 = vunpack.c.l.b16 %v3122
    %v4109 = vunpack.c.l.b16 %v3123
    %v4110 = vunpack.c.h.b16 %v3123
    %v4111 = vunpack.c.l.b16 %v3124
    %v4112 = vunpack.c.h.b16 %v3124
    %v4113 = vunpack.c.l.b16 %v3125
    %v4114 = vunpack.c.l.b16 %v3126
    %v4115 = vunpack.c.h.b16 %v3126
    %v4116 = vunpack.c.l.b16 %v3127
    %v4117 = vunpack.c.h.b16 %v3127
    %v4118 = vunpack.c.l.b16 %v3128
    %v4119 = vunpack.c.l.b16 %v3129
    %v4120 = vunpack.c.h.b16 %v3129
    %v4121 = vunpack.c.l.b16 %v3130
    %v4122 = vunpack.c.h.b16 %v3130
    %v4123 = vunpack.c.l.b16 %v3131
    %v4124 = vunpack.c.l.b16 %v3132
    %v4125 = vunpack.c.h.b16 %v3132
    %v4126 = vunpack.c.l.b16 %v3133
    %v4127 = vunpack.c.h.b16 %v3133
    %v4128 = vunpack.c.l.b16 %v3134
    %v4129 = vunpack.c.l.b16 %v3135
    %v4130 = vunpack.c.h.b16 %v3135
    %v4131 = vunpack.c.l.b16 %v3136
    %v4132 = vunpack.c.h.b16 %v3136
    %v4133 = vunpack.c.l.b16 %v3137
    %v4134 = vunpack.c.l.b16 %v3138
    %v4135 = vunpack.c.h.b16 %v3138
    %v4136 = vunpack.c.l.b16 %v3139
    %v4137 = vunpack.c.h.b16 %v3139
    %v4138 = vunpack.c.l.b16 %v3140
    %v4139 = vunpack.c.l.b16 %v3141
    %v4140 = vunpack.c.h.b16 %v3141
    %v4141 = vunpack.c.l.b16 %v3142
    %v4142 = vunpack.c.h.b16 %v3142
    %v4143 = vunpack.c.l.b16 %v3143
    %v4144 = vunpack.c.l.b16 %v3144
    %v4145 = vunpack.c.h.b16 %v3144
    %v4146 = vunpack.c.l.b16 %v3145
    %v4147 = vunpack.c.h.b16 %v3145
    %v4148 = vunpack.c.l.b16 %v3146
    %v4149 = vunpack.c.l.b16 %v3147
    %v4150 = vunpack.c.h.b16 %v3147
    %v4151 = vunpack.c.l.b16 %v3148
    %v4152 = vunpack.c.h.b16 %v3148
    %v4153 = vunpack.c.l.b16 %v3149
    %v4154 = vunpack.c.l.b16 %v3150
    %v4155 = vunpack.c.h.b16 %v3150
    %v4156 = vunpack.c.l.b16 %v3151
    %v4157 = vunpack.c.h.b16 %v3151
    %v4158 = vunpack.c.l.b16 %v3152
    %v4159 = vunpack.c.l.b16 %v3153
    %v4160 = vunpack.c.h.b16 %v3153
    %v4161 = vunpack.c.l.b16 %v3154
    %v4162 = vunpack.c.h.b16 %v3154
    %v4163 = vunpack.c.l.b16 %v3155
    %v4164 = vunpack.c.l.b16 %v3156
    %v4165 = vunpack.c.h.b16 %v3156
    %v4166 = vunpack.c.l.b16 %v3157
    %v4167 = vunpack.c.h.b16 %v3157
    %v4168 = vunpack.c.l.b16 %v3158
    %v4169 = vunpack.c.l.b16 %v3159
    %v4170 = vunpack.c.h.b16 %v3159
    %v4171 = vunpack.c.l.b16 %v3160
    %v4172 = vunpack.c.h.b16 %v3160
    %v4173 = vunpack.c.l.b16 %v3161
    %v4174 = vunpack.c.l.b16 %v3162
    %v4175 = vunpack.c.h.b16 %v3162
    %v4176 = vunpack.c.l.b16 %v3163
    %v4177 = vunpack.c.h.b16 %v3163
    %v4178 = vunpack.c.l.b16 %v3164
    %v4179 = vunpack.c.l.b16 %v3165
    %v4180 = vunpack.c.h.b16 %v3165
    %v4181 = vunpack.c.l.b16 %v3166
    %v4182 = vunpack.c.h.b16 %v3166
    %v4183 = vunpack.c.l.b16 %v3167
    %v4184 = vunpack.c.l.b16 %v3168
    %v4185 = vunpack.c.h.b16 %v3168
    %v4186 = vunpack.c.l.b16 %v3169
    %v4187 = vunpack.c.h.b16 %v3169
    %v4188 = vunpack.c.l.b16 %v3170
    %v4189 = vunpack.c.l.b16 %v3171
    %v4190 = vunpack.c.h.b16 %v3171
    %v4191 = vunpack.c.l.b16 %v3172
    %v4192 = vunpack.c.h.b16 %v3172
    %v4193 = vunpack.c.l.b16 %v3173
    %v4194 = vunpack.c.l.b16 %v3174
    %v4195 = vunpack.c.h.b16 %v3174
    %v4196 = vunpack.c.l.b16 %v3175
    %v4197 = vunpack.c.h.b16 %v3175
    %v4198 = vunpack.c.l.b16 %v3176
    %v4199 = vunpack.c.l.b16 %v3177
    %v4200 = vunpack.c.h.b16 %v3177
    %v4201 = vunpack.c.l.b16 %v3178
    %v4202 = vunpack.c.h.b16 %v3178
    %v4203 = vunpack.c.l.b16 %v3179
    %v4204 = vunpack.c.l.b16 %v3180
    %v4205 = vunpack.c.h.b16 %v3180
    %v4206 = vunpack.c.l.b16 %v3181
    %v4207 = vunpack.c.h.b16 %v3181
    %v4208 = vunpack.c.l.b16 %v3182
    %v4209 = vpack.c.b16 %v3589, %v3584
    %v4210 = vpack.c.b16 %v3590, %v3585
    %v4211 = vpack.c.b16 %v3591, %v3586
    %v4212 = vpack.c.b16 %v3592, %v3587
    %v4213 = vpack.c.b16 %v3593, %v3588
    %v4214 = vpack.c.b16 %v3599, %v3594
    %v4215 = vpack.c.b16 %v3600, %v3595
    %v4216 = vpack.c.b16 %v3601, %v3596
    %v4217 = vpack.c.b16 %v3602, %v3597
    %v4218 = vpack.c.b16 %v3603, %v3598
    %v4219 = vpack.c.b16 %v3609, %v3604
    %v4220 = vpack.c.b16 %v3610, %v3605
    %v4221 = vpack.c.b16 %v3611, %v3606
    %v4222 = vpack.c.b16 %v3612, %v3607
    %v4223 = vpack.c.b16 %v3613, %v3608
    %v4224 = vpack.c.b16 %v3619, %v3614
    %v4225 = vpack.c.b16 %v3620, %v3615
    %v4226 = vpack.c.b16 %v3621, %v3616
    %v4227 = vpack.c.b16 %v3622, %v3617
    %v4228 = vpack.c.b16 %v3623, %v3618
    %v4229 = vpack.c.b16 %v3629, %v3624
    %v4230 = vpack.c.b16 %v3630, %v3625
    %v4231 = vpack.c.b16 %v3631, %v3626
    %v4232 = vpack.c.b16 %v3632, %v3627
    %v4233 = vpack.c.b16 %v3633, %v3628
    %v4234 = vpack.c.b16 %v3639, %v3634
    %v4235 = vpack.c.b16 %v3640, %v3635
    %v4236 = vpack.c.b16 %v3641, %v3636
    %v4237 = vpack.c.b16 %v3642, %v3637
    %v4238 = vpack.c.b16 %v3643, %v3638
    %v4239 = vpack.c.b16 %v3649, %v3644
    %v4240 = vpack.c.b16 %v3650, %v3645
    %v4241 = vpack.c.b16 %v3651, %v3646
    %v4242 = vpack.c.b16 %v3652, %v3647
    %v4243 = vpack.c.b16 %v3653, %v3648
    %v4244 = vpack.c.b16 %v3659, %v3654
    %v4245 = vpack.c.b16 %v3660, %v3655
    %v4246 = vpack.c.b16 %v3661, %v3656
    %v4247 = vpack.c.b16 %v3662, %v3657
    %v4248 = vpack.c.b16 %v3663, %v3658
    %v4249 = vpack.c.b16 %v3669, %v3664
    %v4250 = vpack.c.b16 %v3670, %v3665
    %v4251 = vpack.c.b16 %v3671, %v3666
    %v4252 = vpack.c.b16 %v3672, %v3667
    %v4253 = vpack.c.b16 %v3673, %v3668
    %v4254 = vpack.c.b16 %v3679, %v3674
    %v4255 = vpack.c.b16 %v3680, %v3675
    %v4256 = vpack.c.b16 %v3681, %v3676
    %v4257 = vpack.c.b16 %v3682, %v3677
    %v4258 = vpack.c.b16 %v3683, %v3678
    %v4259 = vpack.c.b16 %v3689, %v3684
    %v4260 = vpack.c.b16 %v3690, %v3685
    %v4261 = vpack.c.b16 %v3691, %v3686
    %v4262 = vpack.c.b16 %v3692, %v3687
    %v4263 = vpack.c.b16 %v3693, %v3688
    %v4264 = vpack.c.b16 %v3699, %v3694
    %v4265 = vpack.c.b16 %v3700, %v3695
    %v4266 = vpack.c.b16 %v3701, %v3696
    %v4267 = vpack.c.b16 %v3702, %v3697
    %v4268 = vpack.c.b16 %v3703, %v3698
    %v4269 = vpack.c.b16 %v3709, %v3704
    %v4270 = vpack.c.b16 %v3710, %v3705
    %v4271 = vpack.c.b16 %v3711, %v3706
    %v4272 = vpack.c.b16 %v3712, %v3707
    %v4273 = vpack.c.b16 %v3713, %v3708
    %v4274 = vpack.c.b16 %v3719, %v3714
    %v4275 = vpack.c.b16 %v3720, %v3715
    %v4276 = vpack.c.b16 %v3721, %v3716
    %v4277 = vpack.c.b16 %v3722, %v3717
    %v4278 = vpack.c.b16 %v3723, %v3718
    %v4279 = vpack.c.b16 %v3729, %v3724
    %v4280 = vpack.c.b16 %v3730, %v3725
    %v4281 = vpack.c.b16 %v3731, %v3726
    %v4282 = vpack.c.b16 %v3732, %v3727
    %v4283 = vpack.c.b16 %v3733, %v3728
    %v4284 = vpack.c.b16 %v3739, %v3734
    %v4285 = vpack.c.b16 %v3740, %v3735
    %v4286 = vpack.c.b16 %v3741, %v3736
    %v4287 = vpack.c.b16 %v3742, %v3737
    %v4288 = vpack.c.b16 %v3743, %v3738
    %v4289 = vpack.c.b16 %v3749, %v3744
    %v4290 = vpack.c.b16 %v3750, %v3745
    %v4291 = vpack.c.b16 %v3751, %v3746
    %v4292 = vpack.c.b16 %v3752, %v3747
    %v4293 = vpack.c.b16 %v3753, %v3748
    %v4294 = vpack.c.b16 %v3759, %v3754
    %v4295 = vpack.c.b16 %v3760, %v3755
    %v4296 = vpack.c.b16 %v3761, %v3756
    %v4297 = vpack.c.b16 %v3762, %v3757
    %v4298 = vpack.c.b16 %v3763, %v3758
    %v4299 = vpack.c.b16 %v3769, %v3764
    %v4300 = vpack.c.b16 %v3770, %v3765
    %v4301 = vpack.c.b16 %v3771, %v3766
    %v4302 = vpack.c.b16 %v3772, %v3767
    %v4303 = vpack.c.b16 %v3773, %v3768
    %v4304 = vpack.c.b16 %v3779, %v3774
    %v4305 = vpack.c.b16 %v3780, %v3775
    %v4306 = vpack.c.b16 %v3781, %v3776
    %v4307 = vpack.c.b16 %v3782, %v3777
    %v4308 = vpack.c.b16 %v3783, %v3778
    %v4309 = vpack.c.b16 %v3789, %v3784
    %v4310 = vpack.c.b16 %v3790, %v3785
    %v4311 = vpack.c.b16 %v3791, %v3786
    %v4312 = vpack.c.b16 %v3792, %v3787
    %v4313 = vpack.c.b16 %v3793, %v3788
    %v4314 = vpack.c.b16 %v3799, %v3794
    %v4315 = vpack.c.b16 %v3800, %v3795
    %v4316 = vpack.c.b16 %v3801, %v3796
    %v4317 = vpack.c.b16 %v3802, %v3797
    %v4318 = vpack.c.b16 %v3803, %v3798
    %v4319 = vpack.c.b16 %v3809, %v3804
    %v4320 = vpack.c.b16 %v3810, %v3805
    %v4321 = vpack.c.b16 %v3811, %v3806
    %v4322 = vpack.c.b16 %v3812, %v3807
    %v4323 = vpack.c.b16 %v3813, %v3808
    %v4324 = vpack.c.b16 %v3819, %v3814
    %v4325 = vpack.c.b16 %v3820, %v3815
    %v4326 = vpack.c.b16 %v3821, %v3816
    %v4327 = vpack.c.b16 %v3822, %v3817
    %v4328 = vpack.c.b16 %v3823, %v3818
    %v4329 = vpack.c.b16 %v3829, %v3824
    %v4330 = vpack.c.b16 %v3830, %v3825
    %v4331 = vpack.c.b16 %v3831, %v3826
    %v4332 = vpack.c.b16 %v3832, %v3827
    %v4333 = vpack.c.b16 %v3833, %v3828
    %v4334 = vpack.c.b16 %v3839, %v3834
    %v4335 = vpack.c.b16 %v3840, %v3835
    %v4336 = vpack.c.b16 %v3841, %v3836
    %v4337 = vpack.c.b16 %v3842, %v3837
    %v4338 = vpack.c.b16 %v3843, %v3838
    %v4339 = vpack.c.b16 %v3849, %v3844
    %v4340 = vpack.c.b16 %v3850, %v3845
    %v4341 = vpack.c.b16 %v3851, %v3846
    %v4342 = vpack.c.b16 %v3852, %v3847
    %v4343 = vpack.c.b16 %v3853, %v3848
    %v4344 = vpack.c.b16 %v3859, %v3854
    %v4345 = vpack.c.b16 %v3860, %v3855
    %v4346 = vpack.c.b16 %v3861, %v3856
    %v4347 = vpack.c.b16 %v3862, %v3857
    %v4348 = vpack.c.b16 %v3863, %v3858
    %v4349 = vpack.c.b16 %v3869, %v3864
    %v4350 = vpack.c.b16 %v3870, %v3865
    %v4351 = vpack.c.b16 %v3871, %v3866
    %v4352 = vpack.c.b16 %v3872, %v3867
    %v4353 = vpack.c.b16 %v3873, %v3868
    %v4354 = vpack.c.b16 %v3879, %v3874
    %v4355 = vpack.c.b16 %v3880, %v3875
    %v4356 = vpack.c.b16 %v3881, %v3876
    %v4357 = vpack.c.b16 %v3882, %v3877
    %v4358 = vpack.c.b16 %v3883, %v3878
    %v4359 = vpack.c.b16 %v3889, %v3884
    %v4360 = vpack.c.b16 %v3890, %v3885
    %v4361 = vpack.c.b16 %v3891, %v3886
    %v4362 = vpack.c.b16 %v3892, %v3887
    %v4363 = vpack.c.b16 %v3893, %v3888
    %v4364 = vpack.c.b16 %v3899, %v3894
    %v4365 = vpack.c.b16 %v3900, %v3895
    %v4366 = vpack.c.b16 %v3901, %v3896
    %v4367 = vpack.c.b16 %v3902, %v3897
    %v4368 = vpack.c.b16 %v3903, %v3898
    %v4369 = vpack.c.b16 %v3909, %v3904
    %v4370 = vpack.c.b16 %v3910, %v3905
    %v4371 = vpack.c.b16 %v3911, %v3906
    %v4372 = vpack.c.b16 %v3912, %v3907
    %v4373 = vpack.c.b16 %v3913, %v3908
    %v4374 = vpack.c.b16 %v3919, %v3914
    %v4375 = vpack.c.b16 %v3920, %v3915
    %v4376 = vpack.c.b16 %v3921, %v3916
    %v4377 = vpack.c.b16 %v3922, %v3917
    %v4378 = vpack.c.b16 %v3923, %v3918
    %v4379 = vpack.c.b16 %v3929, %v3924
    %v4380 = vpack.c.b16 %v3930, %v3925
    %v4381 = vpack.c.b16 %v3931, %v3926
    %v4382 = vpack.c.b16 %v3932, %v3927
    %v4383 = vpack.c.b16 %v3933, %v3928
    %v4384 = vpack.c.b16 %v3939, %v3934
    %v4385 = vpack.c.b16 %v3940, %v3935
    %v4386 = vpack.c.b16 %v3941, %v3936
    %v4387 = vpack.c.b16 %v3942, %v3937
    %v4388 = vpack.c.b16 %v3943, %v3938
    %v4389 = vpack.c.b16 %v3949, %v3944
    %v4390 = vpack.c.b16 %v3950, %v3945
    %v4391 = vpack.c.b16 %v3951, %v3946
    %v4392 = vpack.c.b16 %v3952, %v3947
    %v4393 = vpack.c.b16 %v3953, %v3948
    %v4394 = vpack.c.b16 %v3959, %v3954
    %v4395 = vpack.c.b16 %v3960, %v3955
    %v4396 = vpack.c.b16 %v3961, %v3956
    %v4397 = vpack.c.b16 %v3962, %v3957
    %v4398 = vpack.c.b16 %v3963, %v3958
    %v4399 = vpack.c.b16 %v3969, %v3964
    %v4400 = vpack.c.b16 %v3970, %v3965
    %v4401 = vpack.c.b16 %v3971, %v3966
    %v4402 = vpack.c.b16 %v3972, %v3967
    %v4403 = vpack.c.b16 %v3973, %v3968
    %v4404 = vpack.c.b16 %v3979, %v3974
    %v4405 = vpack.c.b16 %v3980, %v3975
    %v4406 = vpack.c.b16 %v3981, %v3976
    %v4407 = vpack.c.b16 %v3982, %v3977
    %v4408 = vpack.c.b16 %v3983, %v3978
    %v4409 = vpack.c.b16 %v3989, %v3984
    %v4410 = vpack.c.b16 %v3990, %v3985
    %v4411 = vpack.c.b16 %v3991, %v3986
    %v4412 = vpack.c.b16 %v3992, %v3987
    %v4413 = vpack.c.b16 %v3993, %v3988
    %v4414 = vpack.c.b16 %v3999, %v3994
    %v4415 = vpack.c.b16 %v4000, %v3995
    %v4416 = vpack.c.b16 %v4001, %v3996
    %v4417 = vpack.c.b16 %v4002, %v3997
    %v4418 = vpack.c.b16 %v4003, %v3998
    %v4419 = vpack.c.b16 %v4009, %v4004
    %v4420 = vpack.c.b16 %v4010, %v4005
    %v4421 = vpack.c.b16 %v4011, %v4006
    %v4422 = vpack.c.b16 %v4012, %v4007
    %v4423 = vpack.c.b16 %v4013, %v4008
    %v4424 = vpack.c.b16 %v4019, %v4014
    %v4425 = vpack.c.b16 %v4020, %v4015
    %v4426 = vpack.c.b16 %v4021, %v4016
    %v4427 = vpack.c.b16 %v4022, %v4017
    %v4428 = vpack.c.b16 %v4023, %v4018
    %v4429 = vpack.c.b16 %v4029, %v4024
    %v4430 = vpack.c.b16 %v4030, %v4025
    %v4431 = vpack.c.b16 %v4031, %v4026
    %v4432 = vpack.c.b16 %v4032, %v4027
    %v4433 = vpack.c.b16 %v4033, %v4028
    %v4434 = vpack.c.b16 %v4039, %v4034
    %v4435 = vpack.c.b16 %v4040, %v4035
    %v4436 = vpack.c.b16 %v4041, %v4036
    %v4437 = vpack.c.b16 %v4042, %v4037
    %v4438 = vpack.c.b16 %v4043, %v4038
    %v4439 = vpack.c.b16 %v4049, %v4044
    %v4440 = vpack.c.b16 %v4050, %v4045
    %v4441 = vpack.c.b16 %v4051, %v4046
    %v4442 = vpack.c.b16 %v4052, %v4047
    %v4443 = vpack.c.b16 %v4053, %v4048
    %v4444 = vpack.c.b16 %v4059, %v4054
    %v4445 = vpack.c.b16 %v4060, %v4055
    %v4446 = vpack.c.b16 %v4061, %v4056
    %v4447 = vpack.c.b16 %v4062, %v4057
    %v4448 = vpack.c.b16 %v4063, %v4058
    %v4449 = vpack.c.b16 %v4069, %v4064
    %v4450 = vpack.c.b16 %v4070, %v4065
    %v4451 = vpack.c.b16 %v4071, %v4066
    %v4452 = vpack.c.b16 %v4072, %v4067
    %v4453 = vpack.c.b16 %v4073, %v4068
    %v4454 = vpack.c.b16 %v4079, %v4074
    %v4455 = vpack.c.b16 %v4080, %v4075
    %v4456 = vpack.c.b16 %v4081, %v4076
    %v4457 = vpack.c.b16 %v4082, %v4077
    %v4458 = vpack.c.b16 %v4083, %v4078
    %v4459 = vpack.c.b16 %v4089, %v4084
    %v4460 = vpack.c.b16 %v4090, %v4085
    %v4461 = vpack.c.b16 %v4091, %v4086
    %v4462 = vpack.c.b16 %v4092, %v4087
    %v4463 = vpack.c.b16 %v4093, %v4088
    %v4464 = vpack.c.b16 %v4099, %v4094
    %v4465 = vpack.c.b16 %v4100, %v4095
    %v4466 = vpack.c.b16 %v4101, %v4096
    %v4467 = vpack.c.b16 %v4102, %v4097
    %v4468 = vpack.c.b16 %v4103, %v4098
    %v4469 = vpack.c.b16 %v4109, %v4104
    %v4470 = vpack.c.b16 %v4110, %v4105
    %v4471 = vpack.c.b16 %v4111, %v4106
    %v4472 = vpack.c.b16 %v4112, %v4107
    %v4473 = vpack.c.b16 %v4113, %v4108
    %v4474 = vpack.c.b16 %v4119, %v4114
    %v4475 = vpack.c.b16 %v4120, %v4115
    %v4476 = vpack.c.b16 %v4121, %v4116
    %v4477 = vpack.c.b16 %v4122, %v4117
    %v4478 = vpack.c.b16 %v4123, %v4118
    %v4479 = vpack.c.b16 %v4129, %v4124
    %v4480 = vpack.c.b16 %v4130, %v4125
    %v4481 = vpack.c.b16 %v4131, %v4126
    %v4482 = vpack.c.b16 %v4132, %v4127
    %v4483 = vpack.c.b16 %v4133, %v4128
    %v4484 = vpack.c.b16 %v4139, %v4134
    %v4485 = vpack.c.b16 %v4140, %v4135
    %v4486 = vpack.c.b16 %v4141, %v4136
    %v4487 = vpack.c.b16 %v4142, %v4137
    %v4488 = vpack.c.b16 %v4143, %v4138
    %v4489 = vpack.c.b16 %v4149, %v4144
    %v4490 = vpack.c.b16 %v4150, %v4145
    %v4491 = vpack.c.b16 %v4151, %v4146
    %v4492 = vpack.c.b16 %v4152, %v4147
    %v4493 = vpack.c.b16 %v4153, %v4148
    %v4494 = vpack.c.b16 %v4159, %v4154
    %v4495 = vpack.c.b16 %v4160, %v4155
    %v4496 = vpack.c.b16 %v4161, %v4156
    %v4497 = vpack.c.b16 %v4162, %v4157
    %v4498 = vpack.c.b16 %v4163, %v4158
    %v4499 = vpack.c.b16 %v4169, %v4164
    %v4500 = vpack.c.b16 %v4170, %v4165
    %v4501 = vpack.c.b16 %v4171, %v4166
    %v4502 = vpack.c.b16 %v4172, %v4167
    %v4503 = vpack.c.b16 %v4173, %v4168
    %v4504 = vpack.c.b16 %v4179, %v4174
    %v4505 = vpack.c.b16 %v4180, %v4175
    %v4506 = vpack.c.b16 %v4181, %v4176
    %v4507 = vpack.c.b16 %v4182, %v4177
    %v4508 = vpack.c.b16 %v4183, %v4178
    %v4509 = vpack.c.b16 %v4189, %v4184
    %v4510 = vpack.c.b16 %v4190, %v4185
    %v4511 = vpack.c.b16 %v4191, %v4186
    %v4512 = vpack.c.b16 %v4192, %v4187
    %v4513 = vpack.c.b16 %v4193, %v4188
    %v4514 = vpack.c.b16 %v4199, %v4194
    %v4515 = vpack.c.b16 %v4200, %v4195
    %v4516 = vpack.c.b16 %v4201, %v4196
    %v4517 = vpack.c.b16 %v4202, %v4197
    %v4518 = vpack.c.b16 %v4203, %v4198
    %v4519 = vpack.c.b16 %v4204, %v4204
    %v4520 = vpack.c.b16 %v4205, %v4205
    %v4521 = vpack.c.b16 %v4206, %v4206
    %v4522 = vpack.c.b16 %v4207, %v4207
    %v4523 = vpack.c.b16 %v4208, %v4208
    %vm4834 = vcmask 850944
    %v4836 = vsel %vm4834, %v2803, 0
    %vm4838 = vcmask 1043456
    %v4840 = vsel %vm4838, %v4519, 0
    %v4843 = vsel %vm4838, %v4520, 0
    %v4846 = vsel %vm4838, %v4521, 0
    %v4849 = vsel %vm4838, %v4522, 0
    %v4852 = vsel %vm4838, %v4523, 0
    %4854 = vmatprep.subr.bf16.mxu0 %v4210
    %4855 = vmatpush1.bf16.msra.mxu0 %v4209
    %4856 = vmatprep.subr.bf16.mxu0 %v4215
    %4857 = vmatpush1.bf16.msra.mxu0 %v4214
    %4858 = vmatprep.subr.bf16.mxu0 %v4220
    %4859 = vmatpush1.bf16.msra.mxu0 %v4219
    %4860 = vmatprep.subr.bf16.mxu0 %v4225
    %4861 = vmatpush1.bf16.msra.mxu0 %v4224
    %4862 = vmatprep.subr.bf16.mxu0 %v4230
    %4863 = vmatpush1.bf16.msra.mxu0 %v4229
    %4864 = vmatprep.subr.bf16.mxu0 %v4235
    %4865 = vmatpush1.bf16.msra.mxu0 %v4234
    %4866 = vmatprep.subr.bf16.mxu0 %v4240
    %4867 = vmatpush1.bf16.msra.mxu0 %v4239
    %4868 = vmatprep.subr.bf16.mxu0 %v4245
    %4869 = vmatpush1.bf16.msra.mxu0 %v4244
    %4870 = vmatprep.subr.bf16.mxu0 %v4250
    %4871 = vmatpush1.bf16.msra.mxu0 %v4249
    %4872 = vmatprep.subr.bf16.mxu0 %v4255
    %4873 = vmatpush1.bf16.msra.mxu0 %v4254
    %4874 = vmatprep.subr.bf16.mxu0 %v4260
    %4875 = vmatpush1.bf16.msra.mxu0 %v4259
    %4876 = vmatprep.subr.bf16.mxu0 %v4265
    %4877 = vmatpush1.bf16.msra.mxu0 %v4264
    %4878 = vmatprep.subr.bf16.mxu0 %v4270
    %4879 = vmatpush1.bf16.msra.mxu0 %v4269
    %4880 = vmatprep.subr.bf16.mxu0 %v4275
    %4881 = vmatpush1.bf16.msra.mxu0 %v4274
    %4882 = vmatprep.subr.bf16.mxu0 %v4280
    %4883 = vmatpush1.bf16.msra.mxu0 %v4279
    %4884 = vmatprep.subr.bf16.mxu0 %v4285
    %4885 = vmatpush1.bf16.msra.mxu0 %v4284
    %4886 = vmatprep.mubr.bf16.mxu0 %v2797
    %4887 = vmatmul.mubr.bf16.gmra.mrb[0].mxu0 %v2796
    %v4888 = vpop.f32.mrb[0].mxu0
    %v4889 = vadd.f32 %v3187, %v4888
    %v4890 = vpop.f32.mrb[0].mxu0
    %v4891 = vadd.f32 %v3191, %v4890
    %v4892 = vpop.f32.mrb[0].mxu0
    %v4893 = vpop.f32.mrb[0].mxu0
    %4894 = vdwg.mxu0
    %4895 = vmatprep.subr.bf16.mxu0 %v4290
    %4896 = vmatpush1.bf16.msra.mxu0 %v4289
    %4897 = vmatprep.subr.bf16.mxu0 %v4295
    %4898 = vmatpush1.bf16.msra.mxu0 %v4294
    %4899 = vmatprep.subr.bf16.mxu0 %v4300
    %4900 = vmatpush1.bf16.msra.mxu0 %v4299
    %4901 = vmatprep.subr.bf16.mxu0 %v4305
    %4902 = vmatpush1.bf16.msra.mxu0 %v4304
    %4903 = vmatprep.subr.bf16.mxu0 %v4310
    %4904 = vmatpush1.bf16.msra.mxu0 %v4309
    %4905 = vmatprep.subr.bf16.mxu0 %v4315
    %4906 = vmatpush1.bf16.msra.mxu0 %v4314
    %4907 = vmatprep.subr.bf16.mxu0 %v4320
    %4908 = vmatpush1.bf16.msra.mxu0 %v4319
    %4909 = vmatprep.subr.bf16.mxu0 %v4325
    %4910 = vmatpush1.bf16.msra.mxu0 %v4324
    %4911 = vmatprep.subr.bf16.mxu0 %v4330
    %4912 = vmatpush1.bf16.msra.mxu0 %v4329
    %4913 = vmatprep.subr.bf16.mxu0 %v4335
    %4914 = vmatpush1.bf16.msra.mxu0 %v4334
    %4915 = vmatprep.subr.bf16.mxu0 %v4340
    %4916 = vmatpush1.bf16.msra.mxu0 %v4339
    %4917 = vmatprep.subr.bf16.mxu0 %v4345
    %4918 = vmatpush1.bf16.msra.mxu0 %v4344
    %4919 = vmatprep.subr.bf16.mxu0 %v4350
    %4920 = vmatpush1.bf16.msra.mxu0 %v4349
    %4921 = vmatprep.subr.bf16.mxu0 %v4355
    %4922 = vmatpush1.bf16.msra.mxu0 %v4354
    %4923 = vmatprep.subr.bf16.mxu0 %v4360
    %4924 = vmatpush1.bf16.msra.mxu0 %v4359
    %4925 = vmatprep.subr.bf16.mxu0 %v4365
    %4926 = vmatpush1.bf16.msra.mxu0 %v4364
    %4927 = vmatprep.mubr.bf16.mxu0 %v2799
    %4928 = vmatmul.mubr.bf16.gmra.mrb[0].mxu0 %v2798
    %v4929 = vpop.f32.mrb[0].mxu0
    %v4930 = vadd.f32 %v4889, %v4929
    %v4931 = vpop.f32.mrb[0].mxu0
    %v4932 = vadd.f32 %v4891, %v4931
    %v4933 = vpop.f32.mrb[0].mxu0
    %v4934 = vpop.f32.mrb[0].mxu0
    %4935 = vdwg.mxu0
    %4936 = vmatprep.subr.bf16.mxu0 %v4370
    %4937 = vmatpush1.bf16.msra.mxu0 %v4369
    %4938 = vmatprep.subr.bf16.mxu0 %v4375
    %4939 = vmatpush1.bf16.msra.mxu0 %v4374
    %4940 = vmatprep.subr.bf16.mxu0 %v4380
    %4941 = vmatpush1.bf16.msra.mxu0 %v4379
    %4942 = vmatprep.subr.bf16.mxu0 %v4385
    %4943 = vmatpush1.bf16.msra.mxu0 %v4384
    %4944 = vmatprep.subr.bf16.mxu0 %v4390
    %4945 = vmatpush1.bf16.msra.mxu0 %v4389
    %4946 = vmatprep.subr.bf16.mxu0 %v4395
    %4947 = vmatpush1.bf16.msra.mxu0 %v4394
    %4948 = vmatprep.subr.bf16.mxu0 %v4400
    %4949 = vmatpush1.bf16.msra.mxu0 %v4399
    %4950 = vmatprep.subr.bf16.mxu0 %v4405
    %4951 = vmatpush1.bf16.msra.mxu0 %v4404
    %4952 = vmatprep.subr.bf16.mxu0 %v4410
    %4953 = vmatpush1.bf16.msra.mxu0 %v4409
    %4954 = vmatprep.subr.bf16.mxu0 %v4415
    %4955 = vmatpush1.bf16.msra.mxu0 %v4414
    %4956 = vmatprep.subr.bf16.mxu0 %v4420
    %4957 = vmatpush1.bf16.msra.mxu0 %v4419
    %4958 = vmatprep.subr.bf16.mxu0 %v4425
    %4959 = vmatpush1.bf16.msra.mxu0 %v4424
    %4960 = vmatprep.subr.bf16.mxu0 %v4430
    %4961 = vmatpush1.bf16.msra.mxu0 %v4429
    %4962 = vmatprep.subr.bf16.mxu0 %v4435
    %4963 = vmatpush1.bf16.msra.mxu0 %v4434
    %4964 = vmatprep.subr.bf16.mxu0 %v4440
    %4965 = vmatpush1.bf16.msra.mxu0 %v4439
    %4966 = vmatprep.subr.bf16.mxu0 %v4445
    %4967 = vmatpush1.bf16.msra.mxu0 %v4444
    %4968 = vmatprep.mubr.bf16.mxu0 %v2801
    %4969 = vmatmul.mubr.bf16.gmra.mrb[0].mxu0 %v2800
    %v4970 = vpop.f32.mrb[0].mxu0
    %v4971 = vadd.f32 %v4930, %v4970
    %v4972 = vpop.f32.mrb[0].mxu0
    %v4973 = vadd.f32 %v4932, %v4972
    %v4974 = vpop.f32.mrb[0].mxu0
    %v4975 = vpop.f32.mrb[0].mxu0
    %4976 = vdwg.mxu0
    %4977 = vmatprep.subr.bf16.mxu0 %v4450
    %4978 = vmatpush1.bf16.msra.mxu0 %v4449
    %4979 = vmatprep.subr.bf16.mxu0 %v4455
    %4980 = vmatpush1.bf16.msra.mxu0 %v4454
    %4981 = vmatprep.subr.bf16.mxu0 %v4460
    %4982 = vmatpush1.bf16.msra.mxu0 %v4459
    %4983 = vmatprep.subr.bf16.mxu0 %v4465
    %4984 = vmatpush1.bf16.msra.mxu0 %v4464
    %4985 = vmatprep.subr.bf16.mxu0 %v4470
    %4986 = vmatpush1.bf16.msra.mxu0 %v4469
    %4987 = vmatprep.subr.bf16.mxu0 %v4475
    %4988 = vmatpush1.bf16.msra.mxu0 %v4474
    %4989 = vmatprep.subr.bf16.mxu0 %v4480
    %4990 = vmatpush1.bf16.msra.mxu0 %v4479
    %4991 = vmatprep.subr.bf16.mxu0 %v4485
    %4992 = vmatpush1.bf16.msra.mxu0 %v4484
    %4993 = vmatprep.subr.bf16.mxu0 %v4490
    %4994 = vmatpush1.bf16.msra.mxu0 %v4489
    %4995 = vmatprep.subr.bf16.mxu0 %v4495
    %4996 = vmatpush1.bf16.msra.mxu0 %v4494
    %4997 = vmatprep.subr.bf16.mxu0 %v4500
    %4998 = vmatpush1.bf16.msra.mxu0 %v4499
    %4999 = vmatprep.subr.bf16.mxu0 %v4505
    %5000 = vmatpush1.bf16.msra.mxu0 %v4504
    %5001 = vmatprep.subr.bf16.mxu0 %v4510
    %5002 = vmatpush1.bf16.msra.mxu0 %v4509
    %5003 = vmatprep.subr.bf16.mxu0 %v4515
    %5004 = vmatpush1.bf16.msra.mxu0 %v4514
    %5005 = vmatprep.subr.bf16.mxu0 %v4843
    %5006 = vmatpush1.bf16.msra.mxu0 %v4840
    %5007 = vmatprep.subr.bf16.mxu0 0
    %5008 = vmatpush1.bf16.msra.mxu0 0
    %5009 = vmatprep.mubr.bf16.mxu0 %v4836
    %5010 = vmatmul.mubr.bf16.gmra.mrb[0].mxu0 %v2802
    %v5011 = vpop.f32.mrb[0].mxu0
    %v5012 = vadd.f32 %v4971, %v5011
    %v5013 = vpop.f32.mrb[0].mxu0
    %v5014 = vadd.f32 %v4973, %v5013
    %v5015 = vpop.f32.mrb[0].mxu0
    %v5016 = vpop.f32.mrb[0].mxu0
    %5017 = vdwg.mxu0
    %5018 = vmatprep.subr.bf16.mxu0 %v4212
    %5019 = vmatpush1.bf16.msra.mxu0 %v4211
    %5020 = vmatprep.subr.bf16.mxu0 %v4217
    %5021 = vmatpush1.bf16.msra.mxu0 %v4216
    %5022 = vmatprep.subr.bf16.mxu0 %v4222
    %5023 = vmatpush1.bf16.msra.mxu0 %v4221
    %5024 = vmatprep.subr.bf16.mxu0 %v4227
    %5025 = vmatpush1.bf16.msra.mxu0 %v4226
    %5026 = vmatprep.subr.bf16.mxu0 %v4232
    %5027 = vmatpush1.bf16.msra.mxu0 %v4231
    %5028 = vmatprep.subr.bf16.mxu0 %v4237
    %5029 = vmatpush1.bf16.msra.mxu0 %v4236
    %5030 = vmatprep.subr.bf16.mxu0 %v4242
    %5031 = vmatpush1.bf16.msra.mxu0 %v4241
    %5032 = vmatprep.subr.bf16.mxu0 %v4247
    %5033 = vmatpush1.bf16.msra.mxu0 %v4246
    %5034 = vmatprep.subr.bf16.mxu0 %v4252
    %5035 = vmatpush1.bf16.msra.mxu0 %v4251
    %5036 = vmatprep.subr.bf16.mxu0 %v4257
    %5037 = vmatpush1.bf16.msra.mxu0 %v4256
    %5038 = vmatprep.subr.bf16.mxu0 %v4262
    %5039 = vmatpush1.bf16.msra.mxu0 %v4261
    %5040 = vmatprep.subr.bf16.mxu0 %v4267
    %5041 = vmatpush1.bf16.msra.mxu0 %v4266
    %5042 = vmatprep.subr.bf16.mxu0 %v4272
    %5043 = vmatpush1.bf16.msra.mxu0 %v4271
    %5044 = vmatprep.subr.bf16.mxu0 %v4277
    %5045 = vmatpush1.bf16.msra.mxu0 %v4276
    %5046 = vmatprep.subr.bf16.mxu0 %v4282
    %5047 = vmatpush1.bf16.msra.mxu0 %v4281
    %5048 = vmatprep.subr.bf16.mxu0 %v4287
    %5049 = vmatpush1.bf16.msra.mxu0 %v4286
    %5050 = vmatprep.mubr.bf16.mxu0 %v2797
    %5051 = vmatmul.mubr.bf16.gmra.mrb[0].mxu0 %v2796
    %v5052 = vpop.f32.mrb[0].mxu0
    %v5053 = vadd.f32 %v3195, %v5052
    %v5054 = vpop.f32.mrb[0].mxu0
    %v5055 = vadd.f32 %v3199, %v5054
    %v5056 = vpop.f32.mrb[0].mxu0
    %v5057 = vpop.f32.mrb[0].mxu0
    %5058 = vdwg.mxu0
    %5059 = vmatprep.subr.bf16.mxu0 %v4292
    %5060 = vmatpush1.bf16.msra.mxu0 %v4291
    %5061 = vmatprep.subr.bf16.mxu0 %v4297
    %5062 = vmatpush1.bf16.msra.mxu0 %v4296
    %5063 = vmatprep.subr.bf16.mxu0 %v4302
    %5064 = vmatpush1.bf16.msra.mxu0 %v4301
    %5065 = vmatprep.subr.bf16.mxu0 %v4307
    %5066 = vmatpush1.bf16.msra.mxu0 %v4306
    %5067 = vmatprep.subr.bf16.mxu0 %v4312
    %5068 = vmatpush1.bf16.msra.mxu0 %v4311
    %5069 = vmatprep.subr.bf16.mxu0 %v4317
    %5070 = vmatpush1.bf16.msra.mxu0 %v4316
    %5071 = vmatprep.subr.bf16.mxu0 %v4322
    %5072 = vmatpush1.bf16.msra.mxu0 %v4321
    %5073 = vmatprep.subr.bf16.mxu0 %v4327
    %5074 = vmatpush1.bf16.msra.mxu0 %v4326
    %5075 = vmatprep.subr.bf16.mxu0 %v4332
    %5076 = vmatpush1.bf16.msra.mxu0 %v4331
    %5077 = vmatprep.subr.bf16.mxu0 %v4337
    %5078 = vmatpush1.bf16.msra.mxu0 %v4336
    %5079 = vmatprep.subr.bf16.mxu0 %v4342
    %5080 = vmatpush1.bf16.msra.mxu0 %v4341
    %5081 = vmatprep.subr.bf16.mxu0 %v4347
    %5082 = vmatpush1.bf16.msra.mxu0 %v4346
    %5083 = vmatprep.subr.bf16.mxu0 %v4352
    %5084 = vmatpush1.bf16.msra.mxu0 %v4351
    %5085 = vmatprep.subr.bf16.mxu0 %v4357
    %5086 = vmatpush1.bf16.msra.mxu0 %v4356
    %5087 = vmatprep.subr.bf16.mxu0 %v4362
    %5088 = vmatpush1.bf16.msra.mxu0 %v4361
    %5089 = vmatprep.subr.bf16.mxu0 %v4367
    %5090 = vmatpush1.bf16.msra.mxu0 %v4366
    %5091 = vmatprep.mubr.bf16.mxu0 %v2799
    %5092 = vmatmul.mubr.bf16.gmra.mrb[0].mxu0 %v2798
    %v5093 = vpop.f32.mrb[0].mxu0
    %v5094 = vadd.f32 %v5053, %v5093
    %v5095 = vpop.f32.mrb[0].mxu0
    %v5096 = vadd.f32 %v5055, %v5095
    %v5097 = vpop.f32.mrb[0].mxu0
    %v5098 = vpop.f32.mrb[0].mxu0
    %5099 = vdwg.mxu0
    %5100 = vmatprep.subr.bf16.mxu0 %v4372
    %5101 = vmatpush1.bf16.msra.mxu0 %v4371
    %5102 = vmatprep.subr.bf16.mxu0 %v4377
    %5103 = vmatpush1.bf16.msra.mxu0 %v4376
    %5104 = vmatprep.subr.bf16.mxu0 %v4382
    %5105 = vmatpush1.bf16.msra.mxu0 %v4381
    %5106 = vmatprep.subr.bf16.mxu0 %v4387
    %5107 = vmatpush1.bf16.msra.mxu0 %v4386
    %5108 = vmatprep.subr.bf16.mxu0 %v4392
    %5109 = vmatpush1.bf16.msra.mxu0 %v4391
    %5110 = vmatprep.subr.bf16.mxu0 %v4397
    %5111 = vmatpush1.bf16.msra.mxu0 %v4396
    %5112 = vmatprep.subr.bf16.mxu0 %v4402
    %5113 = vmatpush1.bf16.msra.mxu0 %v4401
    %5114 = vmatprep.subr.bf16.mxu0 %v4407
    %5115 = vmatpush1.bf16.msra.mxu0 %v4406
    %5116 = vmatprep.subr.bf16.mxu0 %v4412
    %5117 = vmatpush1.bf16.msra.mxu0 %v4411
    %5118 = vmatprep.subr.bf16.mxu0 %v4417
    %5119 = vmatpush1.bf16.msra.mxu0 %v4416
    %5120 = vmatprep.subr.bf16.mxu0 %v4422
    %5121 = vmatpush1.bf16.msra.mxu0 %v4421
    %5122 = vmatprep.subr.bf16.mxu0 %v4427
    %5123 = vmatpush1.bf16.msra.mxu0 %v4426
    %5124 = vmatprep.subr.bf16.mxu0 %v4432
    %5125 = vmatpush1.bf16.msra.mxu0 %v4431
    %5126 = vmatprep.subr.bf16.mxu0 %v4437
    %5127 = vmatpush1.bf16.msra.mxu0 %v4436
    %5128 = vmatprep.subr.bf16.mxu0 %v4442
    %5129 = vmatpush1.bf16.msra.mxu0 %v4441
    %5130 = vmatprep.subr.bf16.mxu0 %v4447
    %5131 = vmatpush1.bf16.msra.mxu0 %v4446
    %5132 = vmatprep.mubr.bf16.mxu0 %v2801
    %5133 = vmatmul.mubr.bf16.gmra.mrb[0].mxu0 %v2800
    %v5134 = vpop.f32.mrb[0].mxu0
    %v5135 = vadd.f32 %v5094, %v5134
    %v5136 = vpop.f32.mrb[0].mxu0
    %v5137 = vadd.f32 %v5096, %v5136
    %v5138 = vpop.f32.mrb[0].mxu0
    %v5139 = vpop.f32.mrb[0].mxu0
    %5140 = vdwg.mxu0
    %5141 = vmatprep.subr.bf16.mxu0 %v4452
    %5142 = vmatpush1.bf16.msra.mxu0 %v4451
    %5143 = vmatprep.subr.bf16.mxu0 %v4457
    %5144 = vmatpush1.bf16.msra.mxu0 %v4456
    %5145 = vmatprep.subr.bf16.mxu0 %v4462
    %5146 = vmatpush1.bf16.msra.mxu0 %v4461
    %5147 = vmatprep.subr.bf16.mxu0 %v4467
    %5148 = vmatpush1.bf16.msra.mxu0 %v4466
    %5149 = vmatprep.subr.bf16.mxu0 %v4472
    %5150 = vmatpush1.bf16.msra.mxu0 %v4471
    %5151 = vmatprep.subr.bf16.mxu0 %v4477
    %5152 = vmatpush1.bf16.msra.mxu0 %v4476
    %5153 = vmatprep.subr.bf16.mxu0 %v4482
    %5154 = vmatpush1.bf16.msra.mxu0 %v4481
    %5155 = vmatprep.subr.bf16.mxu0 %v4487
    %5156 = vmatpush1.bf16.msra.mxu0 %v4486
    %5157 = vmatprep.subr.bf16.mxu0 %v4492
    %5158 = vmatpush1.bf16.msra.mxu0 %v4491
    %5159 = vmatprep.subr.bf16.mxu0 %v4497
    %5160 = vmatpush1.bf16.msra.mxu0 %v4496
    %5161 = vmatprep.subr.bf16.mxu0 %v4502
    %5162 = vmatpush1.bf16.msra.mxu0 %v4501
    %5163 = vmatprep.subr.bf16.mxu0 %v4507
    %5164 = vmatpush1.bf16.msra.mxu0 %v4506
    %5165 = vmatprep.subr.bf16.mxu0 %v4512
    %5166 = vmatpush1.bf16.msra.mxu0 %v4511
    %5167 = vmatprep.subr.bf16.mxu0 %v4517
    %5168 = vmatpush1.bf16.msra.mxu0 %v4516
    %5169 = vmatprep.subr.bf16.mxu0 %v4849
    %5170 = vmatpush1.bf16.msra.mxu0 %v4846
    %5171 = vmatprep.subr.bf16.mxu0 0
    %5172 = vmatpush1.bf16.msra.mxu0 0
    %5173 = vmatprep.mubr.bf16.mxu0 %v4836
    %5174 = vmatmul.mubr.bf16.gmra.mrb[0].mxu0 %v2802
    %v5175 = vpop.f32.mrb[0].mxu0
    %v5176 = vadd.f32 %v5135, %v5175
    %v5177 = vpop.f32.mrb[0].mxu0
    %v5178 = vadd.f32 %v5137, %v5177
    %v5179 = vpop.f32.mrb[0].mxu0
    %v5180 = vpop.f32.mrb[0].mxu0
    %5181 = vdwg.mxu0
    %5182 = vmatprep.subr.bf16.mxu0 0
    %5183 = vmatpush1.bf16.msra.mxu0 %v4213
    %5184 = vmatprep.subr.bf16.mxu0 0
    %5185 = vmatpush1.bf16.msra.mxu0 %v4218
    %5186 = vmatprep.subr.bf16.mxu0 0
    %5187 = vmatpush1.bf16.msra.mxu0 %v4223
    %5188 = vmatprep.subr.bf16.mxu0 0
    %5189 = vmatpush1.bf16.msra.mxu0 %v4228
    %5190 = vmatprep.subr.bf16.mxu0 0
    %5191 = vmatpush1.bf16.msra.mxu0 %v4233
    %5192 = vmatprep.subr.bf16.mxu0 0
    %5193 = vmatpush1.bf16.msra.mxu0 %v4238
    %5194 = vmatprep.subr.bf16.mxu0 0
    %5195 = vmatpush1.bf16.msra.mxu0 %v4243
    %5196 = vmatprep.subr.bf16.mxu0 0
    %5197 = vmatpush1.bf16.msra.mxu0 %v4248
    %5198 = vmatprep.subr.bf16.mxu0 0
    %5199 = vmatpush1.bf16.msra.mxu0 %v4253
    %5200 = vmatprep.subr.bf16.mxu0 0
    %5201 = vmatpush1.bf16.msra.mxu0 %v4258
    %5202 = vmatprep.subr.bf16.mxu0 0
    %5203 = vmatpush1.bf16.msra.mxu0 %v4263
    %5204 = vmatprep.subr.bf16.mxu0 0
    %5205 = vmatpush1.bf16.msra.mxu0 %v4268
    %5206 = vmatprep.subr.bf16.mxu0 0
    %5207 = vmatpush1.bf16.msra.mxu0 %v4273
    %5208 = vmatprep.subr.bf16.mxu0 0
    %5209 = vmatpush1.bf16.msra.mxu0 %v4278
    %5210 = vmatprep.subr.bf16.mxu0 0
    %5211 = vmatpush1.bf16.msra.mxu0 %v4283
    %5212 = vmatprep.subr.bf16.mxu0 0
    %5213 = vmatpush1.bf16.msra.mxu0 %v4288
    %5214 = vmatprep.mubr.bf16.mxu0 %v2797
    %5215 = vmatmul.mubr.bf16.gmra.mrb[0].mxu0 %v2796
    %v5216 = vpop.f32.mrb[0].mxu0
    %v5217 = vadd.f32 %v3203, %v5216
    %v5218 = vpop.f32.mrb[0].mxu0
    %v5219 = vpop.f32.mrb[0].mxu0
    %v5220 = vpop.f32.mrb[0].mxu0
    %5221 = vdwg.mxu0
    %5222 = vmatprep.subr.bf16.mxu0 0
    %5223 = vmatpush1.bf16.msra.mxu0 %v4293
    %5224 = vmatprep.subr.bf16.mxu0 0
    %5225 = vmatpush1.bf16.msra.mxu0 %v4298
    %5226 = vmatprep.subr.bf16.mxu0 0
    %5227 = vmatpush1.bf16.msra.mxu0 %v4303
    %5228 = vmatprep.subr.bf16.mxu0 0
    %5229 = vmatpush1.bf16.msra.mxu0 %v4308
    %5230 = vmatprep.subr.bf16.mxu0 0
    %5231 = vmatpush1.bf16.msra.mxu0 %v4313
    %5232 = vmatprep.subr.bf16.mxu0 0
    %5233 = vmatpush1.bf16.msra.mxu0 %v4318
    %5234 = vmatprep.subr.bf16.mxu0 0
    %5235 = vmatpush1.bf16.msra.mxu0 %v4323
    %5236 = vmatprep.subr.bf16.mxu0 0
    %5237 = vmatpush1.bf16.msra.mxu0 %v4328
    %5238 = vmatprep.subr.bf16.mxu0 0
    %5239 = vmatpush1.bf16.msra.mxu0 %v4333
    %5240 = vmatprep.subr.bf16.mxu0 0
    %5241 = vmatpush1.bf16.msra.mxu0 %v4338
    %5242 = vmatprep.subr.bf16.mxu0 0
    %5243 = vmatpush1.bf16.msra.mxu0 %v4343
    %5244 = vmatprep.subr.bf16.mxu0 0
    %5245 = vmatpush1.bf16.msra.mxu0 %v4348
    %5246 = vmatprep.subr.bf16.mxu0 0
    %5247 = vmatpush1.bf16.msra.mxu0 %v4353
    %5248 = vmatprep.subr.bf16.mxu0 0
    %5249 = vmatpush1.bf16.msra.mxu0 %v4358
    %5250 = vmatprep.subr.bf16.mxu0 0
    %5251 = vmatpush1.bf16.msra.mxu0 %v4363
    %5252 = vmatprep.subr.bf16.mxu0 0
    %5253 = vmatpush1.bf16.msra.mxu0 %v4368
    %5254 = vmatprep.mubr.bf16.mxu0 %v2799
    %5255 = vmatmul.mubr.bf16.gmra.mrb[0].mxu0 %v2798
    %v5256 = vpop.f32.mrb[0].mxu0
    %v5257 = vadd.f32 %v5217, %v5256
    %v5258 = vpop.f32.mrb[0].mxu0
    %v5259 = vpop.f32.mrb[0].mxu0
    %v5260 = vpop.f32.mrb[0].mxu0
    %5261 = vdwg.mxu0
    %5262 = vmatprep.subr.bf16.mxu0 0
    %5263 = vmatpush1.bf16.msra.mxu0 %v4373
    %5264 = vmatprep.subr.bf16.mxu0 0
    %5265 = vmatpush1.bf16.msra.mxu0 %v4378
    %5266 = vmatprep.subr.bf16.mxu0 0
    %5267 = vmatpush1.bf16.msra.mxu0 %v4383
    %5268 = vmatprep.subr.bf16.mxu0 0
    %5269 = vmatpush1.bf16.msra.mxu0 %v4388
    %5270 = vmatprep.subr.bf16.mxu0 0
    %5271 = vmatpush1.bf16.msra.mxu0 %v4393
    %5272 = vmatprep.subr.bf16.mxu0 0
    %5273 = vmatpush1.bf16.msra.mxu0 %v4398
    %5274 = vmatprep.subr.bf16.mxu0 0
    %5275 = vmatpush1.bf16.msra.mxu0 %v4403
    %5276 = vmatprep.subr.bf16.mxu0 0
    %5277 = vmatpush1.bf16.msra.mxu0 %v4408
    %5278 = vmatprep.subr.bf16.mxu0 0
    %5279 = vmatpush1.bf16.msra.mxu0 %v4413
    %5280 = vmatprep.subr.bf16.mxu0 0
    %5281 = vmatpush1.bf16.msra.mxu0 %v4418
    %5282 = vmatprep.subr.bf16.mxu0 0
    %5283 = vmatpush1.bf16.msra.mxu0 %v4423
    %5284 = vmatprep.subr.bf16.mxu0 0
    %5285 = vmatpush1.bf16.msra.mxu0 %v4428
    %5286 = vmatprep.subr.bf16.mxu0 0
    %5287 = vmatpush1.bf16.msra.mxu0 %v4433
    %5288 = vmatprep.subr.bf16.mxu0 0
    %5289 = vmatpush1.bf16.msra.mxu0 %v4438
    %5290 = vmatprep.subr.bf16.mxu0 0
    %5291 = vmatpush1.bf16.msra.mxu0 %v4443
    %5292 = vmatprep.subr.bf16.mxu0 0
    %5293 = vmatpush1.bf16.msra.mxu0 %v4448
    %5294 = vmatprep.mubr.bf16.mxu0 %v2801
    %5295 = vmatmul.mubr.bf16.gmra.mrb[0].mxu0 %v2800
    %v5296 = vpop.f32.mrb[0].mxu0
    %v5297 = vadd.f32 %v5257, %v5296
    %v5298 = vpop.f32.mrb[0].mxu0
    %v5299 = vpop.f32.mrb[0].mxu0
    %v5300 = vpop.f32.mrb[0].mxu0
    %5301 = vdwg.mxu0
    %5302 = vmatprep.subr.bf16.mxu0 0
    %5303 = vmatpush1.bf16.msra.mxu0 %v4453
    %5304 = vmatprep.subr.bf16.mxu0 0
    %5305 = vmatpush1.bf16.msra.mxu0 %v4458
    %5306 = vmatprep.subr.bf16.mxu0 0
    %5307 = vmatpush1.bf16.msra.mxu0 %v4463
    %5308 = vmatprep.subr.bf16.mxu0 0
    %5309 = vmatpush1.bf16.msra.mxu0 %v4468
    %5310 = vmatprep.subr.bf16.mxu0 0
    %5311 = vmatpush1.bf16.msra.mxu0 %v4473
    %5312 = vmatprep.subr.bf16.mxu0 0
    %5313 = vmatpush1.bf16.msra.mxu0 %v4478
    %5314 = vmatprep.subr.bf16.mxu0 0
    %5315 = vmatpush1.bf16.msra.mxu0 %v4483
    %5316 = vmatprep.subr.bf16.mxu0 0
    %5317 = vmatpush1.bf16.msra.mxu0 %v4488
    %5318 = vmatprep.subr.bf16.mxu0 0
    %5319 = vmatpush1.bf16.msra.mxu0 %v4493
    %5320 = vmatprep.subr.bf16.mxu0 0
    %5321 = vmatpush1.bf16.msra.mxu0 %v4498
    %5322 = vmatprep.subr.bf16.mxu0 0
    %5323 = vmatpush1.bf16.msra.mxu0 %v4503
    %5324 = vmatprep.subr.bf16.mxu0 0
    %5325 = vmatpush1.bf16.msra.mxu0 %v4508
    %5326 = vmatprep.subr.bf16.mxu0 0
    %5327 = vmatpush1.bf16.msra.mxu0 %v4513
    %5328 = vmatprep.subr.bf16.mxu0 0
    %5329 = vmatpush1.bf16.msra.mxu0 %v4518
    %5330 = vmatprep.subr.bf16.mxu0 0
    %5331 = vmatpush1.bf16.msra.mxu0 %v4852
    %5332 = vmatprep.subr.bf16.mxu0 0
    %5333 = vmatpush1.bf16.msra.mxu0 0
    %5334 = vmatprep.mubr.bf16.mxu0 %v4836
    %5335 = vmatmul.mubr.bf16.gmra.mrb[0].mxu0 %v2802
    %v5336 = vpop.f32.mrb[0].mxu0
    %v5337 = vadd.f32 %v5297, %v5336
    %v5338 = vpop.f32.mrb[0].mxu0
    %v5339 = vpop.f32.mrb[0].mxu0
    %v5340 = vpop.f32.mrb[0].mxu0
    %5341 = vdwg.mxu0
    %v5342 = vmax.f32 %v5012, 0.0
    %v5343 = vmax.f32 %v5014, 0.0
    %v5344 = vmax.f32 %v5176, 0.0
    %v5345 = vmax.f32 %v5178, 0.0
    %v5346 = vmax.f32 %v5337, 0.0
    %v5347 = vpack.c.bf16 %v5342, %v5342
    %v5348 = vpack.c.bf16 %v5343, %v5343
    %v5349 = vpack.c.bf16 %v5344, %v5344
    %v5350 = vpack.c.bf16 %v5345, %v5345
    %v5351 = vpack.c.bf16 %v5346, %v5346
    %s5352 = scalar_lea.vmem %s8, 4
    %v5353 = vld [vmem:[%s5352] ss:$8 sm:$0x3]
    %v5354 = vld [vmem:[%s5] sm:$0xff]
    %v5355 = vld [vmem:[%s5 + $0x8] sm:$0xff]
    %v5356 = vld [vmem:[%s5 + $0x10] sm:$0xff]
    %v5357 = vld [vmem:[%s5 + $0x18] sm:$0xff]
    %v5358 = vld [vmem:[%s5 + $0x20] sm:$0xff]
    %v5359 = vld [vmem:[%s5 + $0x28] sm:$0xff]
    %v5360 = vld [vmem:[%s5 + $0x30] sm:$0xff]
    %v5361 = vld [vmem:[%s5 + $0x38] sm:$0xff]
    %v5362 = vld [vmem:[%s5 + $0x40] sm:$0xff]
    %v5363 = vld [vmem:[%s5 + $0x48] sm:$0xff]
    %v5364 = vld [vmem:[%s5 + $0x50] sm:$0xff]
    %v5365 = vld [vmem:[%s5 + $0x58] sm:$0xff]
    %v5366 = vld [vmem:[%s5 + $0x60] sm:$0xff]
    %v5367 = vld [vmem:[%s5 + $0x68] sm:$0xff]
    %v5368 = vld [vmem:[%s5 + $0x70] sm:$0xff]
    %v5369 = vld [vmem:[%s5 + $0x78] sm:$0xff]
    %v5370 = vld [vmem:[%s5 + $0x80] sm:$0xff]
    %v5371 = vld [vmem:[%s5 + $0x88] sm:$0xff]
    %v5372 = vld [vmem:[%s5 + $0x90] sm:$0xff]
    %v5373 = vld [vmem:[%s5 + $0x98] sm:$0xff]
    %v5374 = vld [vmem:[%s5 + $0xa0] sm:$0xff]
    %v5375 = vld [vmem:[%s5 + $0xa8] sm:$0xff]
    %v5376 = vld [vmem:[%s5 + $0xb0] sm:$0xff]
    %v5377 = vld [vmem:[%s5 + $0xb8] sm:$0xff]
    %v5378 = vld [vmem:[%s5 + $0xc0] sm:$0xff]
    %v5379 = vld [vmem:[%s5 + $0xc8] sm:$0xff]
    %v5380 = vld [vmem:[%s5 + $0xd0] sm:$0xff]
    %v5381 = vld [vmem:[%s5 + $0xd8] sm:$0xff]
    %v5382 = vld [vmem:[%s5 + $0xe0] sm:$0xff]
    %v5383 = vld [vmem:[%s5 + $0xe8] sm:$0xff]
    %v5384 = vld [vmem:[%s5 + $0xf0] sm:$0xff]
    %v5385 = vld [vmem:[%s5 + $0xf8] sm:$0xff]
    %v5386 = vld [vmem:[%s5 + $0x100] sm:$0xff]
    %v5387 = vld [vmem:[%s5 + $0x108] sm:$0xff]
    %v5388 = vld [vmem:[%s5 + $0x110] sm:$0xff]
    %v5389 = vld [vmem:[%s5 + $0x118] sm:$0xff]
    %v5390 = vld [vmem:[%s5 + $0x120] sm:$0xff]
    %v5391 = vld [vmem:[%s5 + $0x128] sm:$0xff]
    %v5392 = vld [vmem:[%s5 + $0x130] sm:$0xff]
    %v5393 = vld [vmem:[%s5 + $0x138] sm:$0xff]
    %v5394 = vld [vmem:[%s5 + $0x140] sm:$0xff]
    %v5395 = vld [vmem:[%s5 + $0x148] sm:$0xff]
    %v5396 = vld [vmem:[%s5 + $0x150] sm:$0xff]
    %v5397 = vld [vmem:[%s5 + $0x158] sm:$0xff]
    %v5398 = vld [vmem:[%s5 + $0x160] sm:$0xff]
    %v5399 = vld [vmem:[%s5 + $0x168] sm:$0xff]
    %v5400 = vld [vmem:[%s5 + $0x170] sm:$0xff]
    %v5401 = vld [vmem:[%s5 + $0x178] sm:$0xff]
    %v5402 = vld [vmem:[%s5 + $0x180] sm:$0xff]
    %v5403 = vld [vmem:[%s5 + $0x188] sm:$0xff]
    %v5404 = vld [vmem:[%s5 + $0x190] sm:$0xff]
    %v5405 = vld [vmem:[%s5 + $0x198] sm:$0xff]
    %v5406 = vld [vmem:[%s5 + $0x1a0] sm:$0xff]
    %v5407 = vld [vmem:[%s5 + $0x1a8] sm:$0xff]
    %v5408 = vld [vmem:[%s5 + $0x1b0] sm:$0xff]
    %v5409 = vld [vmem:[%s5 + $0x1b8] sm:$0xff]
    %v5410 = vld [vmem:[%s5 + $0x1c0] sm:$0xff]
    %v5411 = vld [vmem:[%s5 + $0x1c8] sm:$0xff]
    %v5412 = vld [vmem:[%s5 + $0x1d0] sm:$0xff]
    %v5413 = vld [vmem:[%s5 + $0x1d8] sm:$0xff]
    %v5414 = vld [vmem:[%s5 + $0x1e0] sm:$0xff]
    %v5415 = vld [vmem:[%s5 + $0x1e8] sm:$0xff]
    %v5416 = vld [vmem:[%s5 + $0x1f0] sm:$0xff]
    %v5417 = vld [vmem:[%s5 + $0x1f8] sm:$0xff]
    %v5418 = vld [vmem:[%s5 + $0x200] sm:$0xff]
    %v5419 = vld [vmem:[%s5 + $0x208] sm:$0xff]
    %v5420 = vld [vmem:[%s5 + $0x210] sm:$0xff]
    %v5421 = vld [vmem:[%s5 + $0x218] sm:$0xff]
    %v5422 = vld [vmem:[%s5 + $0x220] sm:$0xff]
    %v5423 = vld [vmem:[%s5 + $0x228] sm:$0xff]
    %v5424 = vld [vmem:[%s5 + $0x230] sm:$0xff]
    %v5425 = vld [vmem:[%s5 + $0x238] sm:$0xff]
    %v5426 = vld [vmem:[%s5 + $0x240] sm:$0xff]
    %v5427 = vld [vmem:[%s5 + $0x248] sm:$0xff]
    %v5428 = vld [vmem:[%s5 + $0x250] sm:$0xff]
    %v5430 = vlaneseq
    %v5431 = vshrl.u32 %v5430, 7
    %v5432 = vsub.s32 0, %v5431
    %v5433 = vrot.slane %v5353, %v5432
    %v5434 = vlaneseq
    %v5435 = vshrl.u32 %v5434, 7
    %v5436 = vsub.s32 1, %v5435
    %v5437 = vrot.slane %v5353, %v5436
    %v5515 = vunpack.c.l.b16 %v5354
    %v5516 = vunpack.c.h.b16 %v5354
    %v5517 = vunpack.c.l.b16 %v5355
    %v5518 = vunpack.c.h.b16 %v5355
    %v5519 = vunpack.c.l.b16 %v5356
    %v5520 = vunpack.c.h.b16 %v5356
    %v5521 = vunpack.c.l.b16 %v5357
    %v5522 = vunpack.c.h.b16 %v5357
    %v5523 = vunpack.c.l.b16 %v5358
    %v5524 = vunpack.c.h.b16 %v5358
    %v5525 = vunpack.c.l.b16 %v5359
    %v5526 = vunpack.c.h.b16 %v5359
    %v5527 = vunpack.c.l.b16 %v5360
    %v5528 = vunpack.c.h.b16 %v5360
    %v5529 = vunpack.c.l.b16 %v5361
    %v5530 = vunpack.c.h.b16 %v5361
    %v5531 = vunpack.c.l.b16 %v5362
    %v5532 = vunpack.c.h.b16 %v5362
    %v5533 = vunpack.c.l.b16 %v5363
    %v5534 = vunpack.c.h.b16 %v5363
    %v5535 = vunpack.c.l.b16 %v5364
    %v5536 = vunpack.c.h.b16 %v5364
    %v5537 = vunpack.c.l.b16 %v5365
    %v5538 = vunpack.c.h.b16 %v5365
    %v5539 = vunpack.c.l.b16 %v5366
    %v5540 = vunpack.c.h.b16 %v5366
    %v5541 = vunpack.c.l.b16 %v5367
    %v5542 = vunpack.c.h.b16 %v5367
    %v5543 = vunpack.c.l.b16 %v5368
    %v5544 = vunpack.c.h.b16 %v5368
    %v5545 = vunpack.c.l.b16 %v5369
    %v5546 = vunpack.c.h.b16 %v5369
    %v5547 = vunpack.c.l.b16 %v5370
    %v5548 = vunpack.c.h.b16 %v5370
    %v5549 = vunpack.c.l.b16 %v5371
    %v5550 = vunpack.c.h.b16 %v5371
    %v5551 = vunpack.c.l.b16 %v5372
    %v5552 = vunpack.c.h.b16 %v5372
    %v5553 = vunpack.c.l.b16 %v5373
    %v5554 = vunpack.c.h.b16 %v5373
    %v5555 = vunpack.c.l.b16 %v5374
    %v5556 = vunpack.c.h.b16 %v5374
    %v5557 = vunpack.c.l.b16 %v5375
    %v5558 = vunpack.c.h.b16 %v5375
    %v5559 = vunpack.c.l.b16 %v5376
    %v5560 = vunpack.c.h.b16 %v5376
    %v5561 = vunpack.c.l.b16 %v5377
    %v5562 = vunpack.c.h.b16 %v5377
    %v5563 = vunpack.c.l.b16 %v5378
    %v5564 = vunpack.c.h.b16 %v5378
    %v5565 = vunpack.c.l.b16 %v5379
    %v5566 = vunpack.c.h.b16 %v5379
    %v5567 = vunpack.c.l.b16 %v5380
    %v5568 = vunpack.c.h.b16 %v5380
    %v5569 = vunpack.c.l.b16 %v5381
    %v5570 = vunpack.c.h.b16 %v5381
    %v5571 = vunpack.c.l.b16 %v5382
    %v5572 = vunpack.c.h.b16 %v5382
    %v5573 = vunpack.c.l.b16 %v5383
    %v5574 = vunpack.c.h.b16 %v5383
    %v5575 = vunpack.c.l.b16 %v5384
    %v5576 = vunpack.c.h.b16 %v5384
    %v5577 = vunpack.c.l.b16 %v5385
    %v5578 = vunpack.c.h.b16 %v5385
    %v5579 = vunpack.c.l.b16 %v5386
    %v5580 = vunpack.c.h.b16 %v5386
    %v5581 = vunpack.c.l.b16 %v5387
    %v5582 = vunpack.c.h.b16 %v5387
    %v5583 = vunpack.c.l.b16 %v5388
    %v5584 = vunpack.c.h.b16 %v5388
    %v5585 = vunpack.c.l.b16 %v5389
    %v5586 = vunpack.c.h.b16 %v5389
    %v5587 = vunpack.c.l.b16 %v5390
    %v5588 = vunpack.c.h.b16 %v5390
    %v5589 = vunpack.c.l.b16 %v5391
    %v5590 = vunpack.c.h.b16 %v5391
    %v5591 = vunpack.c.l.b16 %v5392
    %v5592 = vunpack.c.h.b16 %v5392
    %v5593 = vunpack.c.l.b16 %v5393
    %v5594 = vunpack.c.h.b16 %v5393
    %v5595 = vunpack.c.l.b16 %v5394
    %v5596 = vunpack.c.h.b16 %v5394
    %v5597 = vunpack.c.l.b16 %v5395
    %v5598 = vunpack.c.h.b16 %v5395
    %v5599 = vunpack.c.l.b16 %v5396
    %v5600 = vunpack.c.h.b16 %v5396
    %v5601 = vunpack.c.l.b16 %v5397
    %v5602 = vunpack.c.h.b16 %v5397
    %v5603 = vunpack.c.l.b16 %v5398
    %v5604 = vunpack.c.h.b16 %v5398
    %v5605 = vunpack.c.l.b16 %v5399
    %v5606 = vunpack.c.h.b16 %v5399
    %v5607 = vunpack.c.l.b16 %v5400
    %v5608 = vunpack.c.h.b16 %v5400
    %v5609 = vunpack.c.l.b16 %v5401
    %v5610 = vunpack.c.h.b16 %v5401
    %v5611 = vunpack.c.l.b16 %v5402
    %v5612 = vunpack.c.h.b16 %v5402
    %v5613 = vunpack.c.l.b16 %v5403
    %v5614 = vunpack.c.h.b16 %v5403
    %v5615 = vunpack.c.l.b16 %v5404
    %v5616 = vunpack.c.h.b16 %v5404
    %v5617 = vunpack.c.l.b16 %v5405
    %v5618 = vunpack.c.h.b16 %v5405
    %v5619 = vunpack.c.l.b16 %v5406
    %v5620 = vunpack.c.h.b16 %v5406
    %v5621 = vunpack.c.l.b16 %v5407
    %v5622 = vunpack.c.h.b16 %v5407
    %v5623 = vunpack.c.l.b16 %v5408
    %v5624 = vunpack.c.h.b16 %v5408
    %v5625 = vunpack.c.l.b16 %v5409
    %v5626 = vunpack.c.h.b16 %v5409
    %v5627 = vunpack.c.l.b16 %v5410
    %v5628 = vunpack.c.h.b16 %v5410
    %v5629 = vunpack.c.l.b16 %v5411
    %v5630 = vunpack.c.h.b16 %v5411
    %v5631 = vunpack.c.l.b16 %v5412
    %v5632 = vunpack.c.h.b16 %v5412
    %v5633 = vunpack.c.l.b16 %v5413
    %v5634 = vunpack.c.h.b16 %v5413
    %v5635 = vunpack.c.l.b16 %v5414
    %v5636 = vunpack.c.h.b16 %v5414
    %v5637 = vunpack.c.l.b16 %v5415
    %v5638 = vunpack.c.h.b16 %v5415
    %v5639 = vunpack.c.l.b16 %v5416
    %v5640 = vunpack.c.h.b16 %v5416
    %v5641 = vunpack.c.l.b16 %v5417
    %v5642 = vunpack.c.h.b16 %v5417
    %v5643 = vunpack.c.l.b16 %v5418
    %v5644 = vunpack.c.h.b16 %v5418
    %v5645 = vunpack.c.l.b16 %v5419
    %v5646 = vunpack.c.h.b16 %v5419
    %v5647 = vunpack.c.l.b16 %v5420
    %v5648 = vunpack.c.h.b16 %v5420
    %v5649 = vunpack.c.l.b16 %v5421
    %v5650 = vunpack.c.h.b16 %v5421
    %v5651 = vunpack.c.l.b16 %v5422
    %v5652 = vunpack.c.h.b16 %v5422
    %v5653 = vunpack.c.l.b16 %v5423
    %v5654 = vunpack.c.h.b16 %v5423
    %v5655 = vunpack.c.l.b16 %v5424
    %v5656 = vunpack.c.h.b16 %v5424
    %v5657 = vunpack.c.l.b16 %v5425
    %v5658 = vunpack.c.h.b16 %v5425
    %v5659 = vunpack.c.l.b16 %v5426
    %v5660 = vunpack.c.h.b16 %v5426
    %v5661 = vunpack.c.l.b16 %v5427
    %v5662 = vunpack.c.h.b16 %v5427
    %v5663 = vunpack.c.l.b16 %v5428
    %v5664 = vunpack.c.h.b16 %v5428
    %v5665 = vpack.c.b16 %v5517, %v5515
    %v5666 = vpack.c.b16 %v5518, %v5516
    %v5667 = vpack.c.b16 %v5521, %v5519
    %v5668 = vpack.c.b16 %v5522, %v5520
    %v5669 = vpack.c.b16 %v5525, %v5523
    %v5670 = vpack.c.b16 %v5526, %v5524
    %v5671 = vpack.c.b16 %v5529, %v5527
    %v5672 = vpack.c.b16 %v5530, %v5528
    %v5673 = vpack.c.b16 %v5533, %v5531
    %v5674 = vpack.c.b16 %v5534, %v5532
    %v5675 = vpack.c.b16 %v5537, %v5535
    %v5676 = vpack.c.b16 %v5538, %v5536
    %v5677 = vpack.c.b16 %v5541, %v5539
    %v5678 = vpack.c.b16 %v5542, %v5540
    %v5679 = vpack.c.b16 %v5545, %v5543
    %v5680 = vpack.c.b16 %v5546, %v5544
    %v5681 = vpack.c.b16 %v5549, %v5547
    %v5682 = vpack.c.b16 %v5550, %v5548
    %v5683 = vpack.c.b16 %v5553, %v5551
    %v5684 = vpack.c.b16 %v5554, %v5552
    %v5685 = vpack.c.b16 %v5557, %v5555
    %v5686 = vpack.c.b16 %v5558, %v5556
    %v5687 = vpack.c.b16 %v5561, %v5559
    %v5688 = vpack.c.b16 %v5562, %v5560
    %v5689 = vpack.c.b16 %v5565, %v5563
    %v5690 = vpack.c.b16 %v5566, %v5564
    %v5691 = vpack.c.b16 %v5569, %v5567
    %v5692 = vpack.c.b16 %v5570, %v5568
    %v5693 = vpack.c.b16 %v5573, %v5571
    %v5694 = vpack.c.b16 %v5574, %v5572
    %v5695 = vpack.c.b16 %v5577, %v5575
    %v5696 = vpack.c.b16 %v5578, %v5576
    %v5697 = vpack.c.b16 %v5581, %v5579
    %v5698 = vpack.c.b16 %v5582, %v5580
    %v5699 = vpack.c.b16 %v5585, %v5583
    %v5700 = vpack.c.b16 %v5586, %v5584
    %v5701 = vpack.c.b16 %v5589, %v5587
    %v5702 = vpack.c.b16 %v5590, %v5588
    %v5703 = vpack.c.b16 %v5593, %v5591
    %v5704 = vpack.c.b16 %v5594, %v5592
    %v5705 = vpack.c.b16 %v5597, %v5595
    %v5706 = vpack.c.b16 %v5598, %v5596
    %v5707 = vpack.c.b16 %v5601, %v5599
    %v5708 = vpack.c.b16 %v5602, %v5600
    %v5709 = vpack.c.b16 %v5605, %v5603
    %v5710 = vpack.c.b16 %v5606, %v5604
    %v5711 = vpack.c.b16 %v5609, %v5607
    %v5712 = vpack.c.b16 %v5610, %v5608
    %v5713 = vpack.c.b16 %v5613, %v5611
    %v5714 = vpack.c.b16 %v5614, %v5612
    %v5715 = vpack.c.b16 %v5617, %v5615
    %v5716 = vpack.c.b16 %v5618, %v5616
    %v5717 = vpack.c.b16 %v5621, %v5619
    %v5718 = vpack.c.b16 %v5622, %v5620
    %v5719 = vpack.c.b16 %v5625, %v5623
    %v5720 = vpack.c.b16 %v5626, %v5624
    %v5721 = vpack.c.b16 %v5629, %v5627
    %v5722 = vpack.c.b16 %v5630, %v5628
    %v5723 = vpack.c.b16 %v5633, %v5631
    %v5724 = vpack.c.b16 %v5634, %v5632
    %v5725 = vpack.c.b16 %v5637, %v5635
    %v5726 = vpack.c.b16 %v5638, %v5636
    %v5727 = vpack.c.b16 %v5641, %v5639
    %v5728 = vpack.c.b16 %v5642, %v5640
    %v5729 = vpack.c.b16 %v5645, %v5643
    %v5730 = vpack.c.b16 %v5646, %v5644
    %v5731 = vpack.c.b16 %v5649, %v5647
    %v5732 = vpack.c.b16 %v5650, %v5648
    %v5733 = vpack.c.b16 %v5653, %v5651
    %v5734 = vpack.c.b16 %v5654, %v5652
    %v5735 = vpack.c.b16 %v5657, %v5655
    %v5736 = vpack.c.b16 %v5658, %v5656
    %v5737 = vpack.c.b16 %v5661, %v5659
    %v5738 = vpack.c.b16 %v5662, %v5660
    %v5739 = vpack.c.b16 %v5663, %v5663
    %v5740 = vpack.c.b16 %v5664, %v5664
    %vm5815 = vcmask 719872
    %v5817 = vsel %vm5815, %v5351, 0
    %v5820 = vsel %vm4838, %v5739, 0
    %v5823 = vsel %vm4838, %v5740, 0
    %5825 = vmatprep.subr.bf16.mxu0 %v5666
    %5826 = vmatpush1.bf16.msra.mxu0 %v5665
    %5827 = vmatprep.subr.bf16.mxu0 %v5668
    %5828 = vmatpush1.bf16.msra.mxu0 %v5667
    %5829 = vmatprep.subr.bf16.mxu0 %v5670
    %5830 = vmatpush1.bf16.msra.mxu0 %v5669
    %5831 = vmatprep.subr.bf16.mxu0 %v5672
    %5832 = vmatpush1.bf16.msra.mxu0 %v5671
    %5833 = vmatprep.subr.bf16.mxu0 %v5674
    %5834 = vmatpush1.bf16.msra.mxu0 %v5673
    %5835 = vmatprep.subr.bf16.mxu0 %v5676
    %5836 = vmatpush1.bf16.msra.mxu0 %v5675
    %5837 = vmatprep.subr.bf16.mxu0 %v5678
    %5838 = vmatpush1.bf16.msra.mxu0 %v5677
    %5839 = vmatprep.subr.bf16.mxu0 %v5680
    %5840 = vmatpush1.bf16.msra.mxu0 %v5679
    %5841 = vmatprep.subr.bf16.mxu0 %v5682
    %5842 = vmatpush1.bf16.msra.mxu0 %v5681
    %5843 = vmatprep.subr.bf16.mxu0 %v5684
    %5844 = vmatpush1.bf16.msra.mxu0 %v5683
    %5845 = vmatprep.subr.bf16.mxu0 %v5686
    %5846 = vmatpush1.bf16.msra.mxu0 %v5685
    %5847 = vmatprep.subr.bf16.mxu0 %v5688
    %5848 = vmatpush1.bf16.msra.mxu0 %v5687
    %5849 = vmatprep.subr.bf16.mxu0 %v5690
    %5850 = vmatpush1.bf16.msra.mxu0 %v5689
    %5851 = vmatprep.subr.bf16.mxu0 %v5692
    %5852 = vmatpush1.bf16.msra.mxu0 %v5691
    %5853 = vmatprep.subr.bf16.mxu0 %v5694
    %5854 = vmatpush1.bf16.msra.mxu0 %v5693
    %5855 = vmatprep.subr.bf16.mxu0 %v5696
    %5856 = vmatpush1.bf16.msra.mxu0 %v5695
    %5857 = vmatprep.mubr.bf16.mxu0 %v5348
    %5858 = vmatmul.mubr.bf16.gmra.mrb[0].mxu0 %v5347
    %v5859 = vpop.f32.mrb[0].mxu0
    %v5860 = vadd.f32 %v5433, %v5859
    %v5861 = vpop.f32.mrb[0].mxu0
    %v5862 = vadd.f32 %v5437, %v5861
    %v5863 = vpop.f32.mrb[0].mxu0
    %v5864 = vpop.f32.mrb[0].mxu0
    %5865 = vdwg.mxu0
    %5866 = vmatprep.subr.bf16.mxu0 %v5698
    %5867 = vmatpush1.bf16.msra.mxu0 %v5697
    %5868 = vmatprep.subr.bf16.mxu0 %v5700
    %5869 = vmatpush1.bf16.msra.mxu0 %v5699
    %5870 = vmatprep.subr.bf16.mxu0 %v5702
    %5871 = vmatpush1.bf16.msra.mxu0 %v5701
    %5872 = vmatprep.subr.bf16.mxu0 %v5704
    %5873 = vmatpush1.bf16.msra.mxu0 %v5703
    %5874 = vmatprep.subr.bf16.mxu0 %v5706
    %5875 = vmatpush1.bf16.msra.mxu0 %v5705
    %5876 = vmatprep.subr.bf16.mxu0 %v5708
    %5877 = vmatpush1.bf16.msra.mxu0 %v5707
    %5878 = vmatprep.subr.bf16.mxu0 %v5710
    %5879 = vmatpush1.bf16.msra.mxu0 %v5709
    %5880 = vmatprep.subr.bf16.mxu0 %v5712
    %5881 = vmatpush1.bf16.msra.mxu0 %v5711
    %5882 = vmatprep.subr.bf16.mxu0 %v5714
    %5883 = vmatpush1.bf16.msra.mxu0 %v5713
    %5884 = vmatprep.subr.bf16.mxu0 %v5716
    %5885 = vmatpush1.bf16.msra.mxu0 %v5715
    %5886 = vmatprep.subr.bf16.mxu0 %v5718
    %5887 = vmatpush1.bf16.msra.mxu0 %v5717
    %5888 = vmatprep.subr.bf16.mxu0 %v5720
    %5889 = vmatpush1.bf16.msra.mxu0 %v5719
    %5890 = vmatprep.subr.bf16.mxu0 %v5722
    %5891 = vmatpush1.bf16.msra.mxu0 %v5721
    %5892 = vmatprep.subr.bf16.mxu0 %v5724
    %5893 = vmatpush1.bf16.msra.mxu0 %v5723
    %5894 = vmatprep.subr.bf16.mxu0 %v5726
    %5895 = vmatpush1.bf16.msra.mxu0 %v5725
    %5896 = vmatprep.subr.bf16.mxu0 %v5728
    %5897 = vmatpush1.bf16.msra.mxu0 %v5727
    %5898 = vmatprep.mubr.bf16.mxu0 %v5350
    %5899 = vmatmul.mubr.bf16.gmra.mrb[0].mxu0 %v5349
    %v5900 = vpop.f32.mrb[0].mxu0
    %v5901 = vadd.f32 %v5860, %v5900
    %v5902 = vpop.f32.mrb[0].mxu0
    %v5903 = vadd.f32 %v5862, %v5902
    %v5904 = vpop.f32.mrb[0].mxu0
    %v5905 = vpop.f32.mrb[0].mxu0
    %5906 = vdwg.mxu0
    %5907 = vmatprep.subr.bf16.mxu0 %v5730
    %5908 = vmatpush1.bf16.msra.mxu0 %v5729
    %5909 = vmatprep.subr.bf16.mxu0 %v5732
    %5910 = vmatpush1.bf16.msra.mxu0 %v5731
    %5911 = vmatprep.subr.bf16.mxu0 %v5734
    %5912 = vmatpush1.bf16.msra.mxu0 %v5733
    %5913 = vmatprep.subr.bf16.mxu0 %v5736
    %5914 = vmatpush1.bf16.msra.mxu0 %v5735
    %5915 = vmatprep.subr.bf16.mxu0 %v5738
    %5916 = vmatpush1.bf16.msra.mxu0 %v5737
    %5917 = vmatprep.subr.bf16.mxu0 %v5823
    %5918 = vmatpush1.bf16.msra.mxu0 %v5820
    %5919 = vmatprep.subr.bf16.mxu0 0
    %5920 = vmatpush1.bf16.msra.mxu0 0
    %5921 = vmatprep.subr.bf16.mxu0 0
    %5922 = vmatpush1.bf16.msra.mxu0 0
    %5923 = vmatprep.subr.bf16.mxu0 0
    %5924 = vmatpush1.bf16.msra.mxu0 0
    %5925 = vmatprep.subr.bf16.mxu0 0
    %5926 = vmatpush1.bf16.msra.mxu0 0
    %5927 = vmatprep.subr.bf16.mxu0 0
    %5928 = vmatpush1.bf16.msra.mxu0 0
    %5929 = vmatprep.subr.bf16.mxu0 0
    %5930 = vmatpush1.bf16.msra.mxu0 0
    %5931 = vmatprep.subr.bf16.mxu0 0
    %5932 = vmatpush1.bf16.msra.mxu0 0
    %5933 = vmatprep.subr.bf16.mxu0 0
    %5934 = vmatpush1.bf16.msra.mxu0 0
    %5935 = vmatprep.subr.bf16.mxu0 0
    %5936 = vmatpush1.bf16.msra.mxu0 0
    %5937 = vmatprep.subr.bf16.mxu0 0
    %5938 = vmatpush1.bf16.msra.mxu0 0
    %5939 = vmatprep.mubr.bf16.mxu0 0
    %5940 = vmatmul.mubr.bf16.gmra.mrb[0].mxu0 %v5817
    %v5941 = vpop.f32.mrb[0].mxu0
    %v5942 = vadd.f32 %v5901, %v5941
    %v5943 = vpop.f32.mrb[0].mxu0
    %v5944 = vadd.f32 %v5903, %v5943
    %v5945 = vpop.f32.mrb[0].mxu0
    %v5946 = vpop.f32.mrb[0].mxu0
    %5947 = vdwg.mxu0
    %v5948 = vmax.f32 %v5942, 0.0
    %v5949 = vmax.f32 %v5944, 0.0
    %v5950 = vpack.c.bf16 %v5948, %v5948
    %v5951 = vpack.c.bf16 %v5949, %v5949
    %v5952 = vld [vmem:[%s8 + $0x5] ss:$0 sm:$0xff]
    %v5953 = vld [vmem:[%s6] sm:$0xf]
    %v5954 = vld [vmem:[%s6 + $0x4] sm:$0xf]
    %v5955 = vld [vmem:[%s6 + $0x8] sm:$0xf]
    %v5956 = vld [vmem:[%s6 + $0xc] sm:$0xf]
    %v5957 = vld [vmem:[%s6 + $0x10] sm:$0xf]
    %v5958 = vld [vmem:[%s6 + $0x14] sm:$0xf]
    %v5959 = vld [vmem:[%s6 + $0x18] sm:$0xf]
    %v5960 = vld [vmem:[%s6 + $0x1c] sm:$0xf]
    %v5961 = vld [vmem:[%s6 + $0x20] sm:$0xf]
    %v5962 = vld [vmem:[%s6 + $0x24] sm:$0xf]
    %v5963 = vld [vmem:[%s6 + $0x28] sm:$0xf]
    %v5964 = vld [vmem:[%s6 + $0x2c] sm:$0xf]
    %v5965 = vld [vmem:[%s6 + $0x30] sm:$0xf]
    %v5966 = vld [vmem:[%s6 + $0x34] sm:$0xf]
    %v5967 = vld [vmem:[%s6 + $0x38] sm:$0xf]
    %v5968 = vld [vmem:[%s6 + $0x3c] sm:$0xf]
    %v5969 = vld [vmem:[%s6 + $0x40] sm:$0xf]
    %v5970 = vld [vmem:[%s6 + $0x44] sm:$0xf]
    %v5971 = vld [vmem:[%s6 + $0x48] sm:$0xf]
    %v5972 = vld [vmem:[%s6 + $0x4c] sm:$0xf]
    %v5973 = vld [vmem:[%s6 + $0x50] sm:$0xf]
    %v5974 = vld [vmem:[%s6 + $0x54] sm:$0xf]
    %v5975 = vld [vmem:[%s6 + $0x58] sm:$0xf]
    %v5976 = vld [vmem:[%s6 + $0x5c] sm:$0xf]
    %v5977 = vld [vmem:[%s6 + $0x60] sm:$0xf]
    %v6003 = vunpack.c.l.b16 %v5953
    %v6004 = vunpack.c.l.b16 %v5954
    %v6005 = vunpack.c.l.b16 %v5955
    %v6006 = vunpack.c.l.b16 %v5956
    %v6007 = vunpack.c.l.b16 %v5957
    %v6008 = vunpack.c.l.b16 %v5958
    %v6009 = vunpack.c.l.b16 %v5959
    %v6010 = vunpack.c.l.b16 %v5960
    %v6011 = vunpack.c.l.b16 %v5961
    %v6012 = vunpack.c.l.b16 %v5962
    %v6013 = vunpack.c.l.b16 %v5963
    %v6014 = vunpack.c.l.b16 %v5964
    %v6015 = vunpack.c.l.b16 %v5965
    %v6016 = vunpack.c.l.b16 %v5966
    %v6017 = vunpack.c.l.b16 %v5967
    %v6018 = vunpack.c.l.b16 %v5968
    %v6019 = vunpack.c.l.b16 %v5969
    %v6020 = vunpack.c.l.b16 %v5970
    %v6021 = vunpack.c.l.b16 %v5971
    %v6022 = vunpack.c.l.b16 %v5972
    %v6023 = vunpack.c.l.b16 %v5973
    %v6024 = vunpack.c.l.b16 %v5974
    %v6025 = vunpack.c.l.b16 %v5975
    %v6026 = vunpack.c.l.b16 %v5976
    %v6027 = vunpack.c.l.b16 %v5977
    %v6028 = vpack.c.b16 %v6004, %v6003
    %v6029 = vpack.c.b16 %v6006, %v6005
    %v6030 = vpack.c.b16 %v6008, %v6007
    %v6031 = vpack.c.b16 %v6010, %v6009
    %v6032 = vpack.c.b16 %v6012, %v6011
    %v6033 = vpack.c.b16 %v6014, %v6013
    %v6034 = vpack.c.b16 %v6016, %v6015
    %v6035 = vpack.c.b16 %v6018, %v6017
    %v6036 = vpack.c.b16 %v6020, %v6019
    %v6037 = vpack.c.b16 %v6022, %v6021
    %v6038 = vpack.c.b16 %v6024, %v6023
    %v6039 = vpack.c.b16 %v6026, %v6025
    %v6040 = vpack.c.b16 %v6027, %v6027
    %vm6053 = vcmask 588800
    %v6055 = vsel %vm6053, %v5951, 0
    %v6058 = vsel %vm4838, %v6040, 0
    %6060 = vmatprep.subr.bf16.mxu0 0
    %6061 = vmatpush1.bf16.msra.mxu0 %v6028
    %6062 = vmatprep.subr.bf16.mxu0 0
    %6063 = vmatpush1.bf16.msra.mxu0 %v6029
    %6064 = vmatprep.subr.bf16.mxu0 0
    %6065 = vmatpush1.bf16.msra.mxu0 %v6030
    %6066 = vmatprep.subr.bf16.mxu0 0
    %6067 = vmatpush1.bf16.msra.mxu0 %v6031
    %6068 = vmatprep.subr.bf16.mxu0 0
    %6069 = vmatpush1.bf16.msra.mxu0 %v6032
    %6070 = vmatprep.subr.bf16.mxu0 0
    %6071 = vmatpush1.bf16.msra.mxu0 %v6033
    %6072 = vmatprep.subr.bf16.mxu0 0
    %6073 = vmatpush1.bf16.msra.mxu0 %v6034
    %6074 = vmatprep.subr.bf16.mxu0 0
    %6075 = vmatpush1.bf16.msra.mxu0 %v6035
    %6076 = vmatprep.subr.bf16.mxu0 0
    %6077 = vmatpush1.bf16.msra.mxu0 %v6036
    %6078 = vmatprep.subr.bf16.mxu0 0
    %6079 = vmatpush1.bf16.msra.mxu0 %v6037
    %6080 = vmatprep.subr.bf16.mxu0 0
    %6081 = vmatpush1.bf16.msra.mxu0 %v6038
    %6082 = vmatprep.subr.bf16.mxu0 0
    %6083 = vmatpush1.bf16.msra.mxu0 %v6039
    %6084 = vmatprep.subr.bf16.mxu0 0
    %6085 = vmatpush1.bf16.msra.mxu0 %v6058
    %6086 = vmatprep.subr.bf16.mxu0 0
    %6087 = vmatpush1.bf16.msra.mxu0 0
    %6088 = vmatprep.subr.bf16.mxu0 0
    %6089 = vmatpush1.bf16.msra.mxu0 0
    %6090 = vmatprep.subr.bf16.mxu0 0
    %6091 = vmatpush1.bf16.msra.mxu0 0
    %6092 = vmatprep.mubr.bf16.mxu0 %v6055
    %6093 = vmatmul.mubr.bf16.gmra.mrb[0].mxu0 %v5950
    %v6094 = vpop.f32.mrb[0].mxu0
    %v6095 = vadd.f32 %v5952, %v6094
    %v6096 = vpop.f32.mrb[0].mxu0
    %v6097 = vpop.f32.mrb[0].mxu0
    %v6098 = vpop.f32.mrb[0].mxu0
    %6099 = vdwg.mxu0
    %v6100 = vmax.f32 %v6095, 0.0
    %v6101 = vpack.c.bf16 %v6100, %v6100
    %v6102 = vld [vmem:[%s8 + $0x6] ss:$0 sm:$0xff]
    %v6103 = vld [vmem:[%s7] sm:$0xf]
    %v6104 = vld [vmem:[%s7 + $0x4] sm:$0xf]
    %v6105 = vld [vmem:[%s7 + $0x8] sm:$0xf]
    %v6106 = vld [vmem:[%s7 + $0xc] sm:$0xf]
    %v6107 = vld [vmem:[%s7 + $0x10] sm:$0xf]
    %v6108 = vld [vmem:[%s7 + $0x14] sm:$0xf]
    %v6109 = vld [vmem:[%s7 + $0x18] sm:$0xf]
    %v6110 = vld [vmem:[%s7 + $0x1c] sm:$0xf]
    %v6111 = vld [vmem:[%s7 + $0x20] sm:$0xf]
    %v6112 = vld [vmem:[%s7 + $0x24] sm:$0xf]
    %v6113 = vld [vmem:[%s7 + $0x28] sm:$0xf]
    %v6114 = vld [vmem:[%s7 + $0x2c] sm:$0xf]
    %v6115 = vld [vmem:[%s7 + $0x30] sm:$0x3]
    %v6129 = vunpack.c.l.b16 %v6103
    %v6130 = vunpack.c.l.b16 %v6104
    %v6131 = vunpack.c.l.b16 %v6105
    %v6132 = vunpack.c.l.b16 %v6106
    %v6133 = vunpack.c.l.b16 %v6107
    %v6134 = vunpack.c.l.b16 %v6108
    %v6135 = vunpack.c.l.b16 %v6109
    %v6136 = vunpack.c.l.b16 %v6110
    %v6137 = vunpack.c.l.b16 %v6111
    %v6138 = vunpack.c.l.b16 %v6112
    %v6139 = vunpack.c.l.b16 %v6113
    %v6140 = vunpack.c.l.b16 %v6114
    %v6141 = vunpack.c.l.b16 %v6115
    %v6142 = vpack.c.b16 %v6130, %v6129
    %v6143 = vpack.c.b16 %v6132, %v6131
    %v6144 = vpack.c.b16 %v6134, %v6133
    %v6145 = vpack.c.b16 %v6136, %v6135
    %v6146 = vpack.c.b16 %v6138, %v6137
    %v6147 = vpack.c.b16 %v6140, %v6139
    %v6148 = vpack.c.b16 %v6141, %v6141
    %vm6155 = vcmask 818176
    %v6157 = vsel %vm6155, %v6101, 0
    %v6160 = vsel %vm2435, %v6148, 0
    %6162 = vmatprep.subr.bf16.mxu0 0
    %6163 = vmatpush1.bf16.msra.mxu0 %v6142
    %6164 = vmatprep.subr.bf16.mxu0 0
    %6165 = vmatpush1.bf16.msra.mxu0 %v6143
    %6166 = vmatprep.subr.bf16.mxu0 0
    %6167 = vmatpush1.bf16.msra.mxu0 %v6144
    %6168 = vmatprep.subr.bf16.mxu0 0
    %6169 = vmatpush1.bf16.msra.mxu0 %v6145
    %6170 = vmatprep.subr.bf16.mxu0 0
    %6171 = vmatpush1.bf16.msra.mxu0 %v6146
    %6172 = vmatprep.subr.bf16.mxu0 0
    %6173 = vmatpush1.bf16.msra.mxu0 %v6147
    %6174 = vmatprep.subr.bf16.mxu0 0
    %6175 = vmatpush1.bf16.msra.mxu0 %v6160
    %6176 = vmatprep.subr.bf16.mxu0 0
    %6177 = vmatpush1.bf16.msra.mxu0 0
    %6178 = vmatprep.subr.bf16.mxu0 0
    %6179 = vmatpush1.bf16.msra.mxu0 0
    %6180 = vmatprep.subr.bf16.mxu0 0
    %6181 = vmatpush1.bf16.msra.mxu0 0
    %6182 = vmatprep.subr.bf16.mxu0 0
    %6183 = vmatpush1.bf16.msra.mxu0 0
    %6184 = vmatprep.subr.bf16.mxu0 0
    %6185 = vmatpush1.bf16.msra.mxu0 0
    %6186 = vmatprep.subr.bf16.mxu0 0
    %6187 = vmatpush1.bf16.msra.mxu0 0
    %6188 = vmatprep.subr.bf16.mxu0 0
    %6189 = vmatpush1.bf16.msra.mxu0 0
    %6190 = vmatprep.subr.bf16.mxu0 0
    %6191 = vmatpush1.bf16.msra.mxu0 0
    %6192 = vmatprep.subr.bf16.mxu0 0
    %6193 = vmatpush1.bf16.msra.mxu0 0
    %6194 = vmatprep.mubr.bf16.mxu0 0
    %6195 = vmatmul.mubr.bf16.gmra.mrb[0].mxu0 %v6157
    %v6196 = vpop.f32.mrb[0].mxu0
    %v6197 = vadd.f32 %v6102, %v6196
    %v6198 = vpop.f32.mrb[0].mxu0
    %v6199 = vpop.f32.mrb[0].mxu0
    %v6200 = vpop.f32.mrb[0].mxu0
    %6201 = vdwg.mxu0
    %6202 = vmax.xlane.f32.xlu0 %v6197
    %v6203 = vpop.xlane.xlu0 %6202
    %v6204 = vsub.f32 %v6197, %v6203
    %v6205 = vmul.f32 %v6204, 1.442695
    %v6206 = vpow.pop %v6205
    %6207 = vadd.xlane.f32.xlu0 %v6206
    %v6208 = vpop.xlane.xlu0 %6207
    %v6209 = vrcp.pop %v6208
    %v6210 = vmul.f32 %v6206, %v6209
    %6211 = vst [vmem:[#allocation2] sm:$0xff] %v6210
    // Predicated region
    $region38: #{direct_policy_agent_large_forward.1} parent=1 // pred_check
      _
    $region39: #{direct_policy_agent_large_forward.1} parent=1 // pred_check_branch
      %6213 = sbr.rel (0) target = $region41
    $region40: #{direct_policy_agent_large_forward.1} parent=1 // pred_region
      %s6215 = ssub.s32 128, 128
      %6216 = vsyncadd [#allocation3], %s6215
      %s6218 = sshll.u32 [#allocation2], 4
      %s6219 = int_to_ptr.vmem [resolvable:$true] %s6218
      %6221 = dma.vmem_to_hbm [thread:$0]  %s6219, 128, %s9, [#allocation3]
    $region41: #{direct_policy_agent_large_forward.1} parent=1 // pred_fallthru
      _
    // Predicated region
    $region42: #{direct_policy_agent_large_forward.1} parent=1 // pred_check
      _
    $region43: #{direct_policy_agent_large_forward.1} parent=1 // pred_check_branch
      %6223 = sbr.rel (0) target = $region45
    $region44: #{direct_policy_agent_large_forward.1} parent=1 // pred_region
      %6224 = dma.done [#allocation3], 128
    $region45: #{direct_policy_agent_large_forward.1} parent=1 // pred_fallthru
      _
    %6225 = vsyncpa [#allocation3], 1

</llo_original>
